<compile_context>
chip_gen: v6e
topology: v6e:2x2x1
jax: 0.10.0
libtpu: 0.0.40
codegen_flags: <defaults>
</compile_context>

<pallas_src>
import functools

import jax
import jax.numpy as jnp
from jax.experimental import pallas as pl
from jax.experimental.pallas import tpu as pltpu

EMB = 64
CONS_NFEATS = 5
EDGE_NFEATS = 1
VAR_NFEATS = 19
LN_EPS = 1e-5  # PyTorch nn.LayerNorm default eps


def _rup(n, m):
    return ((n + m - 1) // m) * m


@functools.lru_cache(maxsize=None)
def _vmem_limit_bytes():
    cap = 64 * 1024 * 1024
    try:
        cap = int(pltpu.get_tpu_info().vmem_capacity_bytes)
    except Exception:  # fall back to the smallest (v7x) physical VMEM
        pass
    # leave headroom for compiler scratch / double-buffering
    return min((cap * 3) // 4, 112 * 1024 * 1024)


# ----------------------------- in-kernel helpers -----------------------------

def _ln(x, gamma, beta):
    """LayerNorm over the last axis (biased variance, like torch), f32 math."""
    mu = jnp.mean(x, axis=-1, keepdims=True)
    var = jnp.mean((x - mu) ** 2, axis=-1, keepdims=True)
    return (x - mu) * jax.lax.rsqrt(var + LN_EPS) * gamma + beta


def _mm(x, w_bf16):
    """bf16 x bf16 MXU matmul with f32 accumulation (astype is a no-op on bf16)."""
    return jnp.dot(x.astype(jnp.bfloat16), w_bf16, preferred_element_type=jnp.float32)


def _one_hot(idx_col, n):
    """(E,1) int32 indices -> (E, n) bf16 one-hot. Index -1 (padding) -> zero row."""
    e = idx_col.shape[0]
    iota = jax.lax.broadcasted_iota(jnp.int32, (e, n), 1)
    return (iota == idx_col).astype(jnp.bfloat16)


def _embed(x, g, b, w1, b1, w2, b2):
    """LN -> Linear -> ReLU -> Linear -> ReLU."""
    h = jnp.maximum(_mm(_ln(x, g, b), w1) + b1, 0.0)
    return jnp.maximum(_mm(h, w2) + b2, 0.0)


def _conv(left16, right16, oh_src, oh_tgt, p):
    """BipartiteGraphConvolution ('add' aggregation onto the `right` node set).

    left16/right16: bf16 node embeddings.  oh_src (E,nL) / oh_tgt (E,nR): shared
    bf16 one-hot incidence matrices used for both the gather and the scatter.
    """
    (wl, bl, wr, gf, bf_, wf, bfin, gpc, bpc, wo1, bo1, wo2, bo2) = p
    # Project node features BEFORE gathering (associativity): n x 64x64 matmuls
    # instead of E x 64x64, then gather the projected rows through the one-hots.
    right_l = _mm(right16, wl).astype(jnp.bfloat16)                  # (nR, EMB)
    left_r = _mm(left16, wr).astype(jnp.bfloat16)                    # (nL, EMB)
    # message pre-activation; the (constant) edge branch is folded into bl on host.
    pre = (jnp.dot(oh_tgt, right_l, preferred_element_type=jnp.float32)
           + jnp.dot(oh_src, left_r, preferred_element_type=jnp.float32)
           + bl)                                                     # (E, EMB) f32
    z = jnp.maximum(_ln(pre, gf, bf_), 0.0)
    msg = _mm(z, wf) + bfin                                          # (E, EMB) f32
    # 'add' scatter onto target nodes: reuse oh_tgt, contract over the edge axis.
    # NOTE: msg is rounded to bf16 here; fine at 3e-2 tolerance / these degrees.
    agg = jax.lax.dot_general(oh_tgt, msg.astype(jnp.bfloat16),
                              (((0,), (0,)), ((), ())),
                              preferred_element_type=jnp.float32)    # (nR, EMB)
    h16 = _ln(agg, gpc, bpc).astype(jnp.bfloat16)
    # output_module on concat([h, right]) as a single K=128 contraction.
    cat = jnp.concatenate([h16, right16], axis=-1)                   # (nR, 2*EMB)
    o1 = jnp.maximum(_mm(cat, wo1) + bo1, 0.0)
    return _mm(o1, wo2) + bo2                                        # (nR, EMB) f32


# ------------------------------- fused kernel --------------------------------

def gnn_kernel(*refs):
    it = iter(refs)

    def v():
        return next(it)[...]

    cons = v(); varf = v()                                # node features (padded)
    ccol = v(); vcol = v()                                # edge indices (E,1), pad = -1
    cons_emb = tuple(v() for _ in range(6))
    var_emb = tuple(v() for _ in range(6))
    conv_vc = tuple(v() for _ in range(13))
    conv_cv = tuple(v() for _ in range(13))
    hw1, hb1, hw2r = v(), v(), v()
    o_ref = next(it)                                      # output ref (1, nVp)

    n_cons = cons.shape[0]
    n_vars = varf.shape[0]

    c = _embed(cons, *cons_emb)                           # (nCp, EMB) f32
    x = _embed(varf, *var_emb)                            # (nVp, EMB) f32
    c16 = c.astype(jnp.bfloat16)
    x16 = x.astype(jnp.bfloat16)

    # Shared one-hot incidence matrices (built once, reused by both convs).
    oh_c = _one_hot(ccol, n_cons)                         # (Ep, nCp) bf16
    oh_v = _one_hot(vcol, n_vars)                         # (Ep, nVp) bf16

    # conv_v_to_c: sources = variables, targets = constraints
    c16 = _conv(x16, c16, oh_v, oh_c, conv_vc).astype(jnp.bfloat16)
    # conv_c_to_v: sources = constraints, targets = variables
    x_new = _conv(c16, x16, oh_c, oh_v, conv_cv)          # (nVp, EMB) f32

    # head: Linear + ReLU, then 64->1 projection emitted lane-dense as (1, nVp).
    h16 = jnp.maximum(_mm(x_new, hw1) + hb1, 0.0).astype(jnp.bfloat16)
    o_ref[...] = jnp.dot(hw2r, h16.T, preferred_element_type=jnp.float32)


# ------------------------------ host-side glue -------------------------------

def _flatten_params(params):
    def c16(w):
        return w.astype(jnp.bfloat16)

    cg, cb, cw1, cb1, cw2, cb2 = params["cons_emb"]
    vg, vb, vw1, vb1, vw2, vb2 = params["var_emb"]
    _ge, be = params["edge_ln"]        # LN(1 feature) output == beta, gamma unused

    def conv_flat(p):
        wl, bl, we, wr, gf, bf, wf, bfin, gpc, bpc, wo1, bo1, wo2, bo2 = p
        bl_eff = bl + be * we          # fold the (constant) edge branch into the bias
        return (c16(wl), bl_eff, c16(wr), gf, bf, c16(wf), bfin, gpc, bpc,
                c16(wo1), bo1, c16(wo2), bo2)

    hw1, hb1, hw2 = params["head"]
    return ((cg, cb, c16(cw1), cb1, c16(cw2), cb2)
            + (vg, vb, c16(vw1), vb1, c16(vw2), vb2)
            + conv_flat(params["v_to_c"])
            + conv_flat(params["c_to_v"])
            + (c16(hw1), hb1, c16(hw2.T)))  # head projection as a (1, EMB) bf16 row


def _flops_estimate(nCp, nVp, Ep):
    f = nCp * (CONS_NFEATS * EMB + EMB * EMB) + nVp * (VAR_NFEATS * EMB + EMB * EMB)
    for nL, nR in ((nVp, nCp), (nCp, nVp)):
        f += (nL + nR) * EMB * EMB             # Wl / Wr pre-projections
        f += Ep * (nL + nR) * EMB              # one-hot gathers of projected rows
        f += Ep * EMB * EMB                    # message MLP (Wf)
        f += nR * Ep * EMB                     # scatter-add
        f += nR * (2 * EMB * EMB + EMB * EMB)  # output MLP
    f += nVp * (EMB * EMB + EMB)               # head
    return 2 * f


@jax.jit
def gnn_policy_forward(params, constraint_features, edge_indices, edge_features,
                       variable_features):
    # edge_features are mathematically irrelevant: LayerNorm over a single feature
    # is a constant (== beta), folded into the conv message bias on the host.
    del edge_features
    nC = constraint_features.shape[0]
    nV = variable_features.shape[0]
    E = edge_indices.shape[1]
    # lane-dense node padding (one-hot lane dim), bf16-sublane-friendly edge padding
    nCp, nVp, Ep = _rup(nC, 128), _rup(nV, 128), _rup(E, 16)

    cons_p = jnp.zeros((nCp, CONS_NFEATS), jnp.float32).at[:nC].set(constraint_features)
    var_p = jnp.zeros((nVp, VAR_NFEATS), jnp.float32).at[:nV].set(variable_features)
    cidx = jnp.full((Ep, 1), -1, jnp.int32).at[:E, 0].set(edge_indices[0].astype(jnp.int32))
    vidx = jnp.full((Ep, 1), -1, jnp.int32).at[:E, 0].set(edge_indices[1].astype(jnp.int32))

    args = (cons_p, var_p, cidx, vidx) + _flatten_params(params)

    bytes_accessed = int(sum(a.size * a.dtype.itemsize for a in args) + nVp * 4)
    cost = pl.CostEstimate(flops=int(_flops_estimate(nCp, nVp, Ep)),
                           transcendentals=int(2 * (nCp + nVp + Ep)),  # LN rsqrts
                           bytes_accessed=bytes_accessed)

    out = pl.pallas_call(
        gnn_kernel,
        out_shape=jax.ShapeDtypeStruct((1, nVp), jnp.float32),   # lane-dense row
        in_specs=[pl.BlockSpec(memory_space=pltpu.MemorySpace.VMEM)] * len(args),
        out_specs=pl.BlockSpec(memory_space=pltpu.MemorySpace.VMEM),
        compiler_params=pltpu.CompilerParams(vmem_limit_bytes=_vmem_limit_bytes()),
        cost_estimate=cost,
    )(*args)
    return out[0, :nV]


# ------------------------------ parameters ---------------------------------

def init_params(key):
    keys = iter(jax.random.split(key, 128))

    def nrm(shape, scale=0.1):
        return scale * jax.random.normal(next(keys), shape, dtype=jnp.float32)

    def ln_p(f):
        return 1.0 + nrm((1, f)), nrm((1, f))

    def lin(fin, fout, bias=True):
        w = nrm((fin, fout))
        return (w, nrm((1, fout))) if bias else (w, None)

    p = {}
    g, b = ln_p(CONS_NFEATS); w1, b1 = lin(CONS_NFEATS, EMB); w2, b2 = lin(EMB, EMB)
    p["cons_emb"] = (g, b, w1, b1, w2, b2)
    p["edge_ln"] = ln_p(EDGE_NFEATS)
    g, b = ln_p(VAR_NFEATS); w1, b1 = lin(VAR_NFEATS, EMB); w2, b2 = lin(EMB, EMB)
    p["var_emb"] = (g, b, w1, b1, w2, b2)

    def conv_params():
        wl, bl = lin(EMB, EMB)
        we, _ = lin(EDGE_NFEATS, EMB, bias=False)
        wr, _ = lin(EMB, EMB, bias=False)
        gf, bf = ln_p(EMB)
        wf, bfin = lin(EMB, EMB)
        gpc, bpc = ln_p(EMB)
        wo1, bo1 = lin(2 * EMB, EMB)
        wo2, bo2 = lin(EMB, EMB)
        return (wl, bl, we, wr, gf, bf, wf, bfin, gpc, bpc, wo1, bo1, wo2, bo2)

    p["v_to_c"] = conv_params()
    p["c_to_v"] = conv_params()
    w1, b1 = lin(EMB, EMB)
    w2, _ = lin(EMB, 1, bias=False)
    p["head"] = (w1, b1, w2)
    return p


# ------------------------------ pure-JAX reference (f32, faithful) ----------

def _ln_ref(x, g, b):
    mu = x.mean(-1, keepdims=True)
    var = ((x - mu) ** 2).mean(-1, keepdims=True)
    return (x - mu) / jnp.sqrt(var + LN_EPS) * g + b


def _bgc_ref(p, left, right, ef, src, tgt):
    wl, bl, we, wr, gf, bf, wf, bfin, gpc, bpc, wo1, bo1, wo2, bo2 = p
    xi, xj = right[tgt], left[src]
    pre = xi @ wl + bl + ef @ we + xj @ wr
    z = jnp.maximum(_ln_ref(pre, gf, bf), 0.0)
    msg = z @ wf + bfin
    agg = jax.ops.segment_sum(msg, tgt, num_segments=right.shape[0])
    h = _ln_ref(agg, gpc, bpc)
    o1 = jnp.maximum(jnp.concatenate([h, right], axis=-1) @ wo1 + bo1, 0.0)
    return o1 @ wo2 + bo2


def _ref_forward(params, cons, edge_indices, ef, var_):
    g, b, w1, b1, w2, b2 = params["cons_emb"]
    c = jnp.maximum(jnp.maximum(_ln_ref(cons, g, b) @ w1 + b1, 0.0) @ w2 + b2, 0.0)
    ge, be = params["edge_ln"]
    e = _ln_ref(ef, ge, be)
    g, b, w1, b1, w2, b2 = params["var_emb"]
    v = jnp.maximum(jnp.maximum(_ln_ref(var_, g, b) @ w1 + b1, 0.0) @ w2 + b2, 0.0)
    c = _bgc_ref(params["v_to_c"], v, c, e, edge_indices[1], edge_indices[0])
    v = _bgc_ref(params["c_to_v"], c, v, e, edge_indices[0], edge_indices[1])
    w1, b1, w2 = params["head"]
    return (jnp.maximum(v @ w1 + b1, 0.0) @ w2)[:, 0]


# ----------------------------------- main -----------------------------------

if __name__ == "__main__":
    key = jax.random.PRNGKey(0)
    pkey, k1, k2, k3, k4, k5 = jax.random.split(key, 6)

    n_cons, n_vars, n_edges = 12, 20, 32
    params = init_params(pkey)

    constraint_features = jax.random.normal(k1, (n_cons, CONS_NFEATS), jnp.float32)
    variable_features = jax.random.normal(k2, (n_vars, VAR_NFEATS), jnp.float32)
    edge_features = jax.random.normal(k3, (n_edges, EDGE_NFEATS), jnp.float32)
    cons_idx = jax.random.randint(k4, (n_edges,), 0, n_cons)
    var_idx = jax.random.randint(k5, (n_edges,), 0, n_vars)
    edge_indices = jnp.stack([cons_idx, var_idx]).astype(jnp.int32)  # row0: cons, row1: var

    out = gnn_policy_forward(params, constraint_features, edge_indices,
                             edge_features, variable_features)
    out = jax.block_until_ready(out)

    ref = _ref_forward(params, constraint_features, edge_indices,
                       edge_features, variable_features)
    assert out.shape == (n_vars,)
    # bf16 matmul operands with f32 accumulation: expect ~1e-2 relative error.
    assert jnp.allclose(out, ref, atol=3e-2, rtol=3e-2), float(jnp.max(jnp.abs(out - ref)))
    print("KERNEL_OK")
</pallas_src>

<mosaic_0001>
module attributes {stable_mosaic.version = 11 : i64} {
  func.func @gnn_kernel(%arg0: memref<128x5xf32, #tpu.memory_space<vmem>>, %arg1: memref<128x19xf32, #tpu.memory_space<vmem>>, %arg2: memref<32x1xi32, #tpu.memory_space<vmem>>, %arg3: memref<32x1xi32, #tpu.memory_space<vmem>>, %arg4: memref<1x5xf32, #tpu.memory_space<vmem>>, %arg5: memref<1x5xf32, #tpu.memory_space<vmem>>, %arg6: memref<5x64xbf16, #tpu.memory_space<vmem>>, %arg7: memref<1x64xf32, #tpu.memory_space<vmem>>, %arg8: memref<64x64xbf16, #tpu.memory_space<vmem>>, %arg9: memref<1x64xf32, #tpu.memory_space<vmem>>, %arg10: memref<1x19xf32, #tpu.memory_space<vmem>>, %arg11: memref<1x19xf32, #tpu.memory_space<vmem>>, %arg12: memref<19x64xbf16, #tpu.memory_space<vmem>>, %arg13: memref<1x64xf32, #tpu.memory_space<vmem>>, %arg14: memref<64x64xbf16, #tpu.memory_space<vmem>>, %arg15: memref<1x64xf32, #tpu.memory_space<vmem>>, %arg16: memref<64x64xbf16, #tpu.memory_space<vmem>>, %arg17: memref<1x64xf32, #tpu.memory_space<vmem>>, %arg18: memref<64x64xbf16, #tpu.memory_space<vmem>>, %arg19: memref<1x64xf32, #tpu.memory_space<vmem>>, %arg20: memref<1x64xf32, #tpu.memory_space<vmem>>, %arg21: memref<64x64xbf16, #tpu.memory_space<vmem>>, %arg22: memref<1x64xf32, #tpu.memory_space<vmem>>, %arg23: memref<1x64xf32, #tpu.memory_space<vmem>>, %arg24: memref<1x64xf32, #tpu.memory_space<vmem>>, %arg25: memref<128x64xbf16, #tpu.memory_space<vmem>>, %arg26: memref<1x64xf32, #tpu.memory_space<vmem>>, %arg27: memref<64x64xbf16, #tpu.memory_space<vmem>>, %arg28: memref<1x64xf32, #tpu.memory_space<vmem>>, %arg29: memref<64x64xbf16, #tpu.memory_space<vmem>>, %arg30: memref<1x64xf32, #tpu.memory_space<vmem>>, %arg31: memref<64x64xbf16, #tpu.memory_space<vmem>>, %arg32: memref<1x64xf32, #tpu.memory_space<vmem>>, %arg33: memref<1x64xf32, #tpu.memory_space<vmem>>, %arg34: memref<64x64xbf16, #tpu.memory_space<vmem>>, %arg35: memref<1x64xf32, #tpu.memory_space<vmem>>, %arg36: memref<1x64xf32, #tpu.memory_space<vmem>>, %arg37: memref<1x64xf32, #tpu.memory_space<vmem>>, %arg38: memref<128x64xbf16, #tpu.memory_space<vmem>>, %arg39: memref<1x64xf32, #tpu.memory_space<vmem>>, %arg40: memref<64x64xbf16, #tpu.memory_space<vmem>>, %arg41: memref<1x64xf32, #tpu.memory_space<vmem>>, %arg42: memref<64x64xbf16, #tpu.memory_space<vmem>>, %arg43: memref<1x64xf32, #tpu.memory_space<vmem>>, %arg44: memref<1x64xbf16, #tpu.memory_space<vmem>>, %arg45: memref<1x128xf32, #tpu.memory_space<vmem>>) attributes {dimension_semantics = [], scalar_prefetch = 0 : i64, scratch_operands = 0 : i64, tpu.core_type = #tpu.core_type<tc>} {
    %c0 = arith.constant 0 : index
    %c0_0 = arith.constant 0 : index
    %0 = vector.load %arg0[%c0, %c0_0] : memref<128x5xf32, #tpu.memory_space<vmem>>, vector<128x5xf32>
    %c0_1 = arith.constant 0 : index
    %c0_2 = arith.constant 0 : index
    %1 = vector.load %arg1[%c0_1, %c0_2] : memref<128x19xf32, #tpu.memory_space<vmem>>, vector<128x19xf32>
    %c0_3 = arith.constant 0 : index
    %c0_4 = arith.constant 0 : index
    %2 = vector.load %arg2[%c0_3, %c0_4] : memref<32x1xi32, #tpu.memory_space<vmem>>, vector<32x1xi32>
    %c0_5 = arith.constant 0 : index
    %c0_6 = arith.constant 0 : index
    %3 = vector.load %arg3[%c0_5, %c0_6] : memref<32x1xi32, #tpu.memory_space<vmem>>, vector<32x1xi32>
    %c0_7 = arith.constant 0 : index
    %c0_8 = arith.constant 0 : index
    %4 = vector.load %arg4[%c0_7, %c0_8] : memref<1x5xf32, #tpu.memory_space<vmem>>, vector<1x5xf32>
    %c0_9 = arith.constant 0 : index
    %c0_10 = arith.constant 0 : index
    %5 = vector.load %arg5[%c0_9, %c0_10] : memref<1x5xf32, #tpu.memory_space<vmem>>, vector<1x5xf32>
    %c0_11 = arith.constant 0 : index
    %c0_12 = arith.constant 0 : index
    %6 = vector.load %arg6[%c0_11, %c0_12] : memref<5x64xbf16, #tpu.memory_space<vmem>>, vector<5x64xbf16>
    %c0_13 = arith.constant 0 : index
    %c0_14 = arith.constant 0 : index
    %7 = vector.load %arg7[%c0_13, %c0_14] : memref<1x64xf32, #tpu.memory_space<vmem>>, vector<1x64xf32>
    %c0_15 = arith.constant 0 : index
    %c0_16 = arith.constant 0 : index
    %8 = vector.load %arg8[%c0_15, %c0_16] : memref<64x64xbf16, #tpu.memory_space<vmem>>, vector<64x64xbf16>
    %c0_17 = arith.constant 0 : index
    %c0_18 = arith.constant 0 : index
    %9 = vector.load %arg9[%c0_17, %c0_18] : memref<1x64xf32, #tpu.memory_space<vmem>>, vector<1x64xf32>
    %c0_19 = arith.constant 0 : index
    %c0_20 = arith.constant 0 : index
    %10 = vector.load %arg10[%c0_19, %c0_20] : memref<1x19xf32, #tpu.memory_space<vmem>>, vector<1x19xf32>
    %c0_21 = arith.constant 0 : index
    %c0_22 = arith.constant 0 : index
    %11 = vector.load %arg11[%c0_21, %c0_22] : memref<1x19xf32, #tpu.memory_space<vmem>>, vector<1x19xf32>
    %c0_23 = arith.constant 0 : index
    %c0_24 = arith.constant 0 : index
    %12 = vector.load %arg12[%c0_23, %c0_24] : memref<19x64xbf16, #tpu.memory_space<vmem>>, vector<19x64xbf16>
    %c0_25 = arith.constant 0 : index
    %c0_26 = arith.constant 0 : index
    %13 = vector.load %arg13[%c0_25, %c0_26] : memref<1x64xf32, #tpu.memory_space<vmem>>, vector<1x64xf32>
    %c0_27 = arith.constant 0 : index
    %c0_28 = arith.constant 0 : index
    %14 = vector.load %arg14[%c0_27, %c0_28] : memref<64x64xbf16, #tpu.memory_space<vmem>>, vector<64x64xbf16>
    %c0_29 = arith.constant 0 : index
    %c0_30 = arith.constant 0 : index
    %15 = vector.load %arg15[%c0_29, %c0_30] : memref<1x64xf32, #tpu.memory_space<vmem>>, vector<1x64xf32>
    %c0_31 = arith.constant 0 : index
    %c0_32 = arith.constant 0 : index
    %16 = vector.load %arg16[%c0_31, %c0_32] : memref<64x64xbf16, #tpu.memory_space<vmem>>, vector<64x64xbf16>
    %c0_33 = arith.constant 0 : index
    %c0_34 = arith.constant 0 : index
    %17 = vector.load %arg17[%c0_33, %c0_34] : memref<1x64xf32, #tpu.memory_space<vmem>>, vector<1x64xf32>
    %c0_35 = arith.constant 0 : index
    %c0_36 = arith.constant 0 : index
    %18 = vector.load %arg18[%c0_35, %c0_36] : memref<64x64xbf16, #tpu.memory_space<vmem>>, vector<64x64xbf16>
    %c0_37 = arith.constant 0 : index
    %c0_38 = arith.constant 0 : index
    %19 = vector.load %arg19[%c0_37, %c0_38] : memref<1x64xf32, #tpu.memory_space<vmem>>, vector<1x64xf32>
    %c0_39 = arith.constant 0 : index
    %c0_40 = arith.constant 0 : index
    %20 = vector.load %arg20[%c0_39, %c0_40] : memref<1x64xf32, #tpu.memory_space<vmem>>, vector<1x64xf32>
    %c0_41 = arith.constant 0 : index
    %c0_42 = arith.constant 0 : index
    %21 = vector.load %arg21[%c0_41, %c0_42] : memref<64x64xbf16, #tpu.memory_space<vmem>>, vector<64x64xbf16>
    %c0_43 = arith.constant 0 : index
    %c0_44 = arith.constant 0 : index
    %22 = vector.load %arg22[%c0_43, %c0_44] : memref<1x64xf32, #tpu.memory_space<vmem>>, vector<1x64xf32>
    %c0_45 = arith.constant 0 : index
    %c0_46 = arith.constant 0 : index
    %23 = vector.load %arg23[%c0_45, %c0_46] : memref<1x64xf32, #tpu.memory_space<vmem>>, vector<1x64xf32>
    %c0_47 = arith.constant 0 : index
    %c0_48 = arith.constant 0 : index
    %24 = vector.load %arg24[%c0_47, %c0_48] : memref<1x64xf32, #tpu.memory_space<vmem>>, vector<1x64xf32>
    %c0_49 = arith.constant 0 : index
    %c0_50 = arith.constant 0 : index
    %25 = vector.load %arg25[%c0_49, %c0_50] : memref<128x64xbf16, #tpu.memory_space<vmem>>, vector<128x64xbf16>
    %c0_51 = arith.constant 0 : index
    %c0_52 = arith.constant 0 : index
    %26 = vector.load %arg26[%c0_51, %c0_52] : memref<1x64xf32, #tpu.memory_space<vmem>>, vector<1x64xf32>
    %c0_53 = arith.constant 0 : index
    %c0_54 = arith.constant 0 : index
    %27 = vector.load %arg27[%c0_53, %c0_54] : memref<64x64xbf16, #tpu.memory_space<vmem>>, vector<64x64xbf16>
    %c0_55 = arith.constant 0 : index
    %c0_56 = arith.constant 0 : index
    %28 = vector.load %arg28[%c0_55, %c0_56] : memref<1x64xf32, #tpu.memory_space<vmem>>, vector<1x64xf32>
    %c0_57 = arith.constant 0 : index
    %c0_58 = arith.constant 0 : index
    %29 = vector.load %arg29[%c0_57, %c0_58] : memref<64x64xbf16, #tpu.memory_space<vmem>>, vector<64x64xbf16>
    %c0_59 = arith.constant 0 : index
    %c0_60 = arith.constant 0 : index
    %30 = vector.load %arg30[%c0_59, %c0_60] : memref<1x64xf32, #tpu.memory_space<vmem>>, vector<1x64xf32>
    %c0_61 = arith.constant 0 : index
    %c0_62 = arith.constant 0 : index
    %31 = vector.load %arg31[%c0_61, %c0_62] : memref<64x64xbf16, #tpu.memory_space<vmem>>, vector<64x64xbf16>
    %c0_63 = arith.constant 0 : index
    %c0_64 = arith.constant 0 : index
    %32 = vector.load %arg32[%c0_63, %c0_64] : memref<1x64xf32, #tpu.memory_space<vmem>>, vector<1x64xf32>
    %c0_65 = arith.constant 0 : index
    %c0_66 = arith.constant 0 : index
    %33 = vector.load %arg33[%c0_65, %c0_66] : memref<1x64xf32, #tpu.memory_space<vmem>>, vector<1x64xf32>
    %c0_67 = arith.constant 0 : index
    %c0_68 = arith.constant 0 : index
    %34 = vector.load %arg34[%c0_67, %c0_68] : memref<64x64xbf16, #tpu.memory_space<vmem>>, vector<64x64xbf16>
    %c0_69 = arith.constant 0 : index
    %c0_70 = arith.constant 0 : index
    %35 = vector.load %arg35[%c0_69, %c0_70] : memref<1x64xf32, #tpu.memory_space<vmem>>, vector<1x64xf32>
    %c0_71 = arith.constant 0 : index
    %c0_72 = arith.constant 0 : index
    %36 = vector.load %arg36[%c0_71, %c0_72] : memref<1x64xf32, #tpu.memory_space<vmem>>, vector<1x64xf32>
    %c0_73 = arith.constant 0 : index
    %c0_74 = arith.constant 0 : index
    %37 = vector.load %arg37[%c0_73, %c0_74] : memref<1x64xf32, #tpu.memory_space<vmem>>, vector<1x64xf32>
    %c0_75 = arith.constant 0 : index
    %c0_76 = arith.constant 0 : index
    %38 = vector.load %arg38[%c0_75, %c0_76] : memref<128x64xbf16, #tpu.memory_space<vmem>>, vector<128x64xbf16>
    %c0_77 = arith.constant 0 : index
    %c0_78 = arith.constant 0 : index
    %39 = vector.load %arg39[%c0_77, %c0_78] : memref<1x64xf32, #tpu.memory_space<vmem>>, vector<1x64xf32>
    %c0_79 = arith.constant 0 : index
    %c0_80 = arith.constant 0 : index
    %40 = vector.load %arg40[%c0_79, %c0_80] : memref<64x64xbf16, #tpu.memory_space<vmem>>, vector<64x64xbf16>
    %c0_81 = arith.constant 0 : index
    %c0_82 = arith.constant 0 : index
    %41 = vector.load %arg41[%c0_81, %c0_82] : memref<1x64xf32, #tpu.memory_space<vmem>>, vector<1x64xf32>
    %c0_83 = arith.constant 0 : index
    %c0_84 = arith.constant 0 : index
    %42 = vector.load %arg42[%c0_83, %c0_84] : memref<64x64xbf16, #tpu.memory_space<vmem>>, vector<64x64xbf16>
    %c0_85 = arith.constant 0 : index
    %c0_86 = arith.constant 0 : index
    %43 = vector.load %arg43[%c0_85, %c0_86] : memref<1x64xf32, #tpu.memory_space<vmem>>, vector<1x64xf32>
    %c0_87 = arith.constant 0 : index
    %c0_88 = arith.constant 0 : index
    %44 = vector.load %arg44[%c0_87, %c0_88] : memref<1x64xbf16, #tpu.memory_space<vmem>>, vector<1x64xbf16>
    %cst = arith.constant dense<0.000000e+00> : vector<128xf32>
    %45 = vector.multi_reduction <add>, %0, %cst [1] : vector<128x5xf32> to vector<128xf32>
    %46 = vector.shape_cast %45 : vector<128xf32> to vector<128x1xf32>
    %cst_89 = arith.constant 5.000000e+00 : f32
    %47 = vector.broadcast %cst_89 : f32 to vector<128x1xf32>
    %48 = arith.divf %46, %47 : vector<128x1xf32>
    %49 = vector.broadcast %48 : vector<128x1xf32> to vector<128x5xf32>
    %50 = arith.subf %0, %49 : vector<128x5xf32>
    %51 = arith.mulf %50, %50 : vector<128x5xf32>
    %cst_90 = arith.constant dense<0.000000e+00> : vector<128xf32>
    %52 = vector.multi_reduction <add>, %51, %cst_90 [1] : vector<128x5xf32> to vector<128xf32>
    %53 = vector.shape_cast %52 : vector<128xf32> to vector<128x1xf32>
    %cst_91 = arith.constant 5.000000e+00 : f32
    %54 = vector.broadcast %cst_91 : f32 to vector<128x1xf32>
    %55 = arith.divf %53, %54 : vector<128x1xf32>
    %56 = vector.broadcast %48 : vector<128x1xf32> to vector<128x5xf32>
    %57 = arith.subf %0, %56 : vector<128x5xf32>
    %cst_92 = arith.constant 9.99999974E-6 : f32
    %58 = vector.broadcast %cst_92 : f32 to vector<128x1xf32>
    %59 = arith.addf %55, %58 : vector<128x1xf32>
    %60 = math.rsqrt %59 : vector<128x1xf32>
    %61 = vector.broadcast %60 : vector<128x1xf32> to vector<128x5xf32>
    %62 = arith.mulf %57, %61 : vector<128x5xf32>
    %63 = vector.broadcast %4 : vector<1x5xf32> to vector<128x5xf32>
    %64 = arith.mulf %62, %63 : vector<128x5xf32>
    %65 = vector.broadcast %5 : vector<1x5xf32> to vector<128x5xf32>
    %66 = arith.addf %64, %65 : vector<128x5xf32>
    %67 = arith.truncf %66 : vector<128x5xf32> to vector<128x5xbf16>
    %cst_93 = arith.constant dense<0.000000e+00> : vector<128x64xf32>
    %68 = tpu.matmul %67, %6, %cst_93 {dimension_numbers = #tpu.dot_dimension_numbers<[1], [0], [0], [1], [0, 0, 1, 1], [], []>} : vector<128x5xbf16>, vector<5x64xbf16>, vector<128x64xf32> -> vector<128x64xf32>
    %69 = vector.broadcast %7 : vector<1x64xf32> to vector<128x64xf32>
    %70 = arith.addf %68, %69 : vector<128x64xf32>
    %cst_94 = arith.constant 0.000000e+00 : f32
    %71 = vector.broadcast %cst_94 : f32 to vector<128x64xf32>
    %72 = arith.maximumf %70, %71 : vector<128x64xf32>
    %73 = arith.truncf %72 : vector<128x64xf32> to vector<128x64xbf16>
    %cst_95 = arith.constant dense<0.000000e+00> : vector<128x64xf32>
    %74 = tpu.matmul %73, %8, %cst_95 {dimension_numbers = #tpu.dot_dimension_numbers<[1], [0], [0], [1], [0, 0, 1, 1], [], []>} : vector<128x64xbf16>, vector<64x64xbf16>, vector<128x64xf32> -> vector<128x64xf32>
    %75 = vector.broadcast %9 : vector<1x64xf32> to vector<128x64xf32>
    %76 = arith.addf %74, %75 : vector<128x64xf32>
    %cst_96 = arith.constant 0.000000e+00 : f32
    %77 = vector.broadcast %cst_96 : f32 to vector<128x64xf32>
    %78 = arith.maximumf %76, %77 : vector<128x64xf32>
    %cst_97 = arith.constant dense<0.000000e+00> : vector<128xf32>
    %79 = vector.multi_reduction <add>, %1, %cst_97 [1] : vector<128x19xf32> to vector<128xf32>
    %80 = vector.shape_cast %79 : vector<128xf32> to vector<128x1xf32>
    %cst_98 = arith.constant 1.900000e+01 : f32
    %81 = vector.broadcast %cst_98 : f32 to vector<128x1xf32>
    %82 = arith.divf %80, %81 : vector<128x1xf32>
    %83 = vector.broadcast %82 : vector<128x1xf32> to vector<128x19xf32>
    %84 = arith.subf %1, %83 : vector<128x19xf32>
    %85 = arith.mulf %84, %84 : vector<128x19xf32>
    %cst_99 = arith.constant dense<0.000000e+00> : vector<128xf32>
    %86 = vector.multi_reduction <add>, %85, %cst_99 [1] : vector<128x19xf32> to vector<128xf32>
    %87 = vector.shape_cast %86 : vector<128xf32> to vector<128x1xf32>
    %cst_100 = arith.constant 1.900000e+01 : f32
    %88 = vector.broadcast %cst_100 : f32 to vector<128x1xf32>
    %89 = arith.divf %87, %88 : vector<128x1xf32>
    %90 = vector.broadcast %82 : vector<128x1xf32> to vector<128x19xf32>
    %91 = arith.subf %1, %90 : vector<128x19xf32>
    %cst_101 = arith.constant 9.99999974E-6 : f32
    %92 = vector.broadcast %cst_101 : f32 to vector<128x1xf32>
    %93 = arith.addf %89, %92 : vector<128x1xf32>
    %94 = math.rsqrt %93 : vector<128x1xf32>
    %95 = vector.broadcast %94 : vector<128x1xf32> to vector<128x19xf32>
    %96 = arith.mulf %91, %95 : vector<128x19xf32>
    %97 = vector.broadcast %10 : vector<1x19xf32> to vector<128x19xf32>
    %98 = arith.mulf %96, %97 : vector<128x19xf32>
    %99 = vector.broadcast %11 : vector<1x19xf32> to vector<128x19xf32>
    %100 = arith.addf %98, %99 : vector<128x19xf32>
    %101 = arith.truncf %100 : vector<128x19xf32> to vector<128x19xbf16>
    %cst_102 = arith.constant dense<0.000000e+00> : vector<128x64xf32>
    %102 = tpu.matmul %101, %12, %cst_102 {dimension_numbers = #tpu.dot_dimension_numbers<[1], [0], [0], [1], [0, 0, 1, 1], [], []>} : vector<128x19xbf16>, vector<19x64xbf16>, vector<128x64xf32> -> vector<128x64xf32>
    %103 = vector.broadcast %13 : vector<1x64xf32> to vector<128x64xf32>
    %104 = arith.addf %102, %103 : vector<128x64xf32>
    %cst_103 = arith.constant 0.000000e+00 : f32
    %105 = vector.broadcast %cst_103 : f32 to vector<128x64xf32>
    %106 = arith.maximumf %104, %105 : vector<128x64xf32>
    %107 = arith.truncf %106 : vector<128x64xf32> to vector<128x64xbf16>
    %cst_104 = arith.constant dense<0.000000e+00> : vector<128x64xf32>
    %108 = tpu.matmul %107, %14, %cst_104 {dimension_numbers = #tpu.dot_dimension_numbers<[1], [0], [0], [1], [0, 0, 1, 1], [], []>} : vector<128x64xbf16>, vector<64x64xbf16>, vector<128x64xf32> -> vector<128x64xf32>
    %109 = vector.broadcast %15 : vector<1x64xf32> to vector<128x64xf32>
    %110 = arith.addf %108, %109 : vector<128x64xf32>
    %cst_105 = arith.constant 0.000000e+00 : f32
    %111 = vector.broadcast %cst_105 : f32 to vector<128x64xf32>
    %112 = arith.maximumf %110, %111 : vector<128x64xf32>
    %113 = arith.truncf %78 : vector<128x64xf32> to vector<128x64xbf16>
    %114 = arith.truncf %112 : vector<128x64xf32> to vector<128x64xbf16>
    %115 = tpu.iota {dimensions = array<i32: 1>} : vector<32x128xi32>
    %116 = vector.broadcast %2 : vector<32x1xi32> to vector<32x128xi32>
    %117 = arith.cmpi eq, %115, %116 : vector<32x128xi32>
    %118 = arith.extui %117 : vector<32x128xi1> to vector<32x128xi32>
    %119 = arith.sitofp %118 : vector<32x128xi32> to vector<32x128xf32>
    %120 = arith.truncf %119 : vector<32x128xf32> to vector<32x128xbf16>
    %121 = tpu.iota {dimensions = array<i32: 1>} : vector<32x128xi32>
    %122 = vector.broadcast %3 : vector<32x1xi32> to vector<32x128xi32>
    %123 = arith.cmpi eq, %121, %122 : vector<32x128xi32>
    %124 = arith.extui %123 : vector<32x128xi1> to vector<32x128xi32>
    %125 = arith.sitofp %124 : vector<32x128xi32> to vector<32x128xf32>
    %126 = arith.truncf %125 : vector<32x128xf32> to vector<32x128xbf16>
    %cst_106 = arith.constant dense<0.000000e+00> : vector<128x64xf32>
    %127 = tpu.matmul %113, %16, %cst_106 {dimension_numbers = #tpu.dot_dimension_numbers<[1], [0], [0], [1], [0, 0, 1, 1], [], []>} : vector<128x64xbf16>, vector<64x64xbf16>, vector<128x64xf32> -> vector<128x64xf32>
    %128 = arith.truncf %127 : vector<128x64xf32> to vector<128x64xbf16>
    %cst_107 = arith.constant dense<0.000000e+00> : vector<128x64xf32>
    %129 = tpu.matmul %114, %18, %cst_107 {dimension_numbers = #tpu.dot_dimension_numbers<[1], [0], [0], [1], [0, 0, 1, 1], [], []>} : vector<128x64xbf16>, vector<64x64xbf16>, vector<128x64xf32> -> vector<128x64xf32>
    %130 = arith.truncf %129 : vector<128x64xf32> to vector<128x64xbf16>
    %cst_108 = arith.constant dense<0.000000e+00> : vector<32x64xf32>
    %131 = tpu.matmul %120, %128, %cst_108 {dimension_numbers = #tpu.dot_dimension_numbers<[1], [0], [0], [1], [0, 0, 1, 1], [], []>} : vector<32x128xbf16>, vector<128x64xbf16>, vector<32x64xf32> -> vector<32x64xf32>
    %cst_109 = arith.constant dense<0.000000e+00> : vector<32x64xf32>
    %132 = tpu.matmul %126, %130, %cst_109 {dimension_numbers = #tpu.dot_dimension_numbers<[1], [0], [0], [1], [0, 0, 1, 1], [], []>} : vector<32x128xbf16>, vector<128x64xbf16>, vector<32x64xf32> -> vector<32x64xf32>
    %133 = arith.addf %131, %132 : vector<32x64xf32>
    %134 = vector.broadcast %17 : vector<1x64xf32> to vector<32x64xf32>
    %135 = arith.addf %133, %134 : vector<32x64xf32>
    %cst_110 = arith.constant dense<0.000000e+00> : vector<32xf32>
    %136 = vector.multi_reduction <add>, %135, %cst_110 [1] : vector<32x64xf32> to vector<32xf32>
    %137 = vector.shape_cast %136 : vector<32xf32> to vector<32x1xf32>
    %cst_111 = arith.constant 6.400000e+01 : f32
    %138 = vector.broadcast %cst_111 : f32 to vector<32x1xf32>
    %139 = arith.divf %137, %138 : vector<32x1xf32>
    %140 = vector.broadcast %139 : vector<32x1xf32> to vector<32x64xf32>
    %141 = arith.subf %135, %140 : vector<32x64xf32>
    %142 = arith.mulf %141, %141 : vector<32x64xf32>
    %cst_112 = arith.constant dense<0.000000e+00> : vector<32xf32>
    %143 = vector.multi_reduction <add>, %142, %cst_112 [1] : vector<32x64xf32> to vector<32xf32>
    %144 = vector.shape_cast %143 : vector<32xf32> to vector<32x1xf32>
    %cst_113 = arith.constant 6.400000e+01 : f32
    %145 = vector.broadcast %cst_113 : f32 to vector<32x1xf32>
    %146 = arith.divf %144, %145 : vector<32x1xf32>
    %147 = vector.broadcast %139 : vector<32x1xf32> to vector<32x64xf32>
    %148 = arith.subf %135, %147 : vector<32x64xf32>
    %cst_114 = arith.constant 9.99999974E-6 : f32
    %149 = vector.broadcast %cst_114 : f32 to vector<32x1xf32>
    %150 = arith.addf %146, %149 : vector<32x1xf32>
    %151 = math.rsqrt %150 : vector<32x1xf32>
    %152 = vector.broadcast %151 : vector<32x1xf32> to vector<32x64xf32>
    %153 = arith.mulf %148, %152 : vector<32x64xf32>
    %154 = vector.broadcast %19 : vector<1x64xf32> to vector<32x64xf32>
    %155 = arith.mulf %153, %154 : vector<32x64xf32>
    %156 = vector.broadcast %20 : vector<1x64xf32> to vector<32x64xf32>
    %157 = arith.addf %155, %156 : vector<32x64xf32>
    %cst_115 = arith.constant 0.000000e+00 : f32
    %158 = vector.broadcast %cst_115 : f32 to vector<32x64xf32>
    %159 = arith.maximumf %157, %158 : vector<32x64xf32>
    %160 = arith.truncf %159 : vector<32x64xf32> to vector<32x64xbf16>
    %cst_116 = arith.constant dense<0.000000e+00> : vector<32x64xf32>
    %161 = tpu.matmul %160, %21, %cst_116 {dimension_numbers = #tpu.dot_dimension_numbers<[1], [0], [0], [1], [0, 0, 1, 1], [], []>} : vector<32x64xbf16>, vector<64x64xbf16>, vector<32x64xf32> -> vector<32x64xf32>
    %162 = vector.broadcast %22 : vector<1x64xf32> to vector<32x64xf32>
    %163 = arith.addf %161, %162 : vector<32x64xf32>
    %164 = arith.truncf %163 : vector<32x64xf32> to vector<32x64xbf16>
    %cst_117 = arith.constant dense<0.000000e+00> : vector<128x64xf32>
    %165 = tpu.matmul %120, %164, %cst_117 {dimension_numbers = #tpu.dot_dimension_numbers<[0], [0], [1], [1], [0, 1, 1, 1], [], []>} : vector<32x128xbf16>, vector<32x64xbf16>, vector<128x64xf32> -> vector<128x64xf32>
    %cst_118 = arith.constant dense<0.000000e+00> : vector<128xf32>
    %166 = vector.multi_reduction <add>, %165, %cst_118 [1] : vector<128x64xf32> to vector<128xf32>
    %167 = vector.shape_cast %166 : vector<128xf32> to vector<128x1xf32>
    %cst_119 = arith.constant 6.400000e+01 : f32
    %168 = vector.broadcast %cst_119 : f32 to vector<128x1xf32>
    %169 = arith.divf %167, %168 : vector<128x1xf32>
    %170 = vector.broadcast %169 : vector<128x1xf32> to vector<128x64xf32>
    %171 = arith.subf %165, %170 : vector<128x64xf32>
    %172 = arith.mulf %171, %171 : vector<128x64xf32>
    %cst_120 = arith.constant dense<0.000000e+00> : vector<128xf32>
    %173 = vector.multi_reduction <add>, %172, %cst_120 [1] : vector<128x64xf32> to vector<128xf32>
    %174 = vector.shape_cast %173 : vector<128xf32> to vector<128x1xf32>
    %cst_121 = arith.constant 6.400000e+01 : f32
    %175 = vector.broadcast %cst_121 : f32 to vector<128x1xf32>
    %176 = arith.divf %174, %175 : vector<128x1xf32>
    %177 = vector.broadcast %169 : vector<128x1xf32> to vector<128x64xf32>
    %178 = arith.subf %165, %177 : vector<128x64xf32>
    %cst_122 = arith.constant 9.99999974E-6 : f32
    %179 = vector.broadcast %cst_122 : f32 to vector<128x1xf32>
    %180 = arith.addf %176, %179 : vector<128x1xf32>
    %181 = math.rsqrt %180 : vector<128x1xf32>
    %182 = vector.broadcast %181 : vector<128x1xf32> to vector<128x64xf32>
    %183 = arith.mulf %178, %182 : vector<128x64xf32>
    %184 = vector.broadcast %23 : vector<1x64xf32> to vector<128x64xf32>
    %185 = arith.mulf %183, %184 : vector<128x64xf32>
    %186 = vector.broadcast %24 : vector<1x64xf32> to vector<128x64xf32>
    %187 = arith.addf %185, %186 : vector<128x64xf32>
    %188 = arith.truncf %187 : vector<128x64xf32> to vector<128x64xbf16>
    %189 = tpu.concatenate %188, %113 in 1 : vector<128x64xbf16>, vector<128x64xbf16> -> vector<128x128xbf16>
    %cst_123 = arith.constant dense<0.000000e+00> : vector<128x64xf32>
    %190 = tpu.matmul %189, %25, %cst_123 {dimension_numbers = #tpu.dot_dimension_numbers<[1], [0], [0], [1], [0, 0, 1, 1], [], []>} : vector<128x128xbf16>, vector<128x64xbf16>, vector<128x64xf32> -> vector<128x64xf32>
    %191 = vector.broadcast %26 : vector<1x64xf32> to vector<128x64xf32>
    %192 = arith.addf %190, %191 : vector<128x64xf32>
    %cst_124 = arith.constant 0.000000e+00 : f32
    %193 = vector.broadcast %cst_124 : f32 to vector<128x64xf32>
    %194 = arith.maximumf %192, %193 : vector<128x64xf32>
    %195 = arith.truncf %194 : vector<128x64xf32> to vector<128x64xbf16>
    %cst_125 = arith.constant dense<0.000000e+00> : vector<128x64xf32>
    %196 = tpu.matmul %195, %27, %cst_125 {dimension_numbers = #tpu.dot_dimension_numbers<[1], [0], [0], [1], [0, 0, 1, 1], [], []>} : vector<128x64xbf16>, vector<64x64xbf16>, vector<128x64xf32> -> vector<128x64xf32>
    %197 = vector.broadcast %28 : vector<1x64xf32> to vector<128x64xf32>
    %198 = arith.addf %196, %197 : vector<128x64xf32>
    %199 = arith.truncf %198 : vector<128x64xf32> to vector<128x64xbf16>
    %cst_126 = arith.constant dense<0.000000e+00> : vector<128x64xf32>
    %200 = tpu.matmul %114, %29, %cst_126 {dimension_numbers = #tpu.dot_dimension_numbers<[1], [0], [0], [1], [0, 0, 1, 1], [], []>} : vector<128x64xbf16>, vector<64x64xbf16>, vector<128x64xf32> -> vector<128x64xf32>
    %201 = arith.truncf %200 : vector<128x64xf32> to vector<128x64xbf16>
    %cst_127 = arith.constant dense<0.000000e+00> : vector<128x64xf32>
    %202 = tpu.matmul %199, %31, %cst_127 {dimension_numbers = #tpu.dot_dimension_numbers<[1], [0], [0], [1], [0, 0, 1, 1], [], []>} : vector<128x64xbf16>, vector<64x64xbf16>, vector<128x64xf32> -> vector<128x64xf32>
    %203 = arith.truncf %202 : vector<128x64xf32> to vector<128x64xbf16>
    %cst_128 = arith.constant dense<0.000000e+00> : vector<32x64xf32>
    %204 = tpu.matmul %126, %201, %cst_128 {dimension_numbers = #tpu.dot_dimension_numbers<[1], [0], [0], [1], [0, 0, 1, 1], [], []>} : vector<32x128xbf16>, vector<128x64xbf16>, vector<32x64xf32> -> vector<32x64xf32>
    %cst_129 = arith.constant dense<0.000000e+00> : vector<32x64xf32>
    %205 = tpu.matmul %120, %203, %cst_129 {dimension_numbers = #tpu.dot_dimension_numbers<[1], [0], [0], [1], [0, 0, 1, 1], [], []>} : vector<32x128xbf16>, vector<128x64xbf16>, vector<32x64xf32> -> vector<32x64xf32>
    %206 = arith.addf %204, %205 : vector<32x64xf32>
    %207 = vector.broadcast %30 : vector<1x64xf32> to vector<32x64xf32>
    %208 = arith.addf %206, %207 : vector<32x64xf32>
    %cst_130 = arith.constant dense<0.000000e+00> : vector<32xf32>
    %209 = vector.multi_reduction <add>, %208, %cst_130 [1] : vector<32x64xf32> to vector<32xf32>
    %210 = vector.shape_cast %209 : vector<32xf32> to vector<32x1xf32>
    %cst_131 = arith.constant 6.400000e+01 : f32
    %211 = vector.broadcast %cst_131 : f32 to vector<32x1xf32>
    %212 = arith.divf %210, %211 : vector<32x1xf32>
    %213 = vector.broadcast %212 : vector<32x1xf32> to vector<32x64xf32>
    %214 = arith.subf %208, %213 : vector<32x64xf32>
    %215 = arith.mulf %214, %214 : vector<32x64xf32>
    %cst_132 = arith.constant dense<0.000000e+00> : vector<32xf32>
    %216 = vector.multi_reduction <add>, %215, %cst_132 [1] : vector<32x64xf32> to vector<32xf32>
    %217 = vector.shape_cast %216 : vector<32xf32> to vector<32x1xf32>
    %cst_133 = arith.constant 6.400000e+01 : f32
    %218 = vector.broadcast %cst_133 : f32 to vector<32x1xf32>
    %219 = arith.divf %217, %218 : vector<32x1xf32>
    %220 = vector.broadcast %212 : vector<32x1xf32> to vector<32x64xf32>
    %221 = arith.subf %208, %220 : vector<32x64xf32>
    %cst_134 = arith.constant 9.99999974E-6 : f32
    %222 = vector.broadcast %cst_134 : f32 to vector<32x1xf32>
    %223 = arith.addf %219, %222 : vector<32x1xf32>
    %224 = math.rsqrt %223 : vector<32x1xf32>
    %225 = vector.broadcast %224 : vector<32x1xf32> to vector<32x64xf32>
    %226 = arith.mulf %221, %225 : vector<32x64xf32>
    %227 = vector.broadcast %32 : vector<1x64xf32> to vector<32x64xf32>
    %228 = arith.mulf %226, %227 : vector<32x64xf32>
    %229 = vector.broadcast %33 : vector<1x64xf32> to vector<32x64xf32>
    %230 = arith.addf %228, %229 : vector<32x64xf32>
    %cst_135 = arith.constant 0.000000e+00 : f32
    %231 = vector.broadcast %cst_135 : f32 to vector<32x64xf32>
    %232 = arith.maximumf %230, %231 : vector<32x64xf32>
    %233 = arith.truncf %232 : vector<32x64xf32> to vector<32x64xbf16>
    %cst_136 = arith.constant dense<0.000000e+00> : vector<32x64xf32>
    %234 = tpu.matmul %233, %34, %cst_136 {dimension_numbers = #tpu.dot_dimension_numbers<[1], [0], [0], [1], [0, 0, 1, 1], [], []>} : vector<32x64xbf16>, vector<64x64xbf16>, vector<32x64xf32> -> vector<32x64xf32>
    %235 = vector.broadcast %35 : vector<1x64xf32> to vector<32x64xf32>
    %236 = arith.addf %234, %235 : vector<32x64xf32>
    %237 = arith.truncf %236 : vector<32x64xf32> to vector<32x64xbf16>
    %cst_137 = arith.constant dense<0.000000e+00> : vector<128x64xf32>
    %238 = tpu.matmul %126, %237, %cst_137 {dimension_numbers = #tpu.dot_dimension_numbers<[0], [0], [1], [1], [0, 1, 1, 1], [], []>} : vector<32x128xbf16>, vector<32x64xbf16>, vector<128x64xf32> -> vector<128x64xf32>
    %cst_138 = arith.constant dense<0.000000e+00> : vector<128xf32>
    %239 = vector.multi_reduction <add>, %238, %cst_138 [1] : vector<128x64xf32> to vector<128xf32>
    %240 = vector.shape_cast %239 : vector<128xf32> to vector<128x1xf32>
    %cst_139 = arith.constant 6.400000e+01 : f32
    %241 = vector.broadcast %cst_139 : f32 to vector<128x1xf32>
    %242 = arith.divf %240, %241 : vector<128x1xf32>
    %243 = vector.broadcast %242 : vector<128x1xf32> to vector<128x64xf32>
    %244 = arith.subf %238, %243 : vector<128x64xf32>
    %245 = arith.mulf %244, %244 : vector<128x64xf32>
    %cst_140 = arith.constant dense<0.000000e+00> : vector<128xf32>
    %246 = vector.multi_reduction <add>, %245, %cst_140 [1] : vector<128x64xf32> to vector<128xf32>
    %247 = vector.shape_cast %246 : vector<128xf32> to vector<128x1xf32>
    %cst_141 = arith.constant 6.400000e+01 : f32
    %248 = vector.broadcast %cst_141 : f32 to vector<128x1xf32>
    %249 = arith.divf %247, %248 : vector<128x1xf32>
    %250 = vector.broadcast %242 : vector<128x1xf32> to vector<128x64xf32>
    %251 = arith.subf %238, %250 : vector<128x64xf32>
    %cst_142 = arith.constant 9.99999974E-6 : f32
    %252 = vector.broadcast %cst_142 : f32 to vector<128x1xf32>
    %253 = arith.addf %249, %252 : vector<128x1xf32>
    %254 = math.rsqrt %253 : vector<128x1xf32>
    %255 = vector.broadcast %254 : vector<128x1xf32> to vector<128x64xf32>
    %256 = arith.mulf %251, %255 : vector<128x64xf32>
    %257 = vector.broadcast %36 : vector<1x64xf32> to vector<128x64xf32>
    %258 = arith.mulf %256, %257 : vector<128x64xf32>
    %259 = vector.broadcast %37 : vector<1x64xf32> to vector<128x64xf32>
    %260 = arith.addf %258, %259 : vector<128x64xf32>
    %261 = arith.truncf %260 : vector<128x64xf32> to vector<128x64xbf16>
    %262 = tpu.concatenate %261, %114 in 1 : vector<128x64xbf16>, vector<128x64xbf16> -> vector<128x128xbf16>
    %cst_143 = arith.constant dense<0.000000e+00> : vector<128x64xf32>
    %263 = tpu.matmul %262, %38, %cst_143 {dimension_numbers = #tpu.dot_dimension_numbers<[1], [0], [0], [1], [0, 0, 1, 1], [], []>} : vector<128x128xbf16>, vector<128x64xbf16>, vector<128x64xf32> -> vector<128x64xf32>
    %264 = vector.broadcast %39 : vector<1x64xf32> to vector<128x64xf32>
    %265 = arith.addf %263, %264 : vector<128x64xf32>
    %cst_144 = arith.constant 0.000000e+00 : f32
    %266 = vector.broadcast %cst_144 : f32 to vector<128x64xf32>
    %267 = arith.maximumf %265, %266 : vector<128x64xf32>
    %268 = arith.truncf %267 : vector<128x64xf32> to vector<128x64xbf16>
    %cst_145 = arith.constant dense<0.000000e+00> : vector<128x64xf32>
    %269 = tpu.matmul %268, %40, %cst_145 {dimension_numbers = #tpu.dot_dimension_numbers<[1], [0], [0], [1], [0, 0, 1, 1], [], []>} : vector<128x64xbf16>, vector<64x64xbf16>, vector<128x64xf32> -> vector<128x64xf32>
    %270 = vector.broadcast %41 : vector<1x64xf32> to vector<128x64xf32>
    %271 = arith.addf %269, %270 : vector<128x64xf32>
    %272 = arith.truncf %271 : vector<128x64xf32> to vector<128x64xbf16>
    %cst_146 = arith.constant dense<0.000000e+00> : vector<128x64xf32>
    %273 = tpu.matmul %272, %42, %cst_146 {dimension_numbers = #tpu.dot_dimension_numbers<[1], [0], [0], [1], [0, 0, 1, 1], [], []>} : vector<128x64xbf16>, vector<64x64xbf16>, vector<128x64xf32> -> vector<128x64xf32>
    %274 = vector.broadcast %43 : vector<1x64xf32> to vector<128x64xf32>
    %275 = arith.addf %273, %274 : vector<128x64xf32>
    %cst_147 = arith.constant 0.000000e+00 : f32
    %276 = vector.broadcast %cst_147 : f32 to vector<128x64xf32>
    %277 = arith.maximumf %275, %276 : vector<128x64xf32>
    %278 = arith.truncf %277 : vector<128x64xf32> to vector<128x64xbf16>
    %279 = tpu.transpose %278, [1, 0] : vector<128x64xbf16> -> vector<64x128xbf16>
    %cst_148 = arith.constant dense<0.000000e+00> : vector<1x128xf32>
    %280 = tpu.matmul %44, %279, %cst_148 {dimension_numbers = #tpu.dot_dimension_numbers<[1], [0], [0], [1], [0, 0, 1, 1], [], []>} : vector<1x64xbf16>, vector<64x128xbf16>, vector<1x128xf32> -> vector<1x128xf32>
    %c0_149 = arith.constant 0 : index
    %c0_150 = arith.constant 0 : index
    %281 = vector.load %arg45[%c0_149, %c0_150] : memref<1x128xf32, #tpu.memory_space<vmem>>, vector<1x128xf32>
    tpu.vector_store %arg45[%c0_149, %c0_150], %280 {strides = array<i32>} : memref<1x128xf32, #tpu.memory_space<vmem>>, vector<1x128xf32>,
    return
  }
}

</mosaic_0001>

<llo_original>
// kernel: gnn_policy_forward.1
$region0: #{gnn_policy_forward.1}
  #allocation0 [shape = 'u32[]', space=smem, size = 0x4, offset = 0x4, fixed_abs, tag = 'smem constant byte address 0x4 - core index']
  #allocation1 [shape = 'u32[144,128]{1,0:T(1,128)}', space=vmem, size = 0x12000, scoped, tag = 'internal scratch']
  %s0 = inlined_call_operand.smem [shape: u32[46], index: -1, kind: input, shape index: {}]
  %s1 = sld [smem:[%s0]]
  %s2 = scalar_lea.smem %s0, 1
  %s3 = sld [smem:[%s2]]
  %s4 = scalar_lea.smem %s0, 2
  %s5 = sld [smem:[%s4]]
  %s6 = scalar_lea.smem %s0, 3
  %s7 = sld [smem:[%s6]]
  %s8 = scalar_lea.smem %s0, 4
  %s9 = sld [smem:[%s8]]
  %s10 = scalar_lea.smem %s0, 5
  %s11 = sld [smem:[%s10]]
  %s12 = scalar_lea.smem %s0, 6
  %s13 = sld [smem:[%s12]]
  %s14 = scalar_lea.smem %s0, 7
  %s15 = sld [smem:[%s14]]
  %s16 = scalar_lea.smem %s0, 8
  %s17 = sld [smem:[%s16]]
  %s18 = scalar_lea.smem %s0, 9
  %s19 = sld [smem:[%s18]]
  %s20 = scalar_lea.smem %s0, 10
  %s21 = sld [smem:[%s20]]
  %s22 = scalar_lea.smem %s0, 11
  %s23 = sld [smem:[%s22]]
  %s24 = scalar_lea.smem %s0, 12
  %s25 = sld [smem:[%s24]]
  %s26 = scalar_lea.smem %s0, 13
  %s27 = sld [smem:[%s26]]
  %s28 = scalar_lea.smem %s0, 14
  %s29 = sld [smem:[%s28]]
  %s30 = scalar_lea.smem %s0, 15
  %s31 = sld [smem:[%s30]]
  %s32 = scalar_lea.smem %s0, 16
  %s33 = sld [smem:[%s32]]
  %s34 = scalar_lea.smem %s0, 17
  %s35 = sld [smem:[%s34]]
  %s36 = scalar_lea.smem %s0, 18
  %s37 = sld [smem:[%s36]]
  %s38 = scalar_lea.smem %s0, 19
  %s39 = sld [smem:[%s38]]
  %s40 = scalar_lea.smem %s0, 20
  %s41 = sld [smem:[%s40]]
  %s42 = scalar_lea.smem %s0, 21
  %s43 = sld [smem:[%s42]]
  %s44 = scalar_lea.smem %s0, 22
  %s45 = sld [smem:[%s44]]
  %s46 = scalar_lea.smem %s0, 23
  %s47 = sld [smem:[%s46]]
  %s48 = scalar_lea.smem %s0, 24
  %s49 = sld [smem:[%s48]]
  %s50 = scalar_lea.smem %s0, 25
  %s51 = sld [smem:[%s50]]
  %s52 = scalar_lea.smem %s0, 26
  %s53 = sld [smem:[%s52]]
  %s54 = scalar_lea.smem %s0, 27
  %s55 = sld [smem:[%s54]]
  %s56 = scalar_lea.smem %s0, 28
  %s57 = sld [smem:[%s56]]
  %s58 = scalar_lea.smem %s0, 29
  %s59 = sld [smem:[%s58]]
  %s60 = scalar_lea.smem %s0, 30
  %s61 = sld [smem:[%s60]]
  %s62 = scalar_lea.smem %s0, 31
  %s63 = sld [smem:[%s62]]
  %s64 = scalar_lea.smem %s0, 32
  %s65 = sld [smem:[%s64]]
  %s66 = scalar_lea.smem %s0, 33
  %s67 = sld [smem:[%s66]]
  %s68 = scalar_lea.smem %s0, 34
  %s69 = sld [smem:[%s68]]
  %s70 = scalar_lea.smem %s0, 35
  %s71 = sld [smem:[%s70]]
  %s72 = scalar_lea.smem %s0, 36
  %s73 = sld [smem:[%s72]]
  %s74 = scalar_lea.smem %s0, 37
  %s75 = sld [smem:[%s74]]
  %s76 = scalar_lea.smem %s0, 38
  %s77 = sld [smem:[%s76]]
  %s78 = scalar_lea.smem %s0, 39
  %s79 = sld [smem:[%s78]]
  %s80 = scalar_lea.smem %s0, 40
  %s81 = sld [smem:[%s80]]
  %s82 = scalar_lea.smem %s0, 41
  %s83 = sld [smem:[%s82]]
  %s84 = scalar_lea.smem %s0, 42
  %s85 = sld [smem:[%s84]]
  %s86 = scalar_lea.smem %s0, 43
  %s87 = sld [smem:[%s86]]
  %s88 = scalar_lea.smem %s0, 44
  %s89 = sld [smem:[%s88]]
  %s90 = scalar_lea.smem %s0, 45
  %s91 = sld [smem:[%s90]]
  %s92 = sld [smem:[#allocation0]]
  $region190: #{gnn_policy_forward.1} parent=0
    _
  %s94 = ssub.s32 1, %s92
  %s95 = scalar_select 0, %s94, %s92
  // Predicated region
  $region2: #{gnn_policy_forward.1} parent=0 // pred_check
    _
  $region3: #{gnn_policy_forward.1} parent=0 // pred_check_branch
    %97 = sbr.rel (0) target = $region5
  $region4: #{gnn_policy_forward.1} parent=0 // pred_region
    _
  $region5: #{gnn_policy_forward.1} parent=0 // pred_fallthru
    _
  // Predicated region
  $region6: #{gnn_policy_forward.1} parent=0 // pred_check
    _
  $region7: #{gnn_policy_forward.1} parent=0 // pred_check_branch
    %99 = sbr.rel (0) target = $region9
  $region8: #{gnn_policy_forward.1} parent=0 // pred_region
    _
  $region9: #{gnn_policy_forward.1} parent=0 // pred_fallthru
    _
  // Predicated region
  $region10: #{gnn_policy_forward.1} parent=0 // pred_check
    _
  $region11: #{gnn_policy_forward.1} parent=0 // pred_check_branch
    %101 = sbr.rel (0) target = $region13
  $region12: #{gnn_policy_forward.1} parent=0 // pred_region
    _
  $region13: #{gnn_policy_forward.1} parent=0 // pred_fallthru
    _
  // Predicated region
  $region14: #{gnn_policy_forward.1} parent=0 // pred_check
    _
  $region15: #{gnn_policy_forward.1} parent=0 // pred_check_branch
    %103 = sbr.rel (0) target = $region17
  $region16: #{gnn_policy_forward.1} parent=0 // pred_region
    _
  $region17: #{gnn_policy_forward.1} parent=0 // pred_fallthru
    _
  // Predicated region
  $region18: #{gnn_policy_forward.1} parent=0 // pred_check
    _
  $region19: #{gnn_policy_forward.1} parent=0 // pred_check_branch
    %105 = sbr.rel (0) target = $region21
  $region20: #{gnn_policy_forward.1} parent=0 // pred_region
    _
  $region21: #{gnn_policy_forward.1} parent=0 // pred_fallthru
    _
  // Predicated region
  $region22: #{gnn_policy_forward.1} parent=0 // pred_check
    _
  $region23: #{gnn_policy_forward.1} parent=0 // pred_check_branch
    %107 = sbr.rel (0) target = $region25
  $region24: #{gnn_policy_forward.1} parent=0 // pred_region
    _
  $region25: #{gnn_policy_forward.1} parent=0 // pred_fallthru
    _
  // Predicated region
  $region26: #{gnn_policy_forward.1} parent=0 // pred_check
    _
  $region27: #{gnn_policy_forward.1} parent=0 // pred_check_branch
    %109 = sbr.rel (0) target = $region29
  $region28: #{gnn_policy_forward.1} parent=0 // pred_region
    _
  $region29: #{gnn_policy_forward.1} parent=0 // pred_fallthru
    _
  // Predicated region
  $region30: #{gnn_policy_forward.1} parent=0 // pred_check
    _
  $region31: #{gnn_policy_forward.1} parent=0 // pred_check_branch
    %111 = sbr.rel (0) target = $region33
  $region32: #{gnn_policy_forward.1} parent=0 // pred_region
    _
  $region33: #{gnn_policy_forward.1} parent=0 // pred_fallthru
    _
  // Predicated region
  $region34: #{gnn_policy_forward.1} parent=0 // pred_check
    _
  $region35: #{gnn_policy_forward.1} parent=0 // pred_check_branch
    %113 = sbr.rel (0) target = $region37
  $region36: #{gnn_policy_forward.1} parent=0 // pred_region
    _
  $region37: #{gnn_policy_forward.1} parent=0 // pred_fallthru
    _
  // Predicated region
  $region38: #{gnn_policy_forward.1} parent=0 // pred_check
    _
  $region39: #{gnn_policy_forward.1} parent=0 // pred_check_branch
    %115 = sbr.rel (0) target = $region41
  $region40: #{gnn_policy_forward.1} parent=0 // pred_region
    _
  $region41: #{gnn_policy_forward.1} parent=0 // pred_fallthru
    _
  // Predicated region
  $region42: #{gnn_policy_forward.1} parent=0 // pred_check
    _
  $region43: #{gnn_policy_forward.1} parent=0 // pred_check_branch
    %117 = sbr.rel (0) target = $region45
  $region44: #{gnn_policy_forward.1} parent=0 // pred_region
    _
  $region45: #{gnn_policy_forward.1} parent=0 // pred_fallthru
    _
  // Predicated region
  $region46: #{gnn_policy_forward.1} parent=0 // pred_check
    _
  $region47: #{gnn_policy_forward.1} parent=0 // pred_check_branch
    %119 = sbr.rel (0) target = $region49
  $region48: #{gnn_policy_forward.1} parent=0 // pred_region
    _
  $region49: #{gnn_policy_forward.1} parent=0 // pred_fallthru
    _
  // Predicated region
  $region50: #{gnn_policy_forward.1} parent=0 // pred_check
    _
  $region51: #{gnn_policy_forward.1} parent=0 // pred_check_branch
    %121 = sbr.rel (0) target = $region53
  $region52: #{gnn_policy_forward.1} parent=0 // pred_region
    _
  $region53: #{gnn_policy_forward.1} parent=0 // pred_fallthru
    _
  // Predicated region
  $region54: #{gnn_policy_forward.1} parent=0 // pred_check
    _
  $region55: #{gnn_policy_forward.1} parent=0 // pred_check_branch
    %123 = sbr.rel (0) target = $region57
  $region56: #{gnn_policy_forward.1} parent=0 // pred_region
    _
  $region57: #{gnn_policy_forward.1} parent=0 // pred_fallthru
    _
  // Predicated region
  $region58: #{gnn_policy_forward.1} parent=0 // pred_check
    _
  $region59: #{gnn_policy_forward.1} parent=0 // pred_check_branch
    %125 = sbr.rel (0) target = $region61
  $region60: #{gnn_policy_forward.1} parent=0 // pred_region
    _
  $region61: #{gnn_policy_forward.1} parent=0 // pred_fallthru
    _
  // Predicated region
  $region62: #{gnn_policy_forward.1} parent=0 // pred_check
    _
  $region63: #{gnn_policy_forward.1} parent=0 // pred_check_branch
    %127 = sbr.rel (0) target = $region65
  $region64: #{gnn_policy_forward.1} parent=0 // pred_region
    _
  $region65: #{gnn_policy_forward.1} parent=0 // pred_fallthru
    _
  // Predicated region
  $region66: #{gnn_policy_forward.1} parent=0 // pred_check
    _
  $region67: #{gnn_policy_forward.1} parent=0 // pred_check_branch
    %129 = sbr.rel (0) target = $region69
  $region68: #{gnn_policy_forward.1} parent=0 // pred_region
    _
  $region69: #{gnn_policy_forward.1} parent=0 // pred_fallthru
    _
  // Predicated region
  $region70: #{gnn_policy_forward.1} parent=0 // pred_check
    _
  $region71: #{gnn_policy_forward.1} parent=0 // pred_check_branch
    %131 = sbr.rel (0) target = $region73
  $region72: #{gnn_policy_forward.1} parent=0 // pred_region
    _
  $region73: #{gnn_policy_forward.1} parent=0 // pred_fallthru
    _
  // Predicated region
  $region74: #{gnn_policy_forward.1} parent=0 // pred_check
    _
  $region75: #{gnn_policy_forward.1} parent=0 // pred_check_branch
    %133 = sbr.rel (0) target = $region77
  $region76: #{gnn_policy_forward.1} parent=0 // pred_region
    _
  $region77: #{gnn_policy_forward.1} parent=0 // pred_fallthru
    _
  // Predicated region
  $region78: #{gnn_policy_forward.1} parent=0 // pred_check
    _
  $region79: #{gnn_policy_forward.1} parent=0 // pred_check_branch
    %135 = sbr.rel (0) target = $region81
  $region80: #{gnn_policy_forward.1} parent=0 // pred_region
    _
  $region81: #{gnn_policy_forward.1} parent=0 // pred_fallthru
    _
  // Predicated region
  $region82: #{gnn_policy_forward.1} parent=0 // pred_check
    _
  $region83: #{gnn_policy_forward.1} parent=0 // pred_check_branch
    %137 = sbr.rel (0) target = $region85
  $region84: #{gnn_policy_forward.1} parent=0 // pred_region
    _
  $region85: #{gnn_policy_forward.1} parent=0 // pred_fallthru
    _
  // Predicated region
  $region86: #{gnn_policy_forward.1} parent=0 // pred_check
    _
  $region87: #{gnn_policy_forward.1} parent=0 // pred_check_branch
    %139 = sbr.rel (0) target = $region89
  $region88: #{gnn_policy_forward.1} parent=0 // pred_region
    _
  $region89: #{gnn_policy_forward.1} parent=0 // pred_fallthru
    _
  // Predicated region
  $region90: #{gnn_policy_forward.1} parent=0 // pred_check
    _
  $region91: #{gnn_policy_forward.1} parent=0 // pred_check_branch
    %141 = sbr.rel (0) target = $region93
  $region92: #{gnn_policy_forward.1} parent=0 // pred_region
    _
  $region93: #{gnn_policy_forward.1} parent=0 // pred_fallthru
    _
  // Predicated region
  $region94: #{gnn_policy_forward.1} parent=0 // pred_check
    _
  $region95: #{gnn_policy_forward.1} parent=0 // pred_check_branch
    %143 = sbr.rel (0) target = $region97
  $region96: #{gnn_policy_forward.1} parent=0 // pred_region
    _
  $region97: #{gnn_policy_forward.1} parent=0 // pred_fallthru
    _
  // Predicated region
  $region98: #{gnn_policy_forward.1} parent=0 // pred_check
    _
  $region99: #{gnn_policy_forward.1} parent=0 // pred_check_branch
    %145 = sbr.rel (0) target = $region101
  $region100: #{gnn_policy_forward.1} parent=0 // pred_region
    _
  $region101: #{gnn_policy_forward.1} parent=0 // pred_fallthru
    _
  // Predicated region
  $region102: #{gnn_policy_forward.1} parent=0 // pred_check
    _
  $region103: #{gnn_policy_forward.1} parent=0 // pred_check_branch
    %147 = sbr.rel (0) target = $region105
  $region104: #{gnn_policy_forward.1} parent=0 // pred_region
    _
  $region105: #{gnn_policy_forward.1} parent=0 // pred_fallthru
    _
  // Predicated region
  $region106: #{gnn_policy_forward.1} parent=0 // pred_check
    _
  $region107: #{gnn_policy_forward.1} parent=0 // pred_check_branch
    %149 = sbr.rel (0) target = $region109
  $region108: #{gnn_policy_forward.1} parent=0 // pred_region
    _
  $region109: #{gnn_policy_forward.1} parent=0 // pred_fallthru
    _
  // Predicated region
  $region110: #{gnn_policy_forward.1} parent=0 // pred_check
    _
  $region111: #{gnn_policy_forward.1} parent=0 // pred_check_branch
    %151 = sbr.rel (0) target = $region113
  $region112: #{gnn_policy_forward.1} parent=0 // pred_region
    _
  $region113: #{gnn_policy_forward.1} parent=0 // pred_fallthru
    _
  // Predicated region
  $region114: #{gnn_policy_forward.1} parent=0 // pred_check
    _
  $region115: #{gnn_policy_forward.1} parent=0 // pred_check_branch
    %153 = sbr.rel (0) target = $region117
  $region116: #{gnn_policy_forward.1} parent=0 // pred_region
    _
  $region117: #{gnn_policy_forward.1} parent=0 // pred_fallthru
    _
  // Predicated region
  $region118: #{gnn_policy_forward.1} parent=0 // pred_check
    _
  $region119: #{gnn_policy_forward.1} parent=0 // pred_check_branch
    %155 = sbr.rel (0) target = $region121
  $region120: #{gnn_policy_forward.1} parent=0 // pred_region
    _
  $region121: #{gnn_policy_forward.1} parent=0 // pred_fallthru
    _
  // Predicated region
  $region122: #{gnn_policy_forward.1} parent=0 // pred_check
    _
  $region123: #{gnn_policy_forward.1} parent=0 // pred_check_branch
    %157 = sbr.rel (0) target = $region125
  $region124: #{gnn_policy_forward.1} parent=0 // pred_region
    _
  $region125: #{gnn_policy_forward.1} parent=0 // pred_fallthru
    _
  // Predicated region
  $region126: #{gnn_policy_forward.1} parent=0 // pred_check
    _
  $region127: #{gnn_policy_forward.1} parent=0 // pred_check_branch
    %159 = sbr.rel (0) target = $region129
  $region128: #{gnn_policy_forward.1} parent=0 // pred_region
    _
  $region129: #{gnn_policy_forward.1} parent=0 // pred_fallthru
    _
  // Predicated region
  $region130: #{gnn_policy_forward.1} parent=0 // pred_check
    _
  $region131: #{gnn_policy_forward.1} parent=0 // pred_check_branch
    %161 = sbr.rel (0) target = $region133
  $region132: #{gnn_policy_forward.1} parent=0 // pred_region
    _
  $region133: #{gnn_policy_forward.1} parent=0 // pred_fallthru
    _
  // Predicated region
  $region134: #{gnn_policy_forward.1} parent=0 // pred_check
    _
  $region135: #{gnn_policy_forward.1} parent=0 // pred_check_branch
    %163 = sbr.rel (0) target = $region137
  $region136: #{gnn_policy_forward.1} parent=0 // pred_region
    _
  $region137: #{gnn_policy_forward.1} parent=0 // pred_fallthru
    _
  // Predicated region
  $region138: #{gnn_policy_forward.1} parent=0 // pred_check
    _
  $region139: #{gnn_policy_forward.1} parent=0 // pred_check_branch
    %165 = sbr.rel (0) target = $region141
  $region140: #{gnn_policy_forward.1} parent=0 // pred_region
    _
  $region141: #{gnn_policy_forward.1} parent=0 // pred_fallthru
    _
  // Predicated region
  $region142: #{gnn_policy_forward.1} parent=0 // pred_check
    _
  $region143: #{gnn_policy_forward.1} parent=0 // pred_check_branch
    %167 = sbr.rel (0) target = $region145
  $region144: #{gnn_policy_forward.1} parent=0 // pred_region
    _
  $region145: #{gnn_policy_forward.1} parent=0 // pred_fallthru
    _
  // Predicated region
  $region146: #{gnn_policy_forward.1} parent=0 // pred_check
    _
  $region147: #{gnn_policy_forward.1} parent=0 // pred_check_branch
    %169 = sbr.rel (0) target = $region149
  $region148: #{gnn_policy_forward.1} parent=0 // pred_region
    _
  $region149: #{gnn_policy_forward.1} parent=0 // pred_fallthru
    _
  // Predicated region
  $region150: #{gnn_policy_forward.1} parent=0 // pred_check
    _
  $region151: #{gnn_policy_forward.1} parent=0 // pred_check_branch
    %171 = sbr.rel (0) target = $region153
  $region152: #{gnn_policy_forward.1} parent=0 // pred_region
    _
  $region153: #{gnn_policy_forward.1} parent=0 // pred_fallthru
    _
  // Predicated region
  $region154: #{gnn_policy_forward.1} parent=0 // pred_check
    _
  $region155: #{gnn_policy_forward.1} parent=0 // pred_check_branch
    %173 = sbr.rel (0) target = $region157
  $region156: #{gnn_policy_forward.1} parent=0 // pred_region
    _
  $region157: #{gnn_policy_forward.1} parent=0 // pred_fallthru
    _
  // Predicated region
  $region158: #{gnn_policy_forward.1} parent=0 // pred_check
    _
  $region159: #{gnn_policy_forward.1} parent=0 // pred_check_branch
    %175 = sbr.rel (0) target = $region161
  $region160: #{gnn_policy_forward.1} parent=0 // pred_region
    _
  $region161: #{gnn_policy_forward.1} parent=0 // pred_fallthru
    _
  // Predicated region
  $region162: #{gnn_policy_forward.1} parent=0 // pred_check
    _
  $region163: #{gnn_policy_forward.1} parent=0 // pred_check_branch
    %177 = sbr.rel (0) target = $region165
  $region164: #{gnn_policy_forward.1} parent=0 // pred_region
    _
  $region165: #{gnn_policy_forward.1} parent=0 // pred_fallthru
    _
  // Predicated region
  $region166: #{gnn_policy_forward.1} parent=0 // pred_check
    _
  $region167: #{gnn_policy_forward.1} parent=0 // pred_check_branch
    %179 = sbr.rel (0) target = $region169
  $region168: #{gnn_policy_forward.1} parent=0 // pred_region
    _
  $region169: #{gnn_policy_forward.1} parent=0 // pred_fallthru
    _
  // Predicated region
  $region170: #{gnn_policy_forward.1} parent=0 // pred_check
    _
  $region171: #{gnn_policy_forward.1} parent=0 // pred_check_branch
    %181 = sbr.rel (0) target = $region173
  $region172: #{gnn_policy_forward.1} parent=0 // pred_region
    _
  $region173: #{gnn_policy_forward.1} parent=0 // pred_fallthru
    _
  // Predicated region
  $region174: #{gnn_policy_forward.1} parent=0 // pred_check
    _
  $region175: #{gnn_policy_forward.1} parent=0 // pred_check_branch
    %183 = sbr.rel (0) target = $region177
  $region176: #{gnn_policy_forward.1} parent=0 // pred_region
    _
  $region177: #{gnn_policy_forward.1} parent=0 // pred_fallthru
    _
  // Predicated region
  $region178: #{gnn_policy_forward.1} parent=0 // pred_check
    _
  $region179: #{gnn_policy_forward.1} parent=0 // pred_check_branch
    %185 = sbr.rel (0) target = $region181
  $region180: #{gnn_policy_forward.1} parent=0 // pred_region
    _
  $region181: #{gnn_policy_forward.1} parent=0 // pred_fallthru
    _
  %v187 = vld [vmem:[%s1] sm:$0xff]
  %v188 = vld [vmem:[%s1 + $0x8] sm:$0xff]
  %v189 = vld [vmem:[%s1 + $0x10] sm:$0xff]
  %v190 = vld [vmem:[%s1 + $0x18] sm:$0xff]
  %v191 = vld [vmem:[%s1 + $0x20] sm:$0xff]
  %v192 = vld [vmem:[%s1 + $0x28] sm:$0xff]
  %v193 = vld [vmem:[%s1 + $0x30] sm:$0xff]
  %v194 = vld [vmem:[%s1 + $0x38] sm:$0xff]
  %v195 = vld [vmem:[%s1 + $0x40] sm:$0xff]
  %v196 = vld [vmem:[%s1 + $0x48] sm:$0xff]
  %v197 = vld [vmem:[%s1 + $0x50] sm:$0xff]
  %v198 = vld [vmem:[%s1 + $0x58] sm:$0xff]
  %v199 = vld [vmem:[%s1 + $0x60] sm:$0xff]
  %v200 = vld [vmem:[%s1 + $0x68] sm:$0xff]
  %v201 = vld [vmem:[%s1 + $0x70] sm:$0xff]
  %v202 = vld [vmem:[%s1 + $0x78] sm:$0xff]
  %v203 = vld [vmem:[%s3] sm:$0xff]
  %v204 = vld [vmem:[%s3 + $0x8] sm:$0xff]
  %v205 = vld [vmem:[%s3 + $0x10] sm:$0xff]
  %v206 = vld [vmem:[%s3 + $0x18] sm:$0xff]
  %v207 = vld [vmem:[%s3 + $0x20] sm:$0xff]
  %v208 = vld [vmem:[%s3 + $0x28] sm:$0xff]
  %v209 = vld [vmem:[%s3 + $0x30] sm:$0xff]
  %v210 = vld [vmem:[%s3 + $0x38] sm:$0xff]
  %v211 = vld [vmem:[%s3 + $0x40] sm:$0xff]
  %v212 = vld [vmem:[%s3 + $0x48] sm:$0xff]
  %v213 = vld [vmem:[%s3 + $0x50] sm:$0xff]
  %v214 = vld [vmem:[%s3 + $0x58] sm:$0xff]
  %v215 = vld [vmem:[%s3 + $0x60] sm:$0xff]
  %v216 = vld [vmem:[%s3 + $0x68] sm:$0xff]
  %v217 = vld [vmem:[%s3 + $0x70] sm:$0xff]
  %v218 = vld [vmem:[%s3 + $0x78] sm:$0xff]
  %v219 = vld [vmem:[%s5] sm:$0xff]
  %v220 = vld [vmem:[%s5 + $0x8] sm:$0xff]
  %v221 = vld [vmem:[%s5 + $0x10] sm:$0xff]
  %v222 = vld [vmem:[%s5 + $0x18] sm:$0xff]
  %v223 = vld [vmem:[%s7] sm:$0xff]
  %v224 = vld [vmem:[%s7 + $0x8] sm:$0xff]
  %v225 = vld [vmem:[%s7 + $0x10] sm:$0xff]
  %v226 = vld [vmem:[%s7 + $0x18] sm:$0xff]
  %v227 = vld [vmem:[%s9] sm:$0x1]
  %v228 = vld [vmem:[%s11] sm:$0x1]
  %v229 = vld [vmem:[%s13] sm:$0x7]
  %v230 = vld [vmem:[%s15] sm:$0x1]
  %v231 = vld [vmem:[%s17] sm:$0xf]
  %v232 = vld [vmem:[%s17 + $0x4] sm:$0xf]
  %v233 = vld [vmem:[%s17 + $0x8] sm:$0xf]
  %v234 = vld [vmem:[%s17 + $0xc] sm:$0xf]
  %v235 = vld [vmem:[%s17 + $0x10] sm:$0xf]
  %v236 = vld [vmem:[%s17 + $0x14] sm:$0xf]
  %v237 = vld [vmem:[%s17 + $0x18] sm:$0xf]
  %v238 = vld [vmem:[%s17 + $0x1c] sm:$0xf]
  %v239 = vld [vmem:[%s19] sm:$0x1]
  %v240 = vld [vmem:[%s21] sm:$0x1]
  %v241 = vld [vmem:[%s23] sm:$0x1]
  %v242 = vld [vmem:[%s25] sm:$0xf]
  %v243 = vld [vmem:[%s25 + $0x4] sm:$0xf]
  %v244 = vld [vmem:[%s25 + $0x8] sm:$0x3]
  %v245 = vld [vmem:[%s27] sm:$0x1]
  %v246 = vld [vmem:[%s29] sm:$0xf]
  %v247 = vld [vmem:[%s29 + $0x4] sm:$0xf]
  %v248 = vld [vmem:[%s29 + $0x8] sm:$0xf]
  %v249 = vld [vmem:[%s29 + $0xc] sm:$0xf]
  %v250 = vld [vmem:[%s29 + $0x10] sm:$0xf]
  %v251 = vld [vmem:[%s29 + $0x14] sm:$0xf]
  %v252 = vld [vmem:[%s29 + $0x18] sm:$0xf]
  %v253 = vld [vmem:[%s29 + $0x1c] sm:$0xf]
  %v254 = vld [vmem:[%s31] sm:$0x1]
  %v255 = vld [vmem:[%s33] sm:$0xf]
  %v256 = vld [vmem:[%s33 + $0x4] sm:$0xf]
  %v257 = vld [vmem:[%s33 + $0x8] sm:$0xf]
  %v258 = vld [vmem:[%s33 + $0xc] sm:$0xf]
  %v259 = vld [vmem:[%s33 + $0x10] sm:$0xf]
  %v260 = vld [vmem:[%s33 + $0x14] sm:$0xf]
  %v261 = vld [vmem:[%s33 + $0x18] sm:$0xf]
  %v262 = vld [vmem:[%s33 + $0x1c] sm:$0xf]
  %v263 = vld [vmem:[%s35] sm:$0x1]
  %v264 = vld [vmem:[%s37] sm:$0xf]
  %v265 = vld [vmem:[%s37 + $0x4] sm:$0xf]
  %v266 = vld [vmem:[%s37 + $0x8] sm:$0xf]
  %v267 = vld [vmem:[%s37 + $0xc] sm:$0xf]
  %v268 = vld [vmem:[%s37 + $0x10] sm:$0xf]
  %v269 = vld [vmem:[%s37 + $0x14] sm:$0xf]
  %v270 = vld [vmem:[%s37 + $0x18] sm:$0xf]
  %v271 = vld [vmem:[%s37 + $0x1c] sm:$0xf]
  %v272 = vld [vmem:[%s39] sm:$0x1]
  %v273 = vld [vmem:[%s41] sm:$0x1]
  %v274 = vld [vmem:[%s43] sm:$0xf]
  %v275 = vld [vmem:[%s43 + $0x4] sm:$0xf]
  %v276 = vld [vmem:[%s43 + $0x8] sm:$0xf]
  %v277 = vld [vmem:[%s43 + $0xc] sm:$0xf]
  %v278 = vld [vmem:[%s43 + $0x10] sm:$0xf]
  %v279 = vld [vmem:[%s43 + $0x14] sm:$0xf]
  %v280 = vld [vmem:[%s43 + $0x18] sm:$0xf]
  %v281 = vld [vmem:[%s43 + $0x1c] sm:$0xf]
  %v282 = vld [vmem:[%s45] sm:$0x1]
  %v283 = vld [vmem:[%s47] sm:$0x1]
  %v284 = vld [vmem:[%s49] sm:$0x1]
  %v285 = vld [vmem:[%s51] sm:$0xf]
  %v286 = vld [vmem:[%s51 + $0x4] sm:$0xf]
  %v287 = vld [vmem:[%s51 + $0x8] sm:$0xf]
  %v288 = vld [vmem:[%s51 + $0xc] sm:$0xf]
  %v289 = vld [vmem:[%s51 + $0x10] sm:$0xf]
  %v290 = vld [vmem:[%s51 + $0x14] sm:$0xf]
  %v291 = vld [vmem:[%s51 + $0x18] sm:$0xf]
  %v292 = vld [vmem:[%s51 + $0x1c] sm:$0xf]
  %v293 = vld [vmem:[%s51 + $0x20] sm:$0xf]
  %v294 = vld [vmem:[%s51 + $0x24] sm:$0xf]
  %v295 = vld [vmem:[%s51 + $0x28] sm:$0xf]
  %v296 = vld [vmem:[%s51 + $0x2c] sm:$0xf]
  %v297 = vld [vmem:[%s51 + $0x30] sm:$0xf]
  %v298 = vld [vmem:[%s51 + $0x34] sm:$0xf]
  %v299 = vld [vmem:[%s51 + $0x38] sm:$0xf]
  %v300 = vld [vmem:[%s51 + $0x3c] sm:$0xf]
  %v301 = vld [vmem:[%s53] sm:$0x1]
  %v302 = vld [vmem:[%s55] sm:$0xf]
  %v303 = vld [vmem:[%s55 + $0x4] sm:$0xf]
  %v304 = vld [vmem:[%s55 + $0x8] sm:$0xf]
  %v305 = vld [vmem:[%s55 + $0xc] sm:$0xf]
  %v306 = vld [vmem:[%s55 + $0x10] sm:$0xf]
  %v307 = vld [vmem:[%s55 + $0x14] sm:$0xf]
  %v308 = vld [vmem:[%s55 + $0x18] sm:$0xf]
  %v309 = vld [vmem:[%s55 + $0x1c] sm:$0xf]
  %v310 = vld [vmem:[%s57] sm:$0x1]
  %v311 = vld [vmem:[%s59] sm:$0xf]
  %v312 = vld [vmem:[%s59 + $0x4] sm:$0xf]
  %v313 = vld [vmem:[%s59 + $0x8] sm:$0xf]
  %v314 = vld [vmem:[%s59 + $0xc] sm:$0xf]
  %v315 = vld [vmem:[%s59 + $0x10] sm:$0xf]
  %v316 = vld [vmem:[%s59 + $0x14] sm:$0xf]
  %v317 = vld [vmem:[%s59 + $0x18] sm:$0xf]
  %v318 = vld [vmem:[%s59 + $0x1c] sm:$0xf]
  %v319 = vld [vmem:[%s61] sm:$0x1]
  %v320 = vld [vmem:[%s63] sm:$0xf]
  %v321 = vld [vmem:[%s63 + $0x4] sm:$0xf]
  %v322 = vld [vmem:[%s63 + $0x8] sm:$0xf]
  %v323 = vld [vmem:[%s63 + $0xc] sm:$0xf]
  %v324 = vld [vmem:[%s63 + $0x10] sm:$0xf]
  %v325 = vld [vmem:[%s63 + $0x14] sm:$0xf]
  %v326 = vld [vmem:[%s63 + $0x18] sm:$0xf]
  %v327 = vld [vmem:[%s63 + $0x1c] sm:$0xf]
  %v328 = vld [vmem:[%s65] sm:$0x1]
  %v329 = vld [vmem:[%s67] sm:$0x1]
  %v330 = vld [vmem:[%s69] sm:$0xf]
  %v331 = vld [vmem:[%s69 + $0x4] sm:$0xf]
  %v332 = vld [vmem:[%s69 + $0x8] sm:$0xf]
  %v333 = vld [vmem:[%s69 + $0xc] sm:$0xf]
  %v334 = vld [vmem:[%s69 + $0x10] sm:$0xf]
  %v335 = vld [vmem:[%s69 + $0x14] sm:$0xf]
  %v336 = vld [vmem:[%s69 + $0x18] sm:$0xf]
  %v337 = vld [vmem:[%s69 + $0x1c] sm:$0xf]
  %v338 = vld [vmem:[%s71] sm:$0x1]
  %v339 = vld [vmem:[%s73] sm:$0x1]
  %v340 = vld [vmem:[%s75] sm:$0x1]
  %v341 = vld [vmem:[%s77] sm:$0xf]
  %v342 = vld [vmem:[%s77 + $0x4] sm:$0xf]
  %v343 = vld [vmem:[%s77 + $0x8] sm:$0xf]
  %v344 = vld [vmem:[%s77 + $0xc] sm:$0xf]
  %v345 = vld [vmem:[%s77 + $0x10] sm:$0xf]
  %v346 = vld [vmem:[%s77 + $0x14] sm:$0xf]
  %v347 = vld [vmem:[%s77 + $0x18] sm:$0xf]
  %v348 = vld [vmem:[%s77 + $0x1c] sm:$0xf]
  %v349 = vld [vmem:[%s77 + $0x20] sm:$0xf]
  %v350 = vld [vmem:[%s77 + $0x24] sm:$0xf]
  %v351 = vld [vmem:[%s77 + $0x28] sm:$0xf]
  %v352 = vld [vmem:[%s77 + $0x2c] sm:$0xf]
  %v353 = vld [vmem:[%s77 + $0x30] sm:$0xf]
  %v354 = vld [vmem:[%s77 + $0x34] sm:$0xf]
  %v355 = vld [vmem:[%s77 + $0x38] sm:$0xf]
  %v356 = vld [vmem:[%s77 + $0x3c] sm:$0xf]
  %v357 = vld [vmem:[%s79] sm:$0x1]
  %v358 = vld [vmem:[%s81] sm:$0xf]
  %v359 = vld [vmem:[%s81 + $0x4] sm:$0xf]
  %v360 = vld [vmem:[%s81 + $0x8] sm:$0xf]
  %v361 = vld [vmem:[%s81 + $0xc] sm:$0xf]
  %v362 = vld [vmem:[%s81 + $0x10] sm:$0xf]
  %v363 = vld [vmem:[%s81 + $0x14] sm:$0xf]
  %v364 = vld [vmem:[%s81 + $0x18] sm:$0xf]
  %v365 = vld [vmem:[%s81 + $0x1c] sm:$0xf]
  %v366 = vld [vmem:[%s83] sm:$0x1]
  %v367 = vld [vmem:[%s85] sm:$0xf]
  %v368 = vld [vmem:[%s85 + $0x4] sm:$0xf]
  %v369 = vld [vmem:[%s85 + $0x8] sm:$0xf]
  %v370 = vld [vmem:[%s85 + $0xc] sm:$0xf]
  %v371 = vld [vmem:[%s85 + $0x10] sm:$0xf]
  %v372 = vld [vmem:[%s85 + $0x14] sm:$0xf]
  %v373 = vld [vmem:[%s85 + $0x18] sm:$0xf]
  %v374 = vld [vmem:[%s85 + $0x1c] sm:$0xf]
  %v375 = vld [vmem:[%s87] sm:$0x1]
  %v376 = vld [vmem:[%s89] sm:$0x1]
  %vm377 = vcmask 39936
  %v378 = vsel %vm377, %v187, 0.0
  %379 = vadd.xlane.f32.xlu0 %v378
  %v380 = vpop.xlane.xlu0 %379
  %v381 = vsel %vm377, %v188, 0.0
  %382 = vadd.xlane.f32.xlu0 %v381
  %v383 = vpop.xlane.xlu0 %382
  %v384 = vsel %vm377, %v189, 0.0
  %385 = vadd.xlane.f32.xlu0 %v384
  %v386 = vpop.xlane.xlu0 %385
  %v387 = vsel %vm377, %v190, 0.0
  %388 = vadd.xlane.f32.xlu0 %v387
  %v389 = vpop.xlane.xlu0 %388
  %v390 = vsel %vm377, %v191, 0.0
  %391 = vadd.xlane.f32.xlu0 %v390
  %v392 = vpop.xlane.xlu0 %391
  %v393 = vsel %vm377, %v192, 0.0
  %394 = vadd.xlane.f32.xlu0 %v393
  %v395 = vpop.xlane.xlu0 %394
  %v396 = vsel %vm377, %v193, 0.0
  %397 = vadd.xlane.f32.xlu0 %v396
  %v398 = vpop.xlane.xlu0 %397
  %v399 = vsel %vm377, %v194, 0.0
  %400 = vadd.xlane.f32.xlu0 %v399
  %v401 = vpop.xlane.xlu0 %400
  %v402 = vsel %vm377, %v195, 0.0
  %403 = vadd.xlane.f32.xlu0 %v402
  %v404 = vpop.xlane.xlu0 %403
  %v405 = vsel %vm377, %v196, 0.0
  %406 = vadd.xlane.f32.xlu0 %v405
  %v407 = vpop.xlane.xlu0 %406
  %v408 = vsel %vm377, %v197, 0.0
  %409 = vadd.xlane.f32.xlu0 %v408
  %v410 = vpop.xlane.xlu0 %409
  %v411 = vsel %vm377, %v198, 0.0
  %412 = vadd.xlane.f32.xlu0 %v411
  %v413 = vpop.xlane.xlu0 %412
  %v414 = vsel %vm377, %v199, 0.0
  %415 = vadd.xlane.f32.xlu0 %v414
  %v416 = vpop.xlane.xlu0 %415
  %v417 = vsel %vm377, %v200, 0.0
  %418 = vadd.xlane.f32.xlu0 %v417
  %v419 = vpop.xlane.xlu0 %418
  %v420 = vsel %vm377, %v201, 0.0
  %421 = vadd.xlane.f32.xlu0 %v420
  %v422 = vpop.xlane.xlu0 %421
  %v423 = vsel %vm377, %v202, 0.0
  %424 = vadd.xlane.f32.xlu0 %v423
  %v425 = vpop.xlane.xlu0 %424
  %v426 = vrcp.pop 5.0
  %v427 = vmul.f32 %v380, %v426
  %v428 = vmul.f32 %v383, %v426
  %v429 = vmul.f32 %v386, %v426
  %v430 = vmul.f32 %v389, %v426
  %v431 = vmul.f32 %v392, %v426
  %v432 = vmul.f32 %v395, %v426
  %v433 = vmul.f32 %v398, %v426
  %v434 = vmul.f32 %v401, %v426
  %v435 = vmul.f32 %v404, %v426
  %v436 = vmul.f32 %v407, %v426
  %v437 = vmul.f32 %v410, %v426
  %v438 = vmul.f32 %v413, %v426
  %v439 = vmul.f32 %v416, %v426
  %v440 = vmul.f32 %v419, %v426
  %v441 = vmul.f32 %v422, %v426
  %v442 = vmul.f32 %v425, %v426
  %v443 = vsub.f32 %v187, %v427
  %v444 = vsub.f32 %v188, %v428
  %v445 = vsub.f32 %v189, %v429
  %v446 = vsub.f32 %v190, %v430
  %v447 = vsub.f32 %v191, %v431
  %v448 = vsub.f32 %v192, %v432
  %v449 = vsub.f32 %v193, %v433
  %v450 = vsub.f32 %v194, %v434
  %v451 = vsub.f32 %v195, %v435
  %v452 = vsub.f32 %v196, %v436
  %v453 = vsub.f32 %v197, %v437
  %v454 = vsub.f32 %v198, %v438
  %v455 = vsub.f32 %v199, %v439
  %v456 = vsub.f32 %v200, %v440
  %v457 = vsub.f32 %v201, %v441
  %v458 = vsub.f32 %v202, %v442
  %v459 = vmul.f32 %v443, %v443
  %v460 = vmul.f32 %v444, %v444
  %v461 = vmul.f32 %v445, %v445
  %v462 = vmul.f32 %v446, %v446
  %v463 = vmul.f32 %v447, %v447
  %v464 = vmul.f32 %v448, %v448
  %v465 = vmul.f32 %v449, %v449
  %v466 = vmul.f32 %v450, %v450
  %v467 = vmul.f32 %v451, %v451
  %v468 = vmul.f32 %v452, %v452
  %v469 = vmul.f32 %v453, %v453
  %v470 = vmul.f32 %v454, %v454
  %v471 = vmul.f32 %v455, %v455
  %v472 = vmul.f32 %v456, %v456
  %v473 = vmul.f32 %v457, %v457
  %v474 = vmul.f32 %v458, %v458
  %v475 = vsel %vm377, %v459, 0.0
  %476 = vadd.xlane.f32.xlu0 %v475
  %v477 = vpop.xlane.xlu0 %476
  %v478 = vsel %vm377, %v460, 0.0
  %479 = vadd.xlane.f32.xlu0 %v478
  %v480 = vpop.xlane.xlu0 %479
  %v481 = vsel %vm377, %v461, 0.0
  %482 = vadd.xlane.f32.xlu0 %v481
  %v483 = vpop.xlane.xlu0 %482
  %v484 = vsel %vm377, %v462, 0.0
  %485 = vadd.xlane.f32.xlu0 %v484
  %v486 = vpop.xlane.xlu0 %485
  %v487 = vsel %vm377, %v463, 0.0
  %488 = vadd.xlane.f32.xlu0 %v487
  %v489 = vpop.xlane.xlu0 %488
  %v490 = vsel %vm377, %v464, 0.0
  %491 = vadd.xlane.f32.xlu0 %v490
  %v492 = vpop.xlane.xlu0 %491
  %v493 = vsel %vm377, %v465, 0.0
  %494 = vadd.xlane.f32.xlu0 %v493
  %v495 = vpop.xlane.xlu0 %494
  %v496 = vsel %vm377, %v466, 0.0
  %497 = vadd.xlane.f32.xlu0 %v496
  %v498 = vpop.xlane.xlu0 %497
  %v499 = vsel %vm377, %v467, 0.0
  %500 = vadd.xlane.f32.xlu0 %v499
  %v501 = vpop.xlane.xlu0 %500
  %v502 = vsel %vm377, %v468, 0.0
  %503 = vadd.xlane.f32.xlu0 %v502
  %v504 = vpop.xlane.xlu0 %503
  %v505 = vsel %vm377, %v469, 0.0
  %506 = vadd.xlane.f32.xlu0 %v505
  %v507 = vpop.xlane.xlu0 %506
  %v508 = vsel %vm377, %v470, 0.0
  %509 = vadd.xlane.f32.xlu0 %v508
  %v510 = vpop.xlane.xlu0 %509
  %v511 = vsel %vm377, %v471, 0.0
  %512 = vadd.xlane.f32.xlu0 %v511
  %v513 = vpop.xlane.xlu0 %512
  %v514 = vsel %vm377, %v472, 0.0
  %515 = vadd.xlane.f32.xlu0 %v514
  %v516 = vpop.xlane.xlu0 %515
  %v517 = vsel %vm377, %v473, 0.0
  %518 = vadd.xlane.f32.xlu0 %v517
  %v519 = vpop.xlane.xlu0 %518
  %v520 = vsel %vm377, %v474, 0.0
  %521 = vadd.xlane.f32.xlu0 %v520
  %v522 = vpop.xlane.xlu0 %521
  %v523 = vmul.f32 %v477, %v426
  %v524 = vmul.f32 %v480, %v426
  %v525 = vmul.f32 %v483, %v426
  %v526 = vmul.f32 %v486, %v426
  %v527 = vmul.f32 %v489, %v426
  %v528 = vmul.f32 %v492, %v426
  %v529 = vmul.f32 %v495, %v426
  %v530 = vmul.f32 %v498, %v426
  %v531 = vmul.f32 %v501, %v426
  %v532 = vmul.f32 %v504, %v426
  %v533 = vmul.f32 %v507, %v426
  %v534 = vmul.f32 %v510, %v426
  %v535 = vmul.f32 %v513, %v426
  %v536 = vmul.f32 %v516, %v426
  %v537 = vmul.f32 %v519, %v426
  %v538 = vmul.f32 %v522, %v426
  %v539 = vadd.f32 %v523, 1e-05
  %v540 = vadd.f32 %v524, 1e-05
  %v541 = vadd.f32 %v525, 1e-05
  %v542 = vadd.f32 %v526, 1e-05
  %v543 = vadd.f32 %v527, 1e-05
  %v544 = vadd.f32 %v528, 1e-05
  %v545 = vadd.f32 %v529, 1e-05
  %v546 = vadd.f32 %v530, 1e-05
  %v547 = vadd.f32 %v531, 1e-05
  %v548 = vadd.f32 %v532, 1e-05
  %v549 = vadd.f32 %v533, 1e-05
  %v550 = vadd.f32 %v534, 1e-05
  %v551 = vadd.f32 %v535, 1e-05
  %v552 = vadd.f32 %v536, 1e-05
  %v553 = vadd.f32 %v537, 1e-05
  %v554 = vadd.f32 %v538, 1e-05
  %v555 = vrsqrt.pop %v539
  %v556 = vrsqrt.pop %v540
  %v557 = vrsqrt.pop %v541
  %v558 = vrsqrt.pop %v542
  %v559 = vrsqrt.pop %v543
  %v560 = vrsqrt.pop %v544
  %v561 = vrsqrt.pop %v545
  %v562 = vrsqrt.pop %v546
  %v563 = vrsqrt.pop %v547
  %v564 = vrsqrt.pop %v548
  %v565 = vrsqrt.pop %v549
  %v566 = vrsqrt.pop %v550
  %v567 = vrsqrt.pop %v551
  %v568 = vrsqrt.pop %v552
  %v569 = vrsqrt.pop %v553
  %v570 = vrsqrt.pop %v554
  %v571 = vmul.f32 %v443, %v555
  %v572 = vmul.f32 %v444, %v556
  %v573 = vmul.f32 %v445, %v557
  %v574 = vmul.f32 %v446, %v558
  %v575 = vmul.f32 %v447, %v559
  %v576 = vmul.f32 %v448, %v560
  %v577 = vmul.f32 %v449, %v561
  %v578 = vmul.f32 %v450, %v562
  %v579 = vmul.f32 %v451, %v563
  %v580 = vmul.f32 %v452, %v564
  %v581 = vmul.f32 %v453, %v565
  %v582 = vmul.f32 %v454, %v566
  %v583 = vmul.f32 %v455, %v567
  %v584 = vmul.f32 %v456, %v568
  %v585 = vmul.f32 %v457, %v569
  %v586 = vmul.f32 %v458, %v570
  %v588 = vlaneseq
  %v589 = vshrl.u32 %v588, 7
  %v590 = vsub.s32 0, %v589
  %v591 = vrot.slane %v227, %v590
  %v593 = vmul.f32 %v571, %v591
  %v594 = vmul.f32 %v572, %v591
  %v595 = vmul.f32 %v573, %v591
  %v596 = vmul.f32 %v574, %v591
  %v597 = vmul.f32 %v575, %v591
  %v598 = vmul.f32 %v576, %v591
  %v599 = vmul.f32 %v577, %v591
  %v600 = vmul.f32 %v578, %v591
  %v601 = vmul.f32 %v579, %v591
  %v602 = vmul.f32 %v580, %v591
  %v603 = vmul.f32 %v581, %v591
  %v604 = vmul.f32 %v582, %v591
  %v605 = vmul.f32 %v583, %v591
  %v606 = vmul.f32 %v584, %v591
  %v607 = vmul.f32 %v585, %v591
  %v608 = vmul.f32 %v586, %v591
  %v610 = vlaneseq
  %v611 = vshrl.u32 %v610, 7
  %v612 = vsub.s32 0, %v611
  %v613 = vrot.slane %v228, %v612
  %v615 = vadd.f32 %v593, %v613
  %v616 = vadd.f32 %v594, %v613
  %v617 = vadd.f32 %v595, %v613
  %v618 = vadd.f32 %v596, %v613
  %v619 = vadd.f32 %v597, %v613
  %v620 = vadd.f32 %v598, %v613
  %v621 = vadd.f32 %v599, %v613
  %v622 = vadd.f32 %v600, %v613
  %v623 = vadd.f32 %v601, %v613
  %v624 = vadd.f32 %v602, %v613
  %v625 = vadd.f32 %v603, %v613
  %v626 = vadd.f32 %v604, %v613
  %v627 = vadd.f32 %v605, %v613
  %v628 = vadd.f32 %v606, %v613
  %v629 = vadd.f32 %v607, %v613
  %v630 = vadd.f32 %v608, %v613
  %v631 = vpack.c.bf16 %v616, %v615
  %v632 = vpack.c.bf16 %v618, %v617
  %v633 = vpack.c.bf16 %v620, %v619
  %v634 = vpack.c.bf16 %v622, %v621
  %v635 = vpack.c.bf16 %v624, %v623
  %v636 = vpack.c.bf16 %v626, %v625
  %v637 = vpack.c.bf16 %v628, %v627
  %v638 = vpack.c.bf16 %v630, %v629
  %v640 = vlaneseq
  %v641 = vshrl.u32 %v640, 7
  %v642 = vsub.s32 0, %v641
  %v643 = vrot.slane %v230, %v642
  %v646 = vsel %vm377, %v631, 0
  %v649 = vsel %vm377, %v632, 0
  %v652 = vsel %vm377, %v633, 0
  %v655 = vsel %vm377, %v634, 0
  %v658 = vsel %vm377, %v635, 0
  %v661 = vsel %vm377, %v636, 0
  %v664 = vsel %vm377, %v637, 0
  %v667 = vsel %vm377, %v638, 0
  %vm669 = vcmask 1041408
  %vm670 = vcmask 1042432
  %v671 = vsel %vm669, 4294967295, 65535
  %v672 = vsel %vm670, %v671, 0
  %v674 = vand.u32 %v229, %v672
  %676 = vmatprep.subr.bf16.mxu0 0
  %677 = vmatpush1.bf16.msra.mxu0 0
  %678 = vmatprep.subr.bf16.mxu0 0
  %679 = vmatpush1.bf16.msra.mxu0 0
  %680 = vmatprep.subr.bf16.mxu0 0
  %681 = vmatpush1.bf16.msra.mxu0 0
  %682 = vmatprep.subr.bf16.mxu0 0
  %683 = vmatpush1.bf16.msra.mxu0 0
  %684 = vmatprep.subr.bf16.mxu0 0
  %685 = vmatpush1.bf16.msra.mxu0 0
  %686 = vmatprep.subr.bf16.mxu0 0
  %687 = vmatpush1.bf16.msra.mxu0 0
  %688 = vmatprep.subr.bf16.mxu0 0
  %689 = vmatpush1.bf16.msra.mxu0 0
  %690 = vmatprep.subr.bf16.mxu0 0
  %691 = vmatpush1.bf16.msra.mxu0 %v674
  %692 = vmatprep.subr.bf16.mxu0 0
  %693 = vmatpush2.bf16.msra.mxu0 0
  %694 = vmatprep.subr.bf16.mxu0 0
  %695 = vmatpush2.bf16.msra.mxu0 0
  %696 = vmatprep.subr.bf16.mxu0 0
  %697 = vmatpush2.bf16.msra.mxu0 0
  %698 = vmatprep.subr.bf16.mxu0 0
  %699 = vmatpush2.bf16.msra.mxu0 0
  %700 = vmatprep.subr.bf16.mxu0 0
  %701 = vmatpush2.bf16.msra.mxu0 0
  %702 = vmatprep.subr.bf16.mxu0 0
  %703 = vmatpush2.bf16.msra.mxu0 0
  %704 = vmatprep.subr.bf16.mxu0 0
  %705 = vmatpush2.bf16.msra.mxu0 0
  %706 = vmatprep.subr.bf16.mxu0 0
  %707 = vmatpush2.bf16.msra.mxu0 0
  %708 = vmatprep.mubr.bf16.mxu0 0
  %709 = vmatmul.mubr.bf16.gmra.mxu0 %v646
  %v710 = vpop.f32.mrf.mxu0
  %v711 = vadd.f32 %v643, %v710
  %v712 = vpop.f32.mrf.mxu0
  %v713 = vpop.f32.mrf.mxu0
  %v714 = vadd.f32 %v643, %v713
  %v715 = vpop.f32.mrf.mxu0
  %716 = vmatprep.mubr.bf16.mxu0 0
  %717 = vmatmul.mubr.bf16.gmra.mxu0 %v649
  %v718 = vpop.f32.mrf.mxu0
  %v719 = vadd.f32 %v643, %v718
  %v720 = vpop.f32.mrf.mxu0
  %v721 = vpop.f32.mrf.mxu0
  %v722 = vadd.f32 %v643, %v721
  %v723 = vpop.f32.mrf.mxu0
  %724 = vmatprep.mubr.bf16.mxu0 0
  %725 = vmatmul.mubr.bf16.gmra.mxu0 %v652
  %v726 = vpop.f32.mrf.mxu0
  %v727 = vadd.f32 %v643, %v726
  %v728 = vpop.f32.mrf.mxu0
  %v729 = vpop.f32.mrf.mxu0
  %v730 = vadd.f32 %v643, %v729
  %v731 = vpop.f32.mrf.mxu0
  %732 = vmatprep.mubr.bf16.mxu0 0
  %733 = vmatmul.mubr.bf16.gmra.mxu0 %v655
  %v734 = vpop.f32.mrf.mxu0
  %v735 = vadd.f32 %v643, %v734
  %v736 = vpop.f32.mrf.mxu0
  %v737 = vpop.f32.mrf.mxu0
  %v738 = vadd.f32 %v643, %v737
  %v739 = vpop.f32.mrf.mxu0
  %740 = vmatprep.mubr.bf16.mxu0 0
  %741 = vmatmul.mubr.bf16.gmra.mxu0 %v658
  %v742 = vpop.f32.mrf.mxu0
  %v743 = vadd.f32 %v643, %v742
  %v744 = vpop.f32.mrf.mxu0
  %v745 = vpop.f32.mrf.mxu0
  %v746 = vadd.f32 %v643, %v745
  %v747 = vpop.f32.mrf.mxu0
  %748 = vmatprep.mubr.bf16.mxu0 0
  %749 = vmatmul.mubr.bf16.gmra.mxu0 %v661
  %v750 = vpop.f32.mrf.mxu0
  %v751 = vadd.f32 %v643, %v750
  %v752 = vpop.f32.mrf.mxu0
  %v753 = vpop.f32.mrf.mxu0
  %v754 = vadd.f32 %v643, %v753
  %v755 = vpop.f32.mrf.mxu0
  %756 = vmatprep.mubr.bf16.mxu0 0
  %757 = vmatmul.mubr.bf16.gmra.mxu0 %v664
  %v758 = vpop.f32.mrf.mxu0
  %v759 = vadd.f32 %v643, %v758
  %v760 = vpop.f32.mrf.mxu0
  %v761 = vpop.f32.mrf.mxu0
  %v762 = vadd.f32 %v643, %v761
  %v763 = vpop.f32.mrf.mxu0
  %764 = vmatprep.mubr.bf16.mxu0 0
  %765 = vmatmul.mubr.bf16.gmra.mxu0 %v667
  %v766 = vpop.f32.mrf.mxu0
  %v767 = vadd.f32 %v643, %v766
  %v768 = vpop.f32.mrf.mxu0
  %v769 = vpop.f32.mrf.mxu0
  %v770 = vadd.f32 %v643, %v769
  %v771 = vpop.f32.mrf.mxu0
  %772 = vdwg.mxu0
  %v773 = vmax.f32 %v711, 0.0
  %v774 = vmax.f32 %v714, 0.0
  %v775 = vmax.f32 %v719, 0.0
  %v776 = vmax.f32 %v722, 0.0
  %v777 = vmax.f32 %v727, 0.0
  %v778 = vmax.f32 %v730, 0.0
  %v779 = vmax.f32 %v735, 0.0
  %v780 = vmax.f32 %v738, 0.0
  %v781 = vmax.f32 %v743, 0.0
  %v782 = vmax.f32 %v746, 0.0
  %v783 = vmax.f32 %v751, 0.0
  %v784 = vmax.f32 %v754, 0.0
  %v785 = vmax.f32 %v759, 0.0
  %v786 = vmax.f32 %v762, 0.0
  %v787 = vmax.f32 %v767, 0.0
  %v788 = vmax.f32 %v770, 0.0
  %v789 = vpack.c.bf16 %v774, %v773
  %v790 = vpack.c.bf16 %v776, %v775
  %v791 = vpack.c.bf16 %v778, %v777
  %v792 = vpack.c.bf16 %v780, %v779
  %v793 = vpack.c.bf16 %v782, %v781
  %v794 = vpack.c.bf16 %v784, %v783
  %v795 = vpack.c.bf16 %v786, %v785
  %v796 = vpack.c.bf16 %v788, %v787
  %v798 = vlaneseq
  %v799 = vshrl.u32 %v798, 7
  %v800 = vsub.s32 0, %v799
  %v801 = vrot.slane %v239, %v800
  %v811 = vunpack.c.l.b16 %v231
  %v812 = vunpack.c.l.b16 %v232
  %v813 = vunpack.c.l.b16 %v233
  %v814 = vunpack.c.l.b16 %v234
  %v815 = vunpack.c.l.b16 %v235
  %v816 = vunpack.c.l.b16 %v236
  %v817 = vunpack.c.l.b16 %v237
  %v818 = vunpack.c.l.b16 %v238
  %v819 = vpack.c.b16 %v812, %v811
  %v820 = vpack.c.b16 %v814, %v813
  %v821 = vpack.c.b16 %v816, %v815
  %v822 = vpack.c.b16 %v818, %v817
  %vm827 = vcmask 523264
  %v829 = vsel %vm827, %v789, 0
  %v832 = vsel %vm827, %v790, 0
  %v835 = vsel %vm827, %v791, 0
  %v838 = vsel %vm827, %v792, 0
  %v841 = vsel %vm827, %v793, 0
  %v844 = vsel %vm827, %v794, 0
  %v847 = vsel %vm827, %v795, 0
  %v850 = vsel %vm827, %v796, 0
  %852 = vmatprep.subr.bf16.mxu0 0
  %853 = vmatpush1.bf16.msra.mxu0 0
  %854 = vmatprep.subr.bf16.mxu0 0
  %855 = vmatpush1.bf16.msra.mxu0 0
  %856 = vmatprep.subr.bf16.mxu0 0
  %857 = vmatpush1.bf16.msra.mxu0 0
  %858 = vmatprep.subr.bf16.mxu0 0
  %859 = vmatpush1.bf16.msra.mxu0 0
  %860 = vmatprep.subr.bf16.mxu0 0
  %861 = vmatpush1.bf16.msra.mxu0 %v822
  %862 = vmatprep.subr.bf16.mxu0 0
  %863 = vmatpush1.bf16.msra.mxu0 %v821
  %864 = vmatprep.subr.bf16.mxu0 0
  %865 = vmatpush1.bf16.msra.mxu0 %v820
  %866 = vmatprep.subr.bf16.mxu0 0
  %867 = vmatpush1.bf16.msra.mxu0 %v819
  %868 = vmatprep.subr.bf16.mxu0 0
  %869 = vmatpush2.bf16.msra.mxu0 0
  %870 = vmatprep.subr.bf16.mxu0 0
  %871 = vmatpush2.bf16.msra.mxu0 0
  %872 = vmatprep.subr.bf16.mxu0 0
  %873 = vmatpush2.bf16.msra.mxu0 0
  %874 = vmatprep.subr.bf16.mxu0 0
  %875 = vmatpush2.bf16.msra.mxu0 0
  %876 = vmatprep.subr.bf16.mxu0 0
  %877 = vmatpush2.bf16.msra.mxu0 0
  %878 = vmatprep.subr.bf16.mxu0 0
  %879 = vmatpush2.bf16.msra.mxu0 0
  %880 = vmatprep.subr.bf16.mxu0 0
  %881 = vmatpush2.bf16.msra.mxu0 0
  %882 = vmatprep.subr.bf16.mxu0 0
  %883 = vmatpush2.bf16.msra.mxu0 0
  %884 = vmatprep.mubr.bf16.mxu0 0
  %885 = vmatmul.mubr.bf16.gmra.mxu0 %v829
  %v886 = vpop.f32.mrf.mxu0
  %v887 = vadd.f32 %v801, %v886
  %v888 = vpop.f32.mrf.mxu0
  %v889 = vpop.f32.mrf.mxu0
  %v890 = vadd.f32 %v801, %v889
  %v891 = vpop.f32.mrf.mxu0
  %892 = vmatprep.mubr.bf16.mxu0 0
  %893 = vmatmul.mubr.bf16.gmra.mxu0 %v832
  %v894 = vpop.f32.mrf.mxu0
  %v895 = vadd.f32 %v801, %v894
  %v896 = vpop.f32.mrf.mxu0
  %v897 = vpop.f32.mrf.mxu0
  %v898 = vadd.f32 %v801, %v897
  %v899 = vpop.f32.mrf.mxu0
  %900 = vmatprep.mubr.bf16.mxu0 0
  %901 = vmatmul.mubr.bf16.gmra.mxu0 %v835
  %v902 = vpop.f32.mrf.mxu0
  %v903 = vadd.f32 %v801, %v902
  %v904 = vpop.f32.mrf.mxu0
  %v905 = vpop.f32.mrf.mxu0
  %v906 = vadd.f32 %v801, %v905
  %v907 = vpop.f32.mrf.mxu0
  %908 = vmatprep.mubr.bf16.mxu0 0
  %909 = vmatmul.mubr.bf16.gmra.mxu0 %v838
  %v910 = vpop.f32.mrf.mxu0
  %v911 = vadd.f32 %v801, %v910
  %v912 = vpop.f32.mrf.mxu0
  %v913 = vpop.f32.mrf.mxu0
  %v914 = vadd.f32 %v801, %v913
  %v915 = vpop.f32.mrf.mxu0
  %916 = vmatprep.mubr.bf16.mxu0 0
  %917 = vmatmul.mubr.bf16.gmra.mxu0 %v841
  %v918 = vpop.f32.mrf.mxu0
  %v919 = vadd.f32 %v801, %v918
  %v920 = vpop.f32.mrf.mxu0
  %v921 = vpop.f32.mrf.mxu0
  %v922 = vadd.f32 %v801, %v921
  %v923 = vpop.f32.mrf.mxu0
  %924 = vmatprep.mubr.bf16.mxu0 0
  %925 = vmatmul.mubr.bf16.gmra.mxu0 %v844
  %v926 = vpop.f32.mrf.mxu0
  %v927 = vadd.f32 %v801, %v926
  %v928 = vpop.f32.mrf.mxu0
  %v929 = vpop.f32.mrf.mxu0
  %v930 = vadd.f32 %v801, %v929
  %v931 = vpop.f32.mrf.mxu0
  %932 = vmatprep.mubr.bf16.mxu0 0
  %933 = vmatmul.mubr.bf16.gmra.mxu0 %v847
  %v934 = vpop.f32.mrf.mxu0
  %v935 = vadd.f32 %v801, %v934
  %v936 = vpop.f32.mrf.mxu0
  %v937 = vpop.f32.mrf.mxu0
  %v938 = vadd.f32 %v801, %v937
  %v939 = vpop.f32.mrf.mxu0
  %940 = vmatprep.mubr.bf16.mxu0 0
  %941 = vmatmul.mubr.bf16.gmra.mxu0 %v850
  %v942 = vpop.f32.mrf.mxu0
  %v943 = vadd.f32 %v801, %v942
  %v944 = vpop.f32.mrf.mxu0
  %v945 = vpop.f32.mrf.mxu0
  %v946 = vadd.f32 %v801, %v945
  %v947 = vpop.f32.mrf.mxu0
  %948 = vdwg.mxu0
  %v949 = vmax.f32 %v887, 0.0
  %v950 = vmax.f32 %v890, 0.0
  %v951 = vmax.f32 %v895, 0.0
  %v952 = vmax.f32 %v898, 0.0
  %v953 = vmax.f32 %v903, 0.0
  %v954 = vmax.f32 %v906, 0.0
  %v955 = vmax.f32 %v911, 0.0
  %v956 = vmax.f32 %v914, 0.0
  %v957 = vmax.f32 %v919, 0.0
  %v958 = vmax.f32 %v922, 0.0
  %v959 = vmax.f32 %v927, 0.0
  %v960 = vmax.f32 %v930, 0.0
  %v961 = vmax.f32 %v935, 0.0
  %v962 = vmax.f32 %v938, 0.0
  %v963 = vmax.f32 %v943, 0.0
  %v964 = vmax.f32 %v946, 0.0
  %vm965 = vcmask 154624
  %v966 = vsel %vm965, %v203, 0.0
  %967 = vadd.xlane.f32.xlu0 %v966
  %v968 = vpop.xlane.xlu0 %967
  %v969 = vsel %vm965, %v204, 0.0
  %970 = vadd.xlane.f32.xlu0 %v969
  %v971 = vpop.xlane.xlu0 %970
  %v972 = vsel %vm965, %v205, 0.0
  %973 = vadd.xlane.f32.xlu0 %v972
  %v974 = vpop.xlane.xlu0 %973
  %v975 = vsel %vm965, %v206, 0.0
  %976 = vadd.xlane.f32.xlu0 %v975
  %v977 = vpop.xlane.xlu0 %976
  %v978 = vsel %vm965, %v207, 0.0
  %979 = vadd.xlane.f32.xlu0 %v978
  %v980 = vpop.xlane.xlu0 %979
  %v981 = vsel %vm965, %v208, 0.0
  %982 = vadd.xlane.f32.xlu0 %v981
  %v983 = vpop.xlane.xlu0 %982
  %v984 = vsel %vm965, %v209, 0.0
  %985 = vadd.xlane.f32.xlu0 %v984
  %v986 = vpop.xlane.xlu0 %985
  %v987 = vsel %vm965, %v210, 0.0
  %988 = vadd.xlane.f32.xlu0 %v987
  %v989 = vpop.xlane.xlu0 %988
  %v990 = vsel %vm965, %v211, 0.0
  %991 = vadd.xlane.f32.xlu0 %v990
  %v992 = vpop.xlane.xlu0 %991
  %v993 = vsel %vm965, %v212, 0.0
  %994 = vadd.xlane.f32.xlu0 %v993
  %v995 = vpop.xlane.xlu0 %994
  %v996 = vsel %vm965, %v213, 0.0
  %997 = vadd.xlane.f32.xlu0 %v996
  %v998 = vpop.xlane.xlu0 %997
  %v999 = vsel %vm965, %v214, 0.0
  %1000 = vadd.xlane.f32.xlu0 %v999
  %v1001 = vpop.xlane.xlu0 %1000
  %v1002 = vsel %vm965, %v215, 0.0
  %1003 = vadd.xlane.f32.xlu0 %v1002
  %v1004 = vpop.xlane.xlu0 %1003
  %v1005 = vsel %vm965, %v216, 0.0
  %1006 = vadd.xlane.f32.xlu0 %v1005
  %v1007 = vpop.xlane.xlu0 %1006
  %v1008 = vsel %vm965, %v217, 0.0
  %1009 = vadd.xlane.f32.xlu0 %v1008
  %v1010 = vpop.xlane.xlu0 %1009
  %v1011 = vsel %vm965, %v218, 0.0
  %1012 = vadd.xlane.f32.xlu0 %v1011
  %v1013 = vpop.xlane.xlu0 %1012
  %v1014 = vrcp.pop 19.0
  %v1015 = vmul.f32 %v968, %v1014
  %v1016 = vmul.f32 %v971, %v1014
  %v1017 = vmul.f32 %v974, %v1014
  %v1018 = vmul.f32 %v977, %v1014
  %v1019 = vmul.f32 %v980, %v1014
  %v1020 = vmul.f32 %v983, %v1014
  %v1021 = vmul.f32 %v986, %v1014
  %v1022 = vmul.f32 %v989, %v1014
  %v1023 = vmul.f32 %v992, %v1014
  %v1024 = vmul.f32 %v995, %v1014
  %v1025 = vmul.f32 %v998, %v1014
  %v1026 = vmul.f32 %v1001, %v1014
  %v1027 = vmul.f32 %v1004, %v1014
  %v1028 = vmul.f32 %v1007, %v1014
  %v1029 = vmul.f32 %v1010, %v1014
  %v1030 = vmul.f32 %v1013, %v1014
  %v1031 = vsub.f32 %v203, %v1015
  %v1032 = vsub.f32 %v204, %v1016
  %v1033 = vsub.f32 %v205, %v1017
  %v1034 = vsub.f32 %v206, %v1018
  %v1035 = vsub.f32 %v207, %v1019
  %v1036 = vsub.f32 %v208, %v1020
  %v1037 = vsub.f32 %v209, %v1021
  %v1038 = vsub.f32 %v210, %v1022
  %v1039 = vsub.f32 %v211, %v1023
  %v1040 = vsub.f32 %v212, %v1024
  %v1041 = vsub.f32 %v213, %v1025
  %v1042 = vsub.f32 %v214, %v1026
  %v1043 = vsub.f32 %v215, %v1027
  %v1044 = vsub.f32 %v216, %v1028
  %v1045 = vsub.f32 %v217, %v1029
  %v1046 = vsub.f32 %v218, %v1030
  %v1047 = vmul.f32 %v1031, %v1031
  %v1048 = vmul.f32 %v1032, %v1032
  %v1049 = vmul.f32 %v1033, %v1033
  %v1050 = vmul.f32 %v1034, %v1034
  %v1051 = vmul.f32 %v1035, %v1035
  %v1052 = vmul.f32 %v1036, %v1036
  %v1053 = vmul.f32 %v1037, %v1037
  %v1054 = vmul.f32 %v1038, %v1038
  %v1055 = vmul.f32 %v1039, %v1039
  %v1056 = vmul.f32 %v1040, %v1040
  %v1057 = vmul.f32 %v1041, %v1041
  %v1058 = vmul.f32 %v1042, %v1042
  %v1059 = vmul.f32 %v1043, %v1043
  %v1060 = vmul.f32 %v1044, %v1044
  %v1061 = vmul.f32 %v1045, %v1045
  %v1062 = vmul.f32 %v1046, %v1046
  %v1063 = vsel %vm965, %v1047, 0.0
  %1064 = vadd.xlane.f32.xlu0 %v1063
  %v1065 = vpop.xlane.xlu0 %1064
  %v1066 = vsel %vm965, %v1048, 0.0
  %1067 = vadd.xlane.f32.xlu0 %v1066
  %v1068 = vpop.xlane.xlu0 %1067
  %v1069 = vsel %vm965, %v1049, 0.0
  %1070 = vadd.xlane.f32.xlu0 %v1069
  %v1071 = vpop.xlane.xlu0 %1070
  %v1072 = vsel %vm965, %v1050, 0.0
  %1073 = vadd.xlane.f32.xlu0 %v1072
  %v1074 = vpop.xlane.xlu0 %1073
  %v1075 = vsel %vm965, %v1051, 0.0
  %1076 = vadd.xlane.f32.xlu0 %v1075
  %v1077 = vpop.xlane.xlu0 %1076
  %v1078 = vsel %vm965, %v1052, 0.0
  %1079 = vadd.xlane.f32.xlu0 %v1078
  %v1080 = vpop.xlane.xlu0 %1079
  %v1081 = vsel %vm965, %v1053, 0.0
  %1082 = vadd.xlane.f32.xlu0 %v1081
  %v1083 = vpop.xlane.xlu0 %1082
  %v1084 = vsel %vm965, %v1054, 0.0
  %1085 = vadd.xlane.f32.xlu0 %v1084
  %v1086 = vpop.xlane.xlu0 %1085
  %v1087 = vsel %vm965, %v1055, 0.0
  %1088 = vadd.xlane.f32.xlu0 %v1087
  %v1089 = vpop.xlane.xlu0 %1088
  %v1090 = vsel %vm965, %v1056, 0.0
  %1091 = vadd.xlane.f32.xlu0 %v1090
  %v1092 = vpop.xlane.xlu0 %1091
  %v1093 = vsel %vm965, %v1057, 0.0
  %1094 = vadd.xlane.f32.xlu0 %v1093
  %v1095 = vpop.xlane.xlu0 %1094
  %v1096 = vsel %vm965, %v1058, 0.0
  %1097 = vadd.xlane.f32.xlu0 %v1096
  %v1098 = vpop.xlane.xlu0 %1097
  %v1099 = vsel %vm965, %v1059, 0.0
  %1100 = vadd.xlane.f32.xlu0 %v1099
  %v1101 = vpop.xlane.xlu0 %1100
  %v1102 = vsel %vm965, %v1060, 0.0
  %1103 = vadd.xlane.f32.xlu0 %v1102
  %v1104 = vpop.xlane.xlu0 %1103
  %v1105 = vsel %vm965, %v1061, 0.0
  %1106 = vadd.xlane.f32.xlu0 %v1105
  %v1107 = vpop.xlane.xlu0 %1106
  %v1108 = vsel %vm965, %v1062, 0.0
  %1109 = vadd.xlane.f32.xlu0 %v1108
  %v1110 = vpop.xlane.xlu0 %1109
  %v1111 = vmul.f32 %v1065, %v1014
  %v1112 = vmul.f32 %v1068, %v1014
  %v1113 = vmul.f32 %v1071, %v1014
  %v1114 = vmul.f32 %v1074, %v1014
  %v1115 = vmul.f32 %v1077, %v1014
  %v1116 = vmul.f32 %v1080, %v1014
  %v1117 = vmul.f32 %v1083, %v1014
  %v1118 = vmul.f32 %v1086, %v1014
  %v1119 = vmul.f32 %v1089, %v1014
  %v1120 = vmul.f32 %v1092, %v1014
  %v1121 = vmul.f32 %v1095, %v1014
  %v1122 = vmul.f32 %v1098, %v1014
  %v1123 = vmul.f32 %v1101, %v1014
  %v1124 = vmul.f32 %v1104, %v1014
  %v1125 = vmul.f32 %v1107, %v1014
  %v1126 = vmul.f32 %v1110, %v1014
  %v1127 = vadd.f32 %v1111, 1e-05
  %v1128 = vadd.f32 %v1112, 1e-05
  %v1129 = vadd.f32 %v1113, 1e-05
  %v1130 = vadd.f32 %v1114, 1e-05
  %v1131 = vadd.f32 %v1115, 1e-05
  %v1132 = vadd.f32 %v1116, 1e-05
  %v1133 = vadd.f32 %v1117, 1e-05
  %v1134 = vadd.f32 %v1118, 1e-05
  %v1135 = vadd.f32 %v1119, 1e-05
  %v1136 = vadd.f32 %v1120, 1e-05
  %v1137 = vadd.f32 %v1121, 1e-05
  %v1138 = vadd.f32 %v1122, 1e-05
  %v1139 = vadd.f32 %v1123, 1e-05
  %v1140 = vadd.f32 %v1124, 1e-05
  %v1141 = vadd.f32 %v1125, 1e-05
  %v1142 = vadd.f32 %v1126, 1e-05
  %v1143 = vrsqrt.pop %v1127
  %v1144 = vrsqrt.pop %v1128
  %v1145 = vrsqrt.pop %v1129
  %v1146 = vrsqrt.pop %v1130
  %v1147 = vrsqrt.pop %v1131
  %v1148 = vrsqrt.pop %v1132
  %v1149 = vrsqrt.pop %v1133
  %v1150 = vrsqrt.pop %v1134
  %v1151 = vrsqrt.pop %v1135
  %v1152 = vrsqrt.pop %v1136
  %v1153 = vrsqrt.pop %v1137
  %v1154 = vrsqrt.pop %v1138
  %v1155 = vrsqrt.pop %v1139
  %v1156 = vrsqrt.pop %v1140
  %v1157 = vrsqrt.pop %v1141
  %v1158 = vrsqrt.pop %v1142
  %v1159 = vmul.f32 %v1031, %v1143
  %v1160 = vmul.f32 %v1032, %v1144
  %v1161 = vmul.f32 %v1033, %v1145
  %v1162 = vmul.f32 %v1034, %v1146
  %v1163 = vmul.f32 %v1035, %v1147
  %v1164 = vmul.f32 %v1036, %v1148
  %v1165 = vmul.f32 %v1037, %v1149
  %v1166 = vmul.f32 %v1038, %v1150
  %v1167 = vmul.f32 %v1039, %v1151
  %v1168 = vmul.f32 %v1040, %v1152
  %v1169 = vmul.f32 %v1041, %v1153
  %v1170 = vmul.f32 %v1042, %v1154
  %v1171 = vmul.f32 %v1043, %v1155
  %v1172 = vmul.f32 %v1044, %v1156
  %v1173 = vmul.f32 %v1045, %v1157
  %v1174 = vmul.f32 %v1046, %v1158
  %v1176 = vlaneseq
  %v1177 = vshrl.u32 %v1176, 7
  %v1178 = vsub.s32 0, %v1177
  %v1179 = vrot.slane %v240, %v1178
  %v1181 = vmul.f32 %v1159, %v1179
  %v1182 = vmul.f32 %v1160, %v1179
  %v1183 = vmul.f32 %v1161, %v1179
  %v1184 = vmul.f32 %v1162, %v1179
  %v1185 = vmul.f32 %v1163, %v1179
  %v1186 = vmul.f32 %v1164, %v1179
  %v1187 = vmul.f32 %v1165, %v1179
  %v1188 = vmul.f32 %v1166, %v1179
  %v1189 = vmul.f32 %v1167, %v1179
  %v1190 = vmul.f32 %v1168, %v1179
  %v1191 = vmul.f32 %v1169, %v1179
  %v1192 = vmul.f32 %v1170, %v1179
  %v1193 = vmul.f32 %v1171, %v1179
  %v1194 = vmul.f32 %v1172, %v1179
  %v1195 = vmul.f32 %v1173, %v1179
  %v1196 = vmul.f32 %v1174, %v1179
  %v1198 = vlaneseq
  %v1199 = vshrl.u32 %v1198, 7
  %v1200 = vsub.s32 0, %v1199
  %v1201 = vrot.slane %v241, %v1200
  %v1203 = vadd.f32 %v1181, %v1201
  %v1204 = vadd.f32 %v1182, %v1201
  %v1205 = vadd.f32 %v1183, %v1201
  %v1206 = vadd.f32 %v1184, %v1201
  %v1207 = vadd.f32 %v1185, %v1201
  %v1208 = vadd.f32 %v1186, %v1201
  %v1209 = vadd.f32 %v1187, %v1201
  %v1210 = vadd.f32 %v1188, %v1201
  %v1211 = vadd.f32 %v1189, %v1201
  %v1212 = vadd.f32 %v1190, %v1201
  %v1213 = vadd.f32 %v1191, %v1201
  %v1214 = vadd.f32 %v1192, %v1201
  %v1215 = vadd.f32 %v1193, %v1201
  %v1216 = vadd.f32 %v1194, %v1201
  %v1217 = vadd.f32 %v1195, %v1201
  %v1218 = vadd.f32 %v1196, %v1201
  %v1219 = vpack.c.bf16 %v1204, %v1203
  %v1220 = vpack.c.bf16 %v1206, %v1205
  %v1221 = vpack.c.bf16 %v1208, %v1207
  %v1222 = vpack.c.bf16 %v1210, %v1209
  %v1223 = vpack.c.bf16 %v1212, %v1211
  %v1224 = vpack.c.bf16 %v1214, %v1213
  %v1225 = vpack.c.bf16 %v1216, %v1215
  %v1226 = vpack.c.bf16 %v1218, %v1217
  %v1228 = vlaneseq
  %v1229 = vshrl.u32 %v1228, 7
  %v1230 = vsub.s32 0, %v1229
  %v1231 = vrot.slane %v245, %v1230
  %v1236 = vunpack.c.l.b16 %v242
  %v1237 = vunpack.c.l.b16 %v243
  %v1238 = vunpack.c.l.b16 %v244
  %v1239 = vpack.c.b16 %v1237, %v1236
  %v1240 = vpack.c.b16 %v1238, %v1238
  %v1243 = vsel %vm965, %v1219, 0
  %v1246 = vsel %vm965, %v1220, 0
  %v1249 = vsel %vm965, %v1221, 0
  %v1252 = vsel %vm965, %v1222, 0
  %v1255 = vsel %vm965, %v1223, 0
  %v1258 = vsel %vm965, %v1224, 0
  %v1261 = vsel %vm965, %v1225, 0
  %v1264 = vsel %vm965, %v1226, 0
  %vm1266 = vcmask 1040384
  %v1267 = vsel %vm1266, 4294967295, 65535
  %v1268 = vsel %vm669, %v1267, 0
  %v1270 = vand.u32 %v1240, %v1268
  %1272 = vmatprep.subr.bf16.mxu0 0
  %1273 = vmatpush1.bf16.msra.mxu0 0
  %1274 = vmatprep.subr.bf16.mxu0 0
  %1275 = vmatpush1.bf16.msra.mxu0 0
  %1276 = vmatprep.subr.bf16.mxu0 0
  %1277 = vmatpush1.bf16.msra.mxu0 0
  %1278 = vmatprep.subr.bf16.mxu0 0
  %1279 = vmatpush1.bf16.msra.mxu0 0
  %1280 = vmatprep.subr.bf16.mxu0 0
  %1281 = vmatpush1.bf16.msra.mxu0 0
  %1282 = vmatprep.subr.bf16.mxu0 0
  %1283 = vmatpush1.bf16.msra.mxu0 0
  %1284 = vmatprep.subr.bf16.mxu0 0
  %1285 = vmatpush1.bf16.msra.mxu0 %v1270
  %1286 = vmatprep.subr.bf16.mxu0 0
  %1287 = vmatpush1.bf16.msra.mxu0 %v1239
  %1288 = vmatprep.subr.bf16.mxu0 0
  %1289 = vmatpush2.bf16.msra.mxu0 0
  %1290 = vmatprep.subr.bf16.mxu0 0
  %1291 = vmatpush2.bf16.msra.mxu0 0
  %1292 = vmatprep.subr.bf16.mxu0 0
  %1293 = vmatpush2.bf16.msra.mxu0 0
  %1294 = vmatprep.subr.bf16.mxu0 0
  %1295 = vmatpush2.bf16.msra.mxu0 0
  %1296 = vmatprep.subr.bf16.mxu0 0
  %1297 = vmatpush2.bf16.msra.mxu0 0
  %1298 = vmatprep.subr.bf16.mxu0 0
  %1299 = vmatpush2.bf16.msra.mxu0 0
  %1300 = vmatprep.subr.bf16.mxu0 0
  %1301 = vmatpush2.bf16.msra.mxu0 0
  %1302 = vmatprep.subr.bf16.mxu0 0
  %1303 = vmatpush2.bf16.msra.mxu0 0
  %1304 = vmatprep.mubr.bf16.mxu0 0
  %1305 = vmatmul.mubr.bf16.gmra.mxu0 %v1243
  %v1306 = vpop.f32.mrf.mxu0
  %v1307 = vadd.f32 %v1231, %v1306
  %v1308 = vpop.f32.mrf.mxu0
  %v1309 = vpop.f32.mrf.mxu0
  %v1310 = vadd.f32 %v1231, %v1309
  %v1311 = vpop.f32.mrf.mxu0
  %1312 = vmatprep.mubr.bf16.mxu0 0
  %1313 = vmatmul.mubr.bf16.gmra.mxu0 %v1246
  %v1314 = vpop.f32.mrf.mxu0
  %v1315 = vadd.f32 %v1231, %v1314
  %v1316 = vpop.f32.mrf.mxu0
  %v1317 = vpop.f32.mrf.mxu0
  %v1318 = vadd.f32 %v1231, %v1317
  %v1319 = vpop.f32.mrf.mxu0
  %1320 = vmatprep.mubr.bf16.mxu0 0
  %1321 = vmatmul.mubr.bf16.gmra.mxu0 %v1249
  %v1322 = vpop.f32.mrf.mxu0
  %v1323 = vadd.f32 %v1231, %v1322
  %v1324 = vpop.f32.mrf.mxu0
  %v1325 = vpop.f32.mrf.mxu0
  %v1326 = vadd.f32 %v1231, %v1325
  %v1327 = vpop.f32.mrf.mxu0
  %1328 = vmatprep.mubr.bf16.mxu0 0
  %1329 = vmatmul.mubr.bf16.gmra.mxu0 %v1252
  %v1330 = vpop.f32.mrf.mxu0
  %v1331 = vadd.f32 %v1231, %v1330
  %v1332 = vpop.f32.mrf.mxu0
  %v1333 = vpop.f32.mrf.mxu0
  %v1334 = vadd.f32 %v1231, %v1333
  %v1335 = vpop.f32.mrf.mxu0
  %1336 = vmatprep.mubr.bf16.mxu0 0
  %1337 = vmatmul.mubr.bf16.gmra.mxu0 %v1255
  %v1338 = vpop.f32.mrf.mxu0
  %v1339 = vadd.f32 %v1231, %v1338
  %v1340 = vpop.f32.mrf.mxu0
  %v1341 = vpop.f32.mrf.mxu0
  %v1342 = vadd.f32 %v1231, %v1341
  %v1343 = vpop.f32.mrf.mxu0
  %1344 = vmatprep.mubr.bf16.mxu0 0
  %1345 = vmatmul.mubr.bf16.gmra.mxu0 %v1258
  %v1346 = vpop.f32.mrf.mxu0
  %v1347 = vadd.f32 %v1231, %v1346
  %v1348 = vpop.f32.mrf.mxu0
  %v1349 = vpop.f32.mrf.mxu0
  %v1350 = vadd.f32 %v1231, %v1349
  %v1351 = vpop.f32.mrf.mxu0
  %1352 = vmatprep.mubr.bf16.mxu0 0
  %1353 = vmatmul.mubr.bf16.gmra.mxu0 %v1261
  %v1354 = vpop.f32.mrf.mxu0
  %v1355 = vadd.f32 %v1231, %v1354
  %v1356 = vpop.f32.mrf.mxu0
  %v1357 = vpop.f32.mrf.mxu0
  %v1358 = vadd.f32 %v1231, %v1357
  %v1359 = vpop.f32.mrf.mxu0
  %1360 = vmatprep.mubr.bf16.mxu0 0
  %1361 = vmatmul.mubr.bf16.gmra.mxu0 %v1264
  %v1362 = vpop.f32.mrf.mxu0
  %v1363 = vadd.f32 %v1231, %v1362
  %v1364 = vpop.f32.mrf.mxu0
  %v1365 = vpop.f32.mrf.mxu0
  %v1366 = vadd.f32 %v1231, %v1365
  %v1367 = vpop.f32.mrf.mxu0
  %1368 = vdwg.mxu0
  %v1369 = vmax.f32 %v1307, 0.0
  %v1370 = vmax.f32 %v1310, 0.0
  %v1371 = vmax.f32 %v1315, 0.0
  %v1372 = vmax.f32 %v1318, 0.0
  %v1373 = vmax.f32 %v1323, 0.0
  %v1374 = vmax.f32 %v1326, 0.0
  %v1375 = vmax.f32 %v1331, 0.0
  %v1376 = vmax.f32 %v1334, 0.0
  %v1377 = vmax.f32 %v1339, 0.0
  %v1378 = vmax.f32 %v1342, 0.0
  %v1379 = vmax.f32 %v1347, 0.0
  %v1380 = vmax.f32 %v1350, 0.0
  %v1381 = vmax.f32 %v1355, 0.0
  %v1382 = vmax.f32 %v1358, 0.0
  %v1383 = vmax.f32 %v1363, 0.0
  %v1384 = vmax.f32 %v1366, 0.0
  %v1385 = vpack.c.bf16 %v1370, %v1369
  %v1386 = vpack.c.bf16 %v1372, %v1371
  %v1387 = vpack.c.bf16 %v1374, %v1373
  %v1388 = vpack.c.bf16 %v1376, %v1375
  %v1389 = vpack.c.bf16 %v1378, %v1377
  %v1390 = vpack.c.bf16 %v1380, %v1379
  %v1391 = vpack.c.bf16 %v1382, %v1381
  %v1392 = vpack.c.bf16 %v1384, %v1383
  %v1394 = vlaneseq
  %v1395 = vshrl.u32 %v1394, 7
  %v1396 = vsub.s32 0, %v1395
  %v1397 = vrot.slane %v254, %v1396
  %v1407 = vunpack.c.l.b16 %v246
  %v1408 = vunpack.c.l.b16 %v247
  %v1409 = vunpack.c.l.b16 %v248
  %v1410 = vunpack.c.l.b16 %v249
  %v1411 = vunpack.c.l.b16 %v250
  %v1412 = vunpack.c.l.b16 %v251
  %v1413 = vunpack.c.l.b16 %v252
  %v1414 = vunpack.c.l.b16 %v253
  %v1415 = vpack.c.b16 %v1408, %v1407
  %v1416 = vpack.c.b16 %v1410, %v1409
  %v1417 = vpack.c.b16 %v1412, %v1411
  %v1418 = vpack.c.b16 %v1414, %v1413
  %v1424 = vsel %vm827, %v1385, 0
  %v1427 = vsel %vm827, %v1386, 0
  %v1430 = vsel %vm827, %v1387, 0
  %v1433 = vsel %vm827, %v1388, 0
  %v1436 = vsel %vm827, %v1389, 0
  %v1439 = vsel %vm827, %v1390, 0
  %v1442 = vsel %vm827, %v1391, 0
  %v1445 = vsel %vm827, %v1392, 0
  %1447 = vmatprep.subr.bf16.mxu0 0
  %1448 = vmatpush1.bf16.msra.mxu0 0
  %1449 = vmatprep.subr.bf16.mxu0 0
  %1450 = vmatpush1.bf16.msra.mxu0 0
  %1451 = vmatprep.subr.bf16.mxu0 0
  %1452 = vmatpush1.bf16.msra.mxu0 0
  %1453 = vmatprep.subr.bf16.mxu0 0
  %1454 = vmatpush1.bf16.msra.mxu0 0
  %1455 = vmatprep.subr.bf16.mxu0 0
  %1456 = vmatpush1.bf16.msra.mxu0 %v1418
  %1457 = vmatprep.subr.bf16.mxu0 0
  %1458 = vmatpush1.bf16.msra.mxu0 %v1417
  %1459 = vmatprep.subr.bf16.mxu0 0
  %1460 = vmatpush1.bf16.msra.mxu0 %v1416
  %1461 = vmatprep.subr.bf16.mxu0 0
  %1462 = vmatpush1.bf16.msra.mxu0 %v1415
  %1463 = vmatprep.subr.bf16.mxu0 0
  %1464 = vmatpush2.bf16.msra.mxu0 0
  %1465 = vmatprep.subr.bf16.mxu0 0
  %1466 = vmatpush2.bf16.msra.mxu0 0
  %1467 = vmatprep.subr.bf16.mxu0 0
  %1468 = vmatpush2.bf16.msra.mxu0 0
  %1469 = vmatprep.subr.bf16.mxu0 0
  %1470 = vmatpush2.bf16.msra.mxu0 0
  %1471 = vmatprep.subr.bf16.mxu0 0
  %1472 = vmatpush2.bf16.msra.mxu0 0
  %1473 = vmatprep.subr.bf16.mxu0 0
  %1474 = vmatpush2.bf16.msra.mxu0 0
  %1475 = vmatprep.subr.bf16.mxu0 0
  %1476 = vmatpush2.bf16.msra.mxu0 0
  %1477 = vmatprep.subr.bf16.mxu0 0
  %1478 = vmatpush2.bf16.msra.mxu0 0
  %1479 = vmatprep.mubr.bf16.mxu0 0
  %1480 = vmatmul.mubr.bf16.gmra.mxu0 %v1424
  %v1481 = vpop.f32.mrf.mxu0
  %v1482 = vadd.f32 %v1397, %v1481
  %v1483 = vpop.f32.mrf.mxu0
  %v1484 = vpop.f32.mrf.mxu0
  %v1485 = vadd.f32 %v1397, %v1484
  %v1486 = vpop.f32.mrf.mxu0
  %1487 = vmatprep.mubr.bf16.mxu0 0
  %1488 = vmatmul.mubr.bf16.gmra.mxu0 %v1427
  %v1489 = vpop.f32.mrf.mxu0
  %v1490 = vadd.f32 %v1397, %v1489
  %v1491 = vpop.f32.mrf.mxu0
  %v1492 = vpop.f32.mrf.mxu0
  %v1493 = vadd.f32 %v1397, %v1492
  %v1494 = vpop.f32.mrf.mxu0
  %1495 = vmatprep.mubr.bf16.mxu0 0
  %1496 = vmatmul.mubr.bf16.gmra.mxu0 %v1430
  %v1497 = vpop.f32.mrf.mxu0
  %v1498 = vadd.f32 %v1397, %v1497
  %v1499 = vpop.f32.mrf.mxu0
  %v1500 = vpop.f32.mrf.mxu0
  %v1501 = vadd.f32 %v1397, %v1500
  %v1502 = vpop.f32.mrf.mxu0
  %1503 = vmatprep.mubr.bf16.mxu0 0
  %1504 = vmatmul.mubr.bf16.gmra.mxu0 %v1433
  %v1505 = vpop.f32.mrf.mxu0
  %v1506 = vadd.f32 %v1397, %v1505
  %v1507 = vpop.f32.mrf.mxu0
  %v1508 = vpop.f32.mrf.mxu0
  %v1509 = vadd.f32 %v1397, %v1508
  %v1510 = vpop.f32.mrf.mxu0
  %1511 = vmatprep.mubr.bf16.mxu0 0
  %1512 = vmatmul.mubr.bf16.gmra.mxu0 %v1436
  %v1513 = vpop.f32.mrf.mxu0
  %v1514 = vadd.f32 %v1397, %v1513
  %v1515 = vpop.f32.mrf.mxu0
  %v1516 = vpop.f32.mrf.mxu0
  %v1517 = vadd.f32 %v1397, %v1516
  %v1518 = vpop.f32.mrf.mxu0
  %1519 = vmatprep.mubr.bf16.mxu0 0
  %1520 = vmatmul.mubr.bf16.gmra.mxu0 %v1439
  %v1521 = vpop.f32.mrf.mxu0
  %v1522 = vadd.f32 %v1397, %v1521
  %v1523 = vpop.f32.mrf.mxu0
  %v1524 = vpop.f32.mrf.mxu0
  %v1525 = vadd.f32 %v1397, %v1524
  %v1526 = vpop.f32.mrf.mxu0
  %1527 = vmatprep.mubr.bf16.mxu0 0
  %1528 = vmatmul.mubr.bf16.gmra.mxu0 %v1442
  %v1529 = vpop.f32.mrf.mxu0
  %v1530 = vadd.f32 %v1397, %v1529
  %v1531 = vpop.f32.mrf.mxu0
  %v1532 = vpop.f32.mrf.mxu0
  %v1533 = vadd.f32 %v1397, %v1532
  %v1534 = vpop.f32.mrf.mxu0
  %1535 = vmatprep.mubr.bf16.mxu0 0
  %1536 = vmatmul.mubr.bf16.gmra.mxu0 %v1445
  %v1537 = vpop.f32.mrf.mxu0
  %v1538 = vadd.f32 %v1397, %v1537
  %v1539 = vpop.f32.mrf.mxu0
  %v1540 = vpop.f32.mrf.mxu0
  %v1541 = vadd.f32 %v1397, %v1540
  %v1542 = vpop.f32.mrf.mxu0
  %1543 = vdwg.mxu0
  %v1544 = vmax.f32 %v1482, 0.0
  %v1545 = vmax.f32 %v1485, 0.0
  %v1546 = vmax.f32 %v1490, 0.0
  %v1547 = vmax.f32 %v1493, 0.0
  %v1548 = vmax.f32 %v1498, 0.0
  %v1549 = vmax.f32 %v1501, 0.0
  %v1550 = vmax.f32 %v1506, 0.0
  %v1551 = vmax.f32 %v1509, 0.0
  %v1552 = vmax.f32 %v1514, 0.0
  %v1553 = vmax.f32 %v1517, 0.0
  %v1554 = vmax.f32 %v1522, 0.0
  %v1555 = vmax.f32 %v1525, 0.0
  %v1556 = vmax.f32 %v1530, 0.0
  %v1557 = vmax.f32 %v1533, 0.0
  %v1558 = vmax.f32 %v1538, 0.0
  %v1559 = vmax.f32 %v1541, 0.0
  %v1560 = vpack.c.bf16 %v950, %v949
  %v1561 = vpack.c.bf16 %v952, %v951
  %v1562 = vpack.c.bf16 %v954, %v953
  %v1563 = vpack.c.bf16 %v956, %v955
  %v1564 = vpack.c.bf16 %v958, %v957
  %v1565 = vpack.c.bf16 %v960, %v959
  %v1566 = vpack.c.bf16 %v962, %v961
  %v1567 = vpack.c.bf16 %v964, %v963
  %v1568 = vpack.c.bf16 %v1545, %v1544
  %v1569 = vpack.c.bf16 %v1547, %v1546
  %v1570 = vpack.c.bf16 %v1549, %v1548
  %v1571 = vpack.c.bf16 %v1551, %v1550
  %v1572 = vpack.c.bf16 %v1553, %v1552
  %v1573 = vpack.c.bf16 %v1555, %v1554
  %v1574 = vpack.c.bf16 %v1557, %v1556
  %v1575 = vpack.c.bf16 %v1559, %v1558
  %v1576 = vlaneseq
  %v1577 = vand.u32 %v1576, 127
  %1578 = vset.pattern.permute.xlu0 0
  %1579 = vperm.xlu0 %1578, %v219
  %v1580 = vpop.permute.xlu0 %1579
  %1581 = vset.pattern.permute.xlu0 0
  %1582 = vperm.xlu0 %1581, %v220
  %v1583 = vpop.permute.xlu0 %1582
  %1584 = vset.pattern.permute.xlu0 0
  %1585 = vperm.xlu0 %1584, %v221
  %v1586 = vpop.permute.xlu0 %1585
  %1587 = vset.pattern.permute.xlu0 0
  %1588 = vperm.xlu0 %1587, %v222
  %v1589 = vpop.permute.xlu0 %1588
  %vm1590 = vcmp.eq.s32.totalorder %v1577, %v1580
  %vm1591 = vcmp.eq.s32.totalorder %v1577, %v1583
  %vm1592 = vcmp.eq.s32.totalorder %v1577, %v1586
  %vm1593 = vcmp.eq.s32.totalorder %v1577, %v1589
  %v1594 = vsel %vm1590, 1, 0
  %v1595 = vsel %vm1591, 1, 0
  %v1596 = vsel %vm1592, 1, 0
  %v1597 = vsel %vm1593, 1, 0
  %v1598 = vcvt.s32.f32 %v1594
  %v1599 = vcvt.s32.f32 %v1595
  %v1600 = vcvt.s32.f32 %v1596
  %v1601 = vcvt.s32.f32 %v1597
  %v1602 = vpack.c.bf16 %v1599, %v1598
  %v1603 = vpack.c.bf16 %v1601, %v1600
  %1604 = vset.pattern.permute.xlu0 0
  %1605 = vperm.xlu0 %1604, %v223
  %v1606 = vpop.permute.xlu0 %1605
  %1607 = vset.pattern.permute.xlu0 0
  %1608 = vperm.xlu0 %1607, %v224
  %v1609 = vpop.permute.xlu0 %1608
  %1610 = vset.pattern.permute.xlu0 0
  %1611 = vperm.xlu0 %1610, %v225
  %v1612 = vpop.permute.xlu0 %1611
  %1613 = vset.pattern.permute.xlu0 0
  %1614 = vperm.xlu0 %1613, %v226
  %v1615 = vpop.permute.xlu0 %1614
  %vm1616 = vcmp.eq.s32.totalorder %v1577, %v1606
  %vm1617 = vcmp.eq.s32.totalorder %v1577, %v1609
  %vm1618 = vcmp.eq.s32.totalorder %v1577, %v1612
  %vm1619 = vcmp.eq.s32.totalorder %v1577, %v1615
  %v1620 = vsel %vm1616, 1, 0
  %v1621 = vsel %vm1617, 1, 0
  %v1622 = vsel %vm1618, 1, 0
  %v1623 = vsel %vm1619, 1, 0
  %v1624 = vcvt.s32.f32 %v1620
  %v1625 = vcvt.s32.f32 %v1621
  %v1626 = vcvt.s32.f32 %v1622
  %v1627 = vcvt.s32.f32 %v1623
  %v1628 = vpack.c.bf16 %v1625, %v1624
  %v1629 = vpack.c.bf16 %v1627, %v1626
  %v1638 = vunpack.c.l.b16 %v255
  %v1639 = vunpack.c.l.b16 %v256
  %v1640 = vunpack.c.l.b16 %v257
  %v1641 = vunpack.c.l.b16 %v258
  %v1642 = vunpack.c.l.b16 %v259
  %v1643 = vunpack.c.l.b16 %v260
  %v1644 = vunpack.c.l.b16 %v261
  %v1645 = vunpack.c.l.b16 %v262
  %v1646 = vpack.c.b16 %v1639, %v1638
  %v1647 = vpack.c.b16 %v1641, %v1640
  %v1648 = vpack.c.b16 %v1643, %v1642
  %v1649 = vpack.c.b16 %v1645, %v1644
  %v1655 = vsel %vm827, %v1560, 0
  %v1658 = vsel %vm827, %v1561, 0
  %v1661 = vsel %vm827, %v1562, 0
  %v1664 = vsel %vm827, %v1563, 0
  %v1667 = vsel %vm827, %v1564, 0
  %v1670 = vsel %vm827, %v1565, 0
  %v1673 = vsel %vm827, %v1566, 0
  %v1676 = vsel %vm827, %v1567, 0
  %1678 = vmatprep.subr.bf16.mxu0 0
  %1679 = vmatpush1.bf16.msra.mxu0 0
  %1680 = vmatprep.subr.bf16.mxu0 0
  %1681 = vmatpush1.bf16.msra.mxu0 0
  %1682 = vmatprep.subr.bf16.mxu0 0
  %1683 = vmatpush1.bf16.msra.mxu0 0
  %1684 = vmatprep.subr.bf16.mxu0 0
  %1685 = vmatpush1.bf16.msra.mxu0 0
  %1686 = vmatprep.subr.bf16.mxu0 0
  %1687 = vmatpush1.bf16.msra.mxu0 %v1649
  %1688 = vmatprep.subr.bf16.mxu0 0
  %1689 = vmatpush1.bf16.msra.mxu0 %v1648
  %1690 = vmatprep.subr.bf16.mxu0 0
  %1691 = vmatpush1.bf16.msra.mxu0 %v1647
  %1692 = vmatprep.subr.bf16.mxu0 0
  %1693 = vmatpush1.bf16.msra.mxu0 %v1646
  %1694 = vmatprep.subr.bf16.mxu0 0
  %1695 = vmatpush2.bf16.msra.mxu0 0
  %1696 = vmatprep.subr.bf16.mxu0 0
  %1697 = vmatpush2.bf16.msra.mxu0 0
  %1698 = vmatprep.subr.bf16.mxu0 0
  %1699 = vmatpush2.bf16.msra.mxu0 0
  %1700 = vmatprep.subr.bf16.mxu0 0
  %1701 = vmatpush2.bf16.msra.mxu0 0
  %1702 = vmatprep.subr.bf16.mxu0 0
  %1703 = vmatpush2.bf16.msra.mxu0 0
  %1704 = vmatprep.subr.bf16.mxu0 0
  %1705 = vmatpush2.bf16.msra.mxu0 0
  %1706 = vmatprep.subr.bf16.mxu0 0
  %1707 = vmatpush2.bf16.msra.mxu0 0
  %1708 = vmatprep.subr.bf16.mxu0 0
  %1709 = vmatpush2.bf16.msra.mxu0 0
  %1710 = vmatprep.mubr.bf16.mxu0 0
  %1711 = vmatmul.mubr.bf16.gmra.mxu0 %v1655
  %v1712 = vpop.f32.mrf.mxu0
  %v1713 = vadd.f32 0.0, %v1712
  %v1714 = vpop.f32.mrf.mxu0
  %v1715 = vpop.f32.mrf.mxu0
  %v1716 = vadd.f32 0.0, %v1715
  %v1717 = vpop.f32.mrf.mxu0
  %1718 = vmatprep.mubr.bf16.mxu0 0
  %1719 = vmatmul.mubr.bf16.gmra.mxu0 %v1658
  %v1720 = vpop.f32.mrf.mxu0
  %v1721 = vadd.f32 0.0, %v1720
  %v1722 = vpop.f32.mrf.mxu0
  %v1723 = vpop.f32.mrf.mxu0
  %v1724 = vadd.f32 0.0, %v1723
  %v1725 = vpop.f32.mrf.mxu0
  %1726 = vmatprep.mubr.bf16.mxu0 0
  %1727 = vmatmul.mubr.bf16.gmra.mxu0 %v1661
  %v1728 = vpop.f32.mrf.mxu0
  %v1729 = vadd.f32 0.0, %v1728
  %v1730 = vpop.f32.mrf.mxu0
  %v1731 = vpop.f32.mrf.mxu0
  %v1732 = vadd.f32 0.0, %v1731
  %v1733 = vpop.f32.mrf.mxu0
  %1734 = vmatprep.mubr.bf16.mxu0 0
  %1735 = vmatmul.mubr.bf16.gmra.mxu0 %v1664
  %v1736 = vpop.f32.mrf.mxu0
  %v1737 = vadd.f32 0.0, %v1736
  %v1738 = vpop.f32.mrf.mxu0
  %v1739 = vpop.f32.mrf.mxu0
  %v1740 = vadd.f32 0.0, %v1739
  %v1741 = vpop.f32.mrf.mxu0
  %1742 = vmatprep.mubr.bf16.mxu0 0
  %1743 = vmatmul.mubr.bf16.gmra.mxu0 %v1667
  %v1744 = vpop.f32.mrf.mxu0
  %v1745 = vadd.f32 0.0, %v1744
  %v1746 = vpop.f32.mrf.mxu0
  %v1747 = vpop.f32.mrf.mxu0
  %v1748 = vadd.f32 0.0, %v1747
  %v1749 = vpop.f32.mrf.mxu0
  %1750 = vmatprep.mubr.bf16.mxu0 0
  %1751 = vmatmul.mubr.bf16.gmra.mxu0 %v1670
  %v1752 = vpop.f32.mrf.mxu0
  %v1753 = vadd.f32 0.0, %v1752
  %v1754 = vpop.f32.mrf.mxu0
  %v1755 = vpop.f32.mrf.mxu0
  %v1756 = vadd.f32 0.0, %v1755
  %v1757 = vpop.f32.mrf.mxu0
  %1758 = vmatprep.mubr.bf16.mxu0 0
  %1759 = vmatmul.mubr.bf16.gmra.mxu0 %v1673
  %v1760 = vpop.f32.mrf.mxu0
  %v1761 = vadd.f32 0.0, %v1760
  %v1762 = vpop.f32.mrf.mxu0
  %v1763 = vpop.f32.mrf.mxu0
  %v1764 = vadd.f32 0.0, %v1763
  %v1765 = vpop.f32.mrf.mxu0
  %1766 = vmatprep.mubr.bf16.mxu0 0
  %1767 = vmatmul.mubr.bf16.gmra.mxu0 %v1676
  %v1768 = vpop.f32.mrf.mxu0
  %v1769 = vadd.f32 0.0, %v1768
  %v1770 = vpop.f32.mrf.mxu0
  %v1771 = vpop.f32.mrf.mxu0
  %v1772 = vadd.f32 0.0, %v1771
  %v1773 = vpop.f32.mrf.mxu0
  %1774 = vdwg.mxu0
  %v1775 = vpack.c.bf16 %v1716, %v1713
  %v1776 = vpack.c.bf16 %v1724, %v1721
  %v1777 = vpack.c.bf16 %v1732, %v1729
  %v1778 = vpack.c.bf16 %v1740, %v1737
  %v1779 = vpack.c.bf16 %v1748, %v1745
  %v1780 = vpack.c.bf16 %v1756, %v1753
  %v1781 = vpack.c.bf16 %v1764, %v1761
  %v1782 = vpack.c.bf16 %v1772, %v1769
  %v1791 = vunpack.c.l.b16 %v264
  %v1792 = vunpack.c.l.b16 %v265
  %v1793 = vunpack.c.l.b16 %v266
  %v1794 = vunpack.c.l.b16 %v267
  %v1795 = vunpack.c.l.b16 %v268
  %v1796 = vunpack.c.l.b16 %v269
  %v1797 = vunpack.c.l.b16 %v270
  %v1798 = vunpack.c.l.b16 %v271
  %v1799 = vpack.c.b16 %v1792, %v1791
  %v1800 = vpack.c.b16 %v1794, %v1793
  %v1801 = vpack.c.b16 %v1796, %v1795
  %v1802 = vpack.c.b16 %v1798, %v1797
  %v1808 = vsel %vm827, %v1568, 0
  %v1811 = vsel %vm827, %v1569, 0
  %v1814 = vsel %vm827, %v1570, 0
  %v1817 = vsel %vm827, %v1571, 0
  %v1820 = vsel %vm827, %v1572, 0
  %v1823 = vsel %vm827, %v1573, 0
  %v1826 = vsel %vm827, %v1574, 0
  %v1829 = vsel %vm827, %v1575, 0
  %1831 = vmatprep.subr.bf16.mxu0 0
  %1832 = vmatpush1.bf16.msra.mxu0 0
  %1833 = vmatprep.subr.bf16.mxu0 0
  %1834 = vmatpush1.bf16.msra.mxu0 0
  %1835 = vmatprep.subr.bf16.mxu0 0
  %1836 = vmatpush1.bf16.msra.mxu0 0
  %1837 = vmatprep.subr.bf16.mxu0 0
  %1838 = vmatpush1.bf16.msra.mxu0 0
  %1839 = vmatprep.subr.bf16.mxu0 0
  %1840 = vmatpush1.bf16.msra.mxu0 %v1802
  %1841 = vmatprep.subr.bf16.mxu0 0
  %1842 = vmatpush1.bf16.msra.mxu0 %v1801
  %1843 = vmatprep.subr.bf16.mxu0 0
  %1844 = vmatpush1.bf16.msra.mxu0 %v1800
  %1845 = vmatprep.subr.bf16.mxu0 0
  %1846 = vmatpush1.bf16.msra.mxu0 %v1799
  %1847 = vmatprep.subr.bf16.mxu0 0
  %1848 = vmatpush2.bf16.msra.mxu0 0
  %1849 = vmatprep.subr.bf16.mxu0 0
  %1850 = vmatpush2.bf16.msra.mxu0 0
  %1851 = vmatprep.subr.bf16.mxu0 0
  %1852 = vmatpush2.bf16.msra.mxu0 0
  %1853 = vmatprep.subr.bf16.mxu0 0
  %1854 = vmatpush2.bf16.msra.mxu0 0
  %1855 = vmatprep.subr.bf16.mxu0 0
  %1856 = vmatpush2.bf16.msra.mxu0 0
  %1857 = vmatprep.subr.bf16.mxu0 0
  %1858 = vmatpush2.bf16.msra.mxu0 0
  %1859 = vmatprep.subr.bf16.mxu0 0
  %1860 = vmatpush2.bf16.msra.mxu0 0
  %1861 = vmatprep.subr.bf16.mxu0 0
  %1862 = vmatpush2.bf16.msra.mxu0 0
  %1863 = vmatprep.mubr.bf16.mxu0 0
  %1864 = vmatmul.mubr.bf16.gmra.mxu0 %v1808
  %v1865 = vpop.f32.mrf.mxu0
  %v1866 = vadd.f32 0.0, %v1865
  %v1867 = vpop.f32.mrf.mxu0
  %v1868 = vpop.f32.mrf.mxu0
  %v1869 = vadd.f32 0.0, %v1868
  %v1870 = vpop.f32.mrf.mxu0
  %1871 = vmatprep.mubr.bf16.mxu0 0
  %1872 = vmatmul.mubr.bf16.gmra.mxu0 %v1811
  %v1873 = vpop.f32.mrf.mxu0
  %v1874 = vadd.f32 0.0, %v1873
  %v1875 = vpop.f32.mrf.mxu0
  %v1876 = vpop.f32.mrf.mxu0
  %v1877 = vadd.f32 0.0, %v1876
  %v1878 = vpop.f32.mrf.mxu0
  %1879 = vmatprep.mubr.bf16.mxu0 0
  %1880 = vmatmul.mubr.bf16.gmra.mxu0 %v1814
  %v1881 = vpop.f32.mrf.mxu0
  %v1882 = vadd.f32 0.0, %v1881
  %v1883 = vpop.f32.mrf.mxu0
  %v1884 = vpop.f32.mrf.mxu0
  %v1885 = vadd.f32 0.0, %v1884
  %v1886 = vpop.f32.mrf.mxu0
  %1887 = vmatprep.mubr.bf16.mxu0 0
  %1888 = vmatmul.mubr.bf16.gmra.mxu0 %v1817
  %v1889 = vpop.f32.mrf.mxu0
  %v1890 = vadd.f32 0.0, %v1889
  %v1891 = vpop.f32.mrf.mxu0
  %v1892 = vpop.f32.mrf.mxu0
  %v1893 = vadd.f32 0.0, %v1892
  %v1894 = vpop.f32.mrf.mxu0
  %1895 = vmatprep.mubr.bf16.mxu0 0
  %1896 = vmatmul.mubr.bf16.gmra.mxu0 %v1820
  %v1897 = vpop.f32.mrf.mxu0
  %v1898 = vadd.f32 0.0, %v1897
  %v1899 = vpop.f32.mrf.mxu0
  %v1900 = vpop.f32.mrf.mxu0
  %v1901 = vadd.f32 0.0, %v1900
  %v1902 = vpop.f32.mrf.mxu0
  %1903 = vmatprep.mubr.bf16.mxu0 0
  %1904 = vmatmul.mubr.bf16.gmra.mxu0 %v1823
  %v1905 = vpop.f32.mrf.mxu0
  %v1906 = vadd.f32 0.0, %v1905
  %v1907 = vpop.f32.mrf.mxu0
  %v1908 = vpop.f32.mrf.mxu0
  %v1909 = vadd.f32 0.0, %v1908
  %v1910 = vpop.f32.mrf.mxu0
  %1911 = vmatprep.mubr.bf16.mxu0 0
  %1912 = vmatmul.mubr.bf16.gmra.mxu0 %v1826
  %v1913 = vpop.f32.mrf.mxu0
  %v1914 = vadd.f32 0.0, %v1913
  %v1915 = vpop.f32.mrf.mxu0
  %v1916 = vpop.f32.mrf.mxu0
  %v1917 = vadd.f32 0.0, %v1916
  %v1918 = vpop.f32.mrf.mxu0
  %1919 = vmatprep.mubr.bf16.mxu0 0
  %1920 = vmatmul.mubr.bf16.gmra.mxu0 %v1829
  %v1921 = vpop.f32.mrf.mxu0
  %v1922 = vadd.f32 0.0, %v1921
  %v1923 = vpop.f32.mrf.mxu0
  %v1924 = vpop.f32.mrf.mxu0
  %v1925 = vadd.f32 0.0, %v1924
  %v1926 = vpop.f32.mrf.mxu0
  %1927 = vdwg.mxu0
  %v1928 = vpack.c.bf16 %v1869, %v1866
  %v1929 = vpack.c.bf16 %v1877, %v1874
  %v1930 = vpack.c.bf16 %v1885, %v1882
  %v1931 = vpack.c.bf16 %v1893, %v1890
  %v1932 = vpack.c.bf16 %v1901, %v1898
  %v1933 = vpack.c.bf16 %v1909, %v1906
  %v1934 = vpack.c.bf16 %v1917, %v1914
  %v1935 = vpack.c.bf16 %v1925, %v1922
  %1936 = vmatprep.subr.bf16.mxu0 0
  %1937 = vmatpush1.bf16.msra.mxu0 %v1935
  %1938 = vmatprep.subr.bf16.mxu0 0
  %1939 = vmatpush1.bf16.msra.mxu0 %v1934
  %1940 = vmatprep.subr.bf16.mxu0 0
  %1941 = vmatpush1.bf16.msra.mxu0 %v1933
  %1942 = vmatprep.subr.bf16.mxu0 0
  %1943 = vmatpush1.bf16.msra.mxu0 %v1932
  %1944 = vmatprep.subr.bf16.mxu0 0
  %1945 = vmatpush1.bf16.msra.mxu0 %v1931
  %1946 = vmatprep.subr.bf16.mxu0 0
  %1947 = vmatpush1.bf16.msra.mxu0 %v1930
  %1948 = vmatprep.subr.bf16.mxu0 0
  %1949 = vmatpush1.bf16.msra.mxu0 %v1929
  %1950 = vmatprep.subr.bf16.mxu0 0
  %1951 = vmatpush1.bf16.msra.mxu0 %v1928
  %1952 = vmatprep.subr.bf16.mxu0 0
  %1953 = vmatpush2.bf16.msra.mxu0 0
  %1954 = vmatprep.subr.bf16.mxu0 0
  %1955 = vmatpush2.bf16.msra.mxu0 0
  %1956 = vmatprep.subr.bf16.mxu0 0
  %1957 = vmatpush2.bf16.msra.mxu0 0
  %1958 = vmatprep.subr.bf16.mxu0 0
  %1959 = vmatpush2.bf16.msra.mxu0 0
  %1960 = vmatprep.subr.bf16.mxu0 0
  %1961 = vmatpush2.bf16.msra.mxu0 0
  %1962 = vmatprep.subr.bf16.mxu0 0
  %1963 = vmatpush2.bf16.msra.mxu0 0
  %1964 = vmatprep.subr.bf16.mxu0 0
  %1965 = vmatpush2.bf16.msra.mxu0 0
  %1966 = vmatprep.subr.bf16.mxu0 0
  %1967 = vmatpush2.bf16.msra.mxu0 0
  %1968 = vmatprep.mubr.bf16.mxu0 0
  %1969 = vmatmul.mubr.bf16.gmra.mxu0 %v1628
  %v1970 = vpop.f32.mrf.mxu0
  %v1971 = vadd.f32 0.0, %v1970
  %v1972 = vpop.f32.mrf.mxu0
  %v1973 = vpop.f32.mrf.mxu0
  %v1974 = vadd.f32 0.0, %v1973
  %v1975 = vpop.f32.mrf.mxu0
  %1976 = vmatprep.mubr.bf16.mxu0 0
  %1977 = vmatmul.mubr.bf16.gmra.mxu0 %v1629
  %v1978 = vpop.f32.mrf.mxu0
  %v1979 = vadd.f32 0.0, %v1978
  %v1980 = vpop.f32.mrf.mxu0
  %v1981 = vpop.f32.mrf.mxu0
  %v1982 = vadd.f32 0.0, %v1981
  %v1983 = vpop.f32.mrf.mxu0
  %1984 = vdwg.mxu0
  %1985 = vmatprep.subr.bf16.mxu0 0
  %1986 = vmatpush1.bf16.msra.mxu0 %v1782
  %1987 = vmatprep.subr.bf16.mxu0 0
  %1988 = vmatpush1.bf16.msra.mxu0 %v1781
  %1989 = vmatprep.subr.bf16.mxu0 0
  %1990 = vmatpush1.bf16.msra.mxu0 %v1780
  %1991 = vmatprep.subr.bf16.mxu0 0
  %1992 = vmatpush1.bf16.msra.mxu0 %v1779
  %1993 = vmatprep.subr.bf16.mxu0 0
  %1994 = vmatpush1.bf16.msra.mxu0 %v1778
  %1995 = vmatprep.subr.bf16.mxu0 0
  %1996 = vmatpush1.bf16.msra.mxu0 %v1777
  %1997 = vmatprep.subr.bf16.mxu0 0
  %1998 = vmatpush1.bf16.msra.mxu0 %v1776
  %1999 = vmatprep.subr.bf16.mxu0 0
  %2000 = vmatpush1.bf16.msra.mxu0 %v1775
  %2001 = vmatprep.subr.bf16.mxu0 0
  %2002 = vmatpush2.bf16.msra.mxu0 0
  %2003 = vmatprep.subr.bf16.mxu0 0
  %2004 = vmatpush2.bf16.msra.mxu0 0
  %2005 = vmatprep.subr.bf16.mxu0 0
  %2006 = vmatpush2.bf16.msra.mxu0 0
  %2007 = vmatprep.subr.bf16.mxu0 0
  %2008 = vmatpush2.bf16.msra.mxu0 0
  %2009 = vmatprep.subr.bf16.mxu0 0
  %2010 = vmatpush2.bf16.msra.mxu0 0
  %2011 = vmatprep.subr.bf16.mxu0 0
  %2012 = vmatpush2.bf16.msra.mxu0 0
  %2013 = vmatprep.subr.bf16.mxu0 0
  %2014 = vmatpush2.bf16.msra.mxu0 0
  %2015 = vmatprep.subr.bf16.mxu0 0
  %2016 = vmatpush2.bf16.msra.mxu0 0
  %2017 = vmatprep.mubr.bf16.mxu0 0
  %2018 = vmatmul.mubr.bf16.gmra.mxu0 %v1602
  %v2019 = vpop.f32.mrf.mxu0
  %v2020 = vadd.f32 %v1971, %v2019
  %v2021 = vpop.f32.mrf.mxu0
  %v2022 = vpop.f32.mrf.mxu0
  %v2023 = vadd.f32 %v1974, %v2022
  %v2024 = vpop.f32.mrf.mxu0
  %2025 = vmatprep.mubr.bf16.mxu0 0
  %2026 = vmatmul.mubr.bf16.gmra.mxu0 %v1603
  %v2027 = vpop.f32.mrf.mxu0
  %v2028 = vadd.f32 %v1979, %v2027
  %v2029 = vpop.f32.mrf.mxu0
  %v2030 = vpop.f32.mrf.mxu0
  %v2031 = vadd.f32 %v1982, %v2030
  %v2032 = vpop.f32.mrf.mxu0
  %2033 = vdwg.mxu0
  %v2035 = vlaneseq
  %v2036 = vshrl.u32 %v2035, 7
  %v2037 = vsub.s32 0, %v2036
  %v2038 = vrot.slane %v263, %v2037
  %v2040 = vadd.f32 %v2020, %v2038
  %v2041 = vadd.f32 %v2023, %v2038
  %v2042 = vadd.f32 %v2028, %v2038
  %v2043 = vadd.f32 %v2031, %v2038
  %v2044 = vsel %vm827, %v2040, 0.0
  %2045 = vadd.xlane.f32.xlu0 %v2044
  %v2046 = vpop.xlane.xlu0 %2045
  %v2047 = vsel %vm827, %v2041, 0.0
  %2048 = vadd.xlane.f32.xlu0 %v2047
  %v2049 = vpop.xlane.xlu0 %2048
  %v2050 = vsel %vm827, %v2042, 0.0
  %2051 = vadd.xlane.f32.xlu0 %v2050
  %v2052 = vpop.xlane.xlu0 %2051
  %v2053 = vsel %vm827, %v2043, 0.0
  %2054 = vadd.xlane.f32.xlu0 %v2053
  %v2055 = vpop.xlane.xlu0 %2054
  %v2056 = vrcp.pop 64.0
  %v2057 = vmul.f32 %v2046, %v2056
  %v2058 = vmul.f32 %v2049, %v2056
  %v2059 = vmul.f32 %v2052, %v2056
  %v2060 = vmul.f32 %v2055, %v2056
  %v2061 = vsub.f32 %v2040, %v2057
  %v2062 = vsub.f32 %v2041, %v2058
  %v2063 = vsub.f32 %v2042, %v2059
  %v2064 = vsub.f32 %v2043, %v2060
  %v2065 = vmul.f32 %v2061, %v2061
  %v2066 = vmul.f32 %v2062, %v2062
  %v2067 = vmul.f32 %v2063, %v2063
  %v2068 = vmul.f32 %v2064, %v2064
  %v2069 = vsel %vm827, %v2065, 0.0
  %2070 = vadd.xlane.f32.xlu0 %v2069
  %v2071 = vpop.xlane.xlu0 %2070
  %v2072 = vsel %vm827, %v2066, 0.0
  %2073 = vadd.xlane.f32.xlu0 %v2072
  %v2074 = vpop.xlane.xlu0 %2073
  %v2075 = vsel %vm827, %v2067, 0.0
  %2076 = vadd.xlane.f32.xlu0 %v2075
  %v2077 = vpop.xlane.xlu0 %2076
  %v2078 = vsel %vm827, %v2068, 0.0
  %2079 = vadd.xlane.f32.xlu0 %v2078
  %v2080 = vpop.xlane.xlu0 %2079
  %v2081 = vmul.f32 %v2071, %v2056
  %v2082 = vmul.f32 %v2074, %v2056
  %v2083 = vmul.f32 %v2077, %v2056
  %v2084 = vmul.f32 %v2080, %v2056
  %v2085 = vadd.f32 %v2081, 1e-05
  %v2086 = vadd.f32 %v2082, 1e-05
  %v2087 = vadd.f32 %v2083, 1e-05
  %v2088 = vadd.f32 %v2084, 1e-05
  %v2089 = vrsqrt.pop %v2085
  %v2090 = vrsqrt.pop %v2086
  %v2091 = vrsqrt.pop %v2087
  %v2092 = vrsqrt.pop %v2088
  %v2093 = vmul.f32 %v2061, %v2089
  %v2094 = vmul.f32 %v2062, %v2090
  %v2095 = vmul.f32 %v2063, %v2091
  %v2096 = vmul.f32 %v2064, %v2092
  %v2098 = vlaneseq
  %v2099 = vshrl.u32 %v2098, 7
  %v2100 = vsub.s32 0, %v2099
  %v2101 = vrot.slane %v272, %v2100
  %v2103 = vmul.f32 %v2093, %v2101
  %v2104 = vmul.f32 %v2094, %v2101
  %v2105 = vmul.f32 %v2095, %v2101
  %v2106 = vmul.f32 %v2096, %v2101
  %v2108 = vlaneseq
  %v2109 = vshrl.u32 %v2108, 7
  %v2110 = vsub.s32 0, %v2109
  %v2111 = vrot.slane %v273, %v2110
  %v2113 = vadd.f32 %v2103, %v2111
  %v2114 = vadd.f32 %v2104, %v2111
  %v2115 = vadd.f32 %v2105, %v2111
  %v2116 = vadd.f32 %v2106, %v2111
  %v2117 = vmax.f32 %v2113, 0.0
  %v2118 = vmax.f32 %v2114, 0.0
  %v2119 = vmax.f32 %v2115, 0.0
  %v2120 = vmax.f32 %v2116, 0.0
  %v2121 = vpack.c.bf16 %v2118, %v2117
  %v2122 = vpack.c.bf16 %v2120, %v2119
  %v2124 = vlaneseq
  %v2125 = vshrl.u32 %v2124, 7
  %v2126 = vsub.s32 0, %v2125
  %v2127 = vrot.slane %v282, %v2126
  %v2137 = vunpack.c.l.b16 %v274
  %v2138 = vunpack.c.l.b16 %v275
  %v2139 = vunpack.c.l.b16 %v276
  %v2140 = vunpack.c.l.b16 %v277
  %v2141 = vunpack.c.l.b16 %v278
  %v2142 = vunpack.c.l.b16 %v279
  %v2143 = vunpack.c.l.b16 %v280
  %v2144 = vunpack.c.l.b16 %v281
  %v2145 = vpack.c.b16 %v2138, %v2137
  %v2146 = vpack.c.b16 %v2140, %v2139
  %v2147 = vpack.c.b16 %v2142, %v2141
  %v2148 = vpack.c.b16 %v2144, %v2143
  %v2154 = vsel %vm827, %v2121, 0
  %v2157 = vsel %vm827, %v2122, 0
  %2159 = vmatprep.subr.bf16.mxu0 0
  %2160 = vmatpush1.bf16.msra.mxu0 0
  %2161 = vmatprep.subr.bf16.mxu0 0
  %2162 = vmatpush1.bf16.msra.mxu0 0
  %2163 = vmatprep.subr.bf16.mxu0 0
  %2164 = vmatpush1.bf16.msra.mxu0 0
  %2165 = vmatprep.subr.bf16.mxu0 0
  %2166 = vmatpush1.bf16.msra.mxu0 0
  %2167 = vmatprep.subr.bf16.mxu0 0
  %2168 = vmatpush1.bf16.msra.mxu0 %v2148
  %2169 = vmatprep.subr.bf16.mxu0 0
  %2170 = vmatpush1.bf16.msra.mxu0 %v2147
  %2171 = vmatprep.subr.bf16.mxu0 0
  %2172 = vmatpush1.bf16.msra.mxu0 %v2146
  %2173 = vmatprep.subr.bf16.mxu0 0
  %2174 = vmatpush1.bf16.msra.mxu0 %v2145
  %2175 = vmatprep.subr.bf16.mxu0 0
  %2176 = vmatpush2.bf16.msra.mxu0 0
  %2177 = vmatprep.subr.bf16.mxu0 0
  %2178 = vmatpush2.bf16.msra.mxu0 0
  %2179 = vmatprep.subr.bf16.mxu0 0
  %2180 = vmatpush2.bf16.msra.mxu0 0
  %2181 = vmatprep.subr.bf16.mxu0 0
  %2182 = vmatpush2.bf16.msra.mxu0 0
  %2183 = vmatprep.subr.bf16.mxu0 0
  %2184 = vmatpush2.bf16.msra.mxu0 0
  %2185 = vmatprep.subr.bf16.mxu0 0
  %2186 = vmatpush2.bf16.msra.mxu0 0
  %2187 = vmatprep.subr.bf16.mxu0 0
  %2188 = vmatpush2.bf16.msra.mxu0 0
  %2189 = vmatprep.subr.bf16.mxu0 0
  %2190 = vmatpush2.bf16.msra.mxu0 0
  %2191 = vmatprep.mubr.bf16.mxu0 0
  %2192 = vmatmul.mubr.bf16.gmra.mxu0 %v2154
  %v2193 = vpop.f32.mrf.mxu0
  %v2194 = vadd.f32 %v2127, %v2193
  %v2195 = vpop.f32.mrf.mxu0
  %v2196 = vpop.f32.mrf.mxu0
  %v2197 = vadd.f32 %v2127, %v2196
  %v2198 = vpop.f32.mrf.mxu0
  %2199 = vmatprep.mubr.bf16.mxu0 0
  %2200 = vmatmul.mubr.bf16.gmra.mxu0 %v2157
  %v2201 = vpop.f32.mrf.mxu0
  %v2202 = vadd.f32 %v2127, %v2201
  %v2203 = vpop.f32.mrf.mxu0
  %v2204 = vpop.f32.mrf.mxu0
  %v2205 = vadd.f32 %v2127, %v2204
  %v2206 = vpop.f32.mrf.mxu0
  %2207 = vdwg.mxu0
  %v2208 = vpack.c.bf16 %v2197, %v2194
  %v2209 = vpack.c.bf16 %v2205, %v2202
  %2210 = vxpose.xlu0.c.b16.start [1/8] %v1602, 128
  %2211 = vxpose.xlu0.c.b16.cont [2/8] %v1603, 128
  %2212 = vxpose.xlu0.c.b16.cont [3/8] 0, 128
  %2213 = vxpose.xlu0.c.b16.cont [4/8] 0, 128
  %2214 = vxpose.xlu0.c.b16.cont [5/8] 0, 128
  %2215 = vxpose.xlu0.c.b16.cont [6/8] 0, 128
  %2216 = vxpose.xlu0.c.b16.cont [7/8] 0, 128
  %2217 = vxpose.xlu0.c.b16.end [8/8] 0, 128
  %v2218 = vpop.trf.xlu0
  %v2219 = vpop.trf.xlu0
  %v2220 = vpop.trf.xlu0
  %v2221 = vpop.trf.xlu0
  %v2222 = vpop.trf.xlu0
  %v2223 = vpop.trf.xlu0
  %v2224 = vpop.trf.xlu0
  %v2225 = vpop.trf.xlu0
  %vm2226 = vcmask 261120
  %v2228 = vsel %vm2226, %v2218, 0
  %v2231 = vsel %vm2226, %v2219, 0
  %v2234 = vsel %vm2226, %v2220, 0
  %v2237 = vsel %vm2226, %v2221, 0
  %v2240 = vsel %vm2226, %v2222, 0
  %v2243 = vsel %vm2226, %v2223, 0
  %v2246 = vsel %vm2226, %v2224, 0
  %v2249 = vsel %vm2226, %v2225, 0
  %2251 = vmatprep.subr.bf16.mxu0 0
  %2252 = vmatpush1.bf16.msra.mxu0 0
  %2253 = vmatprep.subr.bf16.mxu0 0
  %2254 = vmatpush1.bf16.msra.mxu0 0
  %2255 = vmatprep.subr.bf16.mxu0 0
  %2256 = vmatpush1.bf16.msra.mxu0 0
  %2257 = vmatprep.subr.bf16.mxu0 0
  %2258 = vmatpush1.bf16.msra.mxu0 0
  %2259 = vmatprep.subr.bf16.mxu0 0
  %2260 = vmatpush1.bf16.msra.mxu0 0
  %2261 = vmatprep.subr.bf16.mxu0 0
  %2262 = vmatpush1.bf16.msra.mxu0 0
  %2263 = vmatprep.subr.bf16.mxu0 0
  %2264 = vmatpush1.bf16.msra.mxu0 %v2209
  %2265 = vmatprep.subr.bf16.mxu0 0
  %2266 = vmatpush1.bf16.msra.mxu0 %v2208
  %2267 = vmatprep.subr.bf16.mxu0 0
  %2268 = vmatpush2.bf16.msra.mxu0 0
  %2269 = vmatprep.subr.bf16.mxu0 0
  %2270 = vmatpush2.bf16.msra.mxu0 0
  %2271 = vmatprep.subr.bf16.mxu0 0
  %2272 = vmatpush2.bf16.msra.mxu0 0
  %2273 = vmatprep.subr.bf16.mxu0 0
  %2274 = vmatpush2.bf16.msra.mxu0 0
  %2275 = vmatprep.subr.bf16.mxu0 0
  %2276 = vmatpush2.bf16.msra.mxu0 0
  %2277 = vmatprep.subr.bf16.mxu0 0
  %2278 = vmatpush2.bf16.msra.mxu0 0
  %2279 = vmatprep.subr.bf16.mxu0 0
  %2280 = vmatpush2.bf16.msra.mxu0 0
  %2281 = vmatprep.subr.bf16.mxu0 0
  %2282 = vmatpush2.bf16.msra.mxu0 0
  %2283 = vmatprep.mubr.bf16.mxu0 0
  %2284 = vmatmul.mubr.bf16.gmra.mxu0 %v2228
  %v2285 = vpop.f32.mrf.mxu0
  %v2286 = vadd.f32 0.0, %v2285
  %v2287 = vpop.f32.mrf.mxu0
  %v2288 = vpop.f32.mrf.mxu0
  %v2289 = vadd.f32 0.0, %v2288
  %v2290 = vpop.f32.mrf.mxu0
  %2291 = vmatprep.mubr.bf16.mxu0 0
  %2292 = vmatmul.mubr.bf16.gmra.mxu0 %v2231
  %v2293 = vpop.f32.mrf.mxu0
  %v2294 = vadd.f32 0.0, %v2293
  %v2295 = vpop.f32.mrf.mxu0
  %v2296 = vpop.f32.mrf.mxu0
  %v2297 = vadd.f32 0.0, %v2296
  %v2298 = vpop.f32.mrf.mxu0
  %2299 = vmatprep.mubr.bf16.mxu0 0
  %2300 = vmatmul.mubr.bf16.gmra.mxu0 %v2234
  %v2301 = vpop.f32.mrf.mxu0
  %v2302 = vadd.f32 0.0, %v2301
  %v2303 = vpop.f32.mrf.mxu0
  %v2304 = vpop.f32.mrf.mxu0
  %v2305 = vadd.f32 0.0, %v2304
  %v2306 = vpop.f32.mrf.mxu0
  %2307 = vmatprep.mubr.bf16.mxu0 0
  %2308 = vmatmul.mubr.bf16.gmra.mxu0 %v2237
  %v2309 = vpop.f32.mrf.mxu0
  %v2310 = vadd.f32 0.0, %v2309
  %v2311 = vpop.f32.mrf.mxu0
  %v2312 = vpop.f32.mrf.mxu0
  %v2313 = vadd.f32 0.0, %v2312
  %v2314 = vpop.f32.mrf.mxu0
  %2315 = vmatprep.mubr.bf16.mxu0 0
  %2316 = vmatmul.mubr.bf16.gmra.mxu0 %v2240
  %v2317 = vpop.f32.mrf.mxu0
  %v2318 = vadd.f32 0.0, %v2317
  %v2319 = vpop.f32.mrf.mxu0
  %v2320 = vpop.f32.mrf.mxu0
  %v2321 = vadd.f32 0.0, %v2320
  %v2322 = vpop.f32.mrf.mxu0
  %2323 = vmatprep.mubr.bf16.mxu0 0
  %2324 = vmatmul.mubr.bf16.gmra.mxu0 %v2243
  %v2325 = vpop.f32.mrf.mxu0
  %v2326 = vadd.f32 0.0, %v2325
  %v2327 = vpop.f32.mrf.mxu0
  %v2328 = vpop.f32.mrf.mxu0
  %v2329 = vadd.f32 0.0, %v2328
  %v2330 = vpop.f32.mrf.mxu0
  %2331 = vmatprep.mubr.bf16.mxu0 0
  %2332 = vmatmul.mubr.bf16.gmra.mxu0 %v2246
  %v2333 = vpop.f32.mrf.mxu0
  %v2334 = vadd.f32 0.0, %v2333
  %v2335 = vpop.f32.mrf.mxu0
  %v2336 = vpop.f32.mrf.mxu0
  %v2337 = vadd.f32 0.0, %v2336
  %v2338 = vpop.f32.mrf.mxu0
  %2339 = vmatprep.mubr.bf16.mxu0 0
  %2340 = vmatmul.mubr.bf16.gmra.mxu0 %v2249
  %v2341 = vpop.f32.mrf.mxu0
  %v2342 = vadd.f32 0.0, %v2341
  %v2343 = vpop.f32.mrf.mxu0
  %v2344 = vpop.f32.mrf.mxu0
  %v2345 = vadd.f32 0.0, %v2344
  %v2346 = vpop.f32.mrf.mxu0
  %2347 = vdwg.mxu0
  %v2348 = vsel %vm827, %v2286, 0.0
  %2349 = vadd.xlane.f32.xlu0 %v2348
  %v2350 = vpop.xlane.xlu0 %2349
  %v2351 = vsel %vm827, %v2289, 0.0
  %2352 = vadd.xlane.f32.xlu0 %v2351
  %v2353 = vpop.xlane.xlu0 %2352
  %v2354 = vsel %vm827, %v2294, 0.0
  %2355 = vadd.xlane.f32.xlu0 %v2354
  %v2356 = vpop.xlane.xlu0 %2355
  %v2357 = vsel %vm827, %v2297, 0.0
  %2358 = vadd.xlane.f32.xlu0 %v2357
  %v2359 = vpop.xlane.xlu0 %2358
  %v2360 = vsel %vm827, %v2302, 0.0
  %2361 = vadd.xlane.f32.xlu0 %v2360
  %v2362 = vpop.xlane.xlu0 %2361
  %v2363 = vsel %vm827, %v2305, 0.0
  %2364 = vadd.xlane.f32.xlu0 %v2363
  %v2365 = vpop.xlane.xlu0 %2364
  %v2366 = vsel %vm827, %v2310, 0.0
  %2367 = vadd.xlane.f32.xlu0 %v2366
  %v2368 = vpop.xlane.xlu0 %2367
  %v2369 = vsel %vm827, %v2313, 0.0
  %2370 = vadd.xlane.f32.xlu0 %v2369
  %v2371 = vpop.xlane.xlu0 %2370
  %v2372 = vsel %vm827, %v2318, 0.0
  %2373 = vadd.xlane.f32.xlu0 %v2372
  %v2374 = vpop.xlane.xlu0 %2373
  %v2375 = vsel %vm827, %v2321, 0.0
  %2376 = vadd.xlane.f32.xlu0 %v2375
  %v2377 = vpop.xlane.xlu0 %2376
  %v2378 = vsel %vm827, %v2326, 0.0
  %2379 = vadd.xlane.f32.xlu0 %v2378
  %v2380 = vpop.xlane.xlu0 %2379
  %v2381 = vsel %vm827, %v2329, 0.0
  %2382 = vadd.xlane.f32.xlu0 %v2381
  %v2383 = vpop.xlane.xlu0 %2382
  %v2384 = vsel %vm827, %v2334, 0.0
  %2385 = vadd.xlane.f32.xlu0 %v2384
  %v2386 = vpop.xlane.xlu0 %2385
  %v2387 = vsel %vm827, %v2337, 0.0
  %2388 = vadd.xlane.f32.xlu0 %v2387
  %v2389 = vpop.xlane.xlu0 %2388
  %v2390 = vsel %vm827, %v2342, 0.0
  %2391 = vadd.xlane.f32.xlu0 %v2390
  %v2392 = vpop.xlane.xlu0 %2391
  %v2393 = vsel %vm827, %v2345, 0.0
  %2394 = vadd.xlane.f32.xlu0 %v2393
  %v2395 = vpop.xlane.xlu0 %2394
  %v2396 = vmul.f32 %v2350, %v2056
  %v2397 = vmul.f32 %v2353, %v2056
  %v2398 = vmul.f32 %v2356, %v2056
  %v2399 = vmul.f32 %v2359, %v2056
  %v2400 = vmul.f32 %v2362, %v2056
  %v2401 = vmul.f32 %v2365, %v2056
  %v2402 = vmul.f32 %v2368, %v2056
  %v2403 = vmul.f32 %v2371, %v2056
  %v2404 = vmul.f32 %v2374, %v2056
  %v2405 = vmul.f32 %v2377, %v2056
  %v2406 = vmul.f32 %v2380, %v2056
  %v2407 = vmul.f32 %v2383, %v2056
  %v2408 = vmul.f32 %v2386, %v2056
  %v2409 = vmul.f32 %v2389, %v2056
  %v2410 = vmul.f32 %v2392, %v2056
  %v2411 = vmul.f32 %v2395, %v2056
  %v2412 = vsub.f32 %v2286, %v2396
  %v2413 = vsub.f32 %v2289, %v2397
  %v2414 = vsub.f32 %v2294, %v2398
  %v2415 = vsub.f32 %v2297, %v2399
  %v2416 = vsub.f32 %v2302, %v2400
  %v2417 = vsub.f32 %v2305, %v2401
  %v2418 = vsub.f32 %v2310, %v2402
  %v2419 = vsub.f32 %v2313, %v2403
  %v2420 = vsub.f32 %v2318, %v2404
  %v2421 = vsub.f32 %v2321, %v2405
  %v2422 = vsub.f32 %v2326, %v2406
  %v2423 = vsub.f32 %v2329, %v2407
  %v2424 = vsub.f32 %v2334, %v2408
  %v2425 = vsub.f32 %v2337, %v2409
  %v2426 = vsub.f32 %v2342, %v2410
  %v2427 = vsub.f32 %v2345, %v2411
  %v2428 = vmul.f32 %v2412, %v2412
  %v2429 = vmul.f32 %v2413, %v2413
  %v2430 = vmul.f32 %v2414, %v2414
  %v2431 = vmul.f32 %v2415, %v2415
  %v2432 = vmul.f32 %v2416, %v2416
  %v2433 = vmul.f32 %v2417, %v2417
  %v2434 = vmul.f32 %v2418, %v2418
  %v2435 = vmul.f32 %v2419, %v2419
  %v2436 = vmul.f32 %v2420, %v2420
  %v2437 = vmul.f32 %v2421, %v2421
  %v2438 = vmul.f32 %v2422, %v2422
  %v2439 = vmul.f32 %v2423, %v2423
  %v2440 = vmul.f32 %v2424, %v2424
  %v2441 = vmul.f32 %v2425, %v2425
  %v2442 = vmul.f32 %v2426, %v2426
  %v2443 = vmul.f32 %v2427, %v2427
  %v2444 = vsel %vm827, %v2428, 0.0
  %2445 = vadd.xlane.f32.xlu0 %v2444
  %v2446 = vpop.xlane.xlu0 %2445
  %v2447 = vsel %vm827, %v2429, 0.0
  %2448 = vadd.xlane.f32.xlu0 %v2447
  %v2449 = vpop.xlane.xlu0 %2448
  %v2450 = vsel %vm827, %v2430, 0.0
  %2451 = vadd.xlane.f32.xlu0 %v2450
  %v2452 = vpop.xlane.xlu0 %2451
  %v2453 = vsel %vm827, %v2431, 0.0
  %2454 = vadd.xlane.f32.xlu0 %v2453
  %v2455 = vpop.xlane.xlu0 %2454
  %v2456 = vsel %vm827, %v2432, 0.0
  %2457 = vadd.xlane.f32.xlu0 %v2456
  %v2458 = vpop.xlane.xlu0 %2457
  %v2459 = vsel %vm827, %v2433, 0.0
  %2460 = vadd.xlane.f32.xlu0 %v2459
  %v2461 = vpop.xlane.xlu0 %2460
  %v2462 = vsel %vm827, %v2434, 0.0
  %2463 = vadd.xlane.f32.xlu0 %v2462
  %v2464 = vpop.xlane.xlu0 %2463
  %v2465 = vsel %vm827, %v2435, 0.0
  %2466 = vadd.xlane.f32.xlu0 %v2465
  %v2467 = vpop.xlane.xlu0 %2466
  %v2468 = vsel %vm827, %v2436, 0.0
  %2469 = vadd.xlane.f32.xlu0 %v2468
  %v2470 = vpop.xlane.xlu0 %2469
  %v2471 = vsel %vm827, %v2437, 0.0
  %2472 = vadd.xlane.f32.xlu0 %v2471
  %v2473 = vpop.xlane.xlu0 %2472
  %v2474 = vsel %vm827, %v2438, 0.0
  %2475 = vadd.xlane.f32.xlu0 %v2474
  %v2476 = vpop.xlane.xlu0 %2475
  %v2477 = vsel %vm827, %v2439, 0.0
  %2478 = vadd.xlane.f32.xlu0 %v2477
  %v2479 = vpop.xlane.xlu0 %2478
  %v2480 = vsel %vm827, %v2440, 0.0
  %2481 = vadd.xlane.f32.xlu0 %v2480
  %v2482 = vpop.xlane.xlu0 %2481
  %v2483 = vsel %vm827, %v2441, 0.0
  %2484 = vadd.xlane.f32.xlu0 %v2483
  %v2485 = vpop.xlane.xlu0 %2484
  %v2486 = vsel %vm827, %v2442, 0.0
  %2487 = vadd.xlane.f32.xlu0 %v2486
  %v2488 = vpop.xlane.xlu0 %2487
  %v2489 = vsel %vm827, %v2443, 0.0
  %2490 = vadd.xlane.f32.xlu0 %v2489
  %v2491 = vpop.xlane.xlu0 %2490
  %v2492 = vmul.f32 %v2446, %v2056
  %v2493 = vmul.f32 %v2449, %v2056
  %v2494 = vmul.f32 %v2452, %v2056
  %v2495 = vmul.f32 %v2455, %v2056
  %v2496 = vmul.f32 %v2458, %v2056
  %v2497 = vmul.f32 %v2461, %v2056
  %v2498 = vmul.f32 %v2464, %v2056
  %v2499 = vmul.f32 %v2467, %v2056
  %v2500 = vmul.f32 %v2470, %v2056
  %v2501 = vmul.f32 %v2473, %v2056
  %v2502 = vmul.f32 %v2476, %v2056
  %v2503 = vmul.f32 %v2479, %v2056
  %v2504 = vmul.f32 %v2482, %v2056
  %v2505 = vmul.f32 %v2485, %v2056
  %v2506 = vmul.f32 %v2488, %v2056
  %v2507 = vmul.f32 %v2491, %v2056
  %v2508 = vadd.f32 %v2492, 1e-05
  %v2509 = vadd.f32 %v2493, 1e-05
  %v2510 = vadd.f32 %v2494, 1e-05
  %v2511 = vadd.f32 %v2495, 1e-05
  %v2512 = vadd.f32 %v2496, 1e-05
  %v2513 = vadd.f32 %v2497, 1e-05
  %v2514 = vadd.f32 %v2498, 1e-05
  %v2515 = vadd.f32 %v2499, 1e-05
  %v2516 = vadd.f32 %v2500, 1e-05
  %v2517 = vadd.f32 %v2501, 1e-05
  %v2518 = vadd.f32 %v2502, 1e-05
  %v2519 = vadd.f32 %v2503, 1e-05
  %v2520 = vadd.f32 %v2504, 1e-05
  %v2521 = vadd.f32 %v2505, 1e-05
  %v2522 = vadd.f32 %v2506, 1e-05
  %v2523 = vadd.f32 %v2507, 1e-05
  %v2524 = vrsqrt.pop %v2508
  %v2525 = vrsqrt.pop %v2509
  %v2526 = vrsqrt.pop %v2510
  %v2527 = vrsqrt.pop %v2511
  %v2528 = vrsqrt.pop %v2512
  %v2529 = vrsqrt.pop %v2513
  %v2530 = vrsqrt.pop %v2514
  %v2531 = vrsqrt.pop %v2515
  %v2532 = vrsqrt.pop %v2516
  %v2533 = vrsqrt.pop %v2517
  %v2534 = vrsqrt.pop %v2518
  %v2535 = vrsqrt.pop %v2519
  %v2536 = vrsqrt.pop %v2520
  %v2537 = vrsqrt.pop %v2521
  %v2538 = vrsqrt.pop %v2522
  %v2539 = vrsqrt.pop %v2523
  %v2540 = vmul.f32 %v2412, %v2524
  %v2541 = vmul.f32 %v2413, %v2525
  %v2542 = vmul.f32 %v2414, %v2526
  %v2543 = vmul.f32 %v2415, %v2527
  %v2544 = vmul.f32 %v2416, %v2528
  %v2545 = vmul.f32 %v2417, %v2529
  %v2546 = vmul.f32 %v2418, %v2530
  %v2547 = vmul.f32 %v2419, %v2531
  %v2548 = vmul.f32 %v2420, %v2532
  %v2549 = vmul.f32 %v2421, %v2533
  %v2550 = vmul.f32 %v2422, %v2534
  %v2551 = vmul.f32 %v2423, %v2535
  %v2552 = vmul.f32 %v2424, %v2536
  %v2553 = vmul.f32 %v2425, %v2537
  %v2554 = vmul.f32 %v2426, %v2538
  %v2555 = vmul.f32 %v2427, %v2539
  %v2557 = vlaneseq
  %v2558 = vshrl.u32 %v2557, 7
  %v2559 = vsub.s32 0, %v2558
  %v2560 = vrot.slane %v283, %v2559
  %v2562 = vmul.f32 %v2540, %v2560
  %v2563 = vmul.f32 %v2541, %v2560
  %v2564 = vmul.f32 %v2542, %v2560
  %v2565 = vmul.f32 %v2543, %v2560
  %v2566 = vmul.f32 %v2544, %v2560
  %v2567 = vmul.f32 %v2545, %v2560
  %v2568 = vmul.f32 %v2546, %v2560
  %v2569 = vmul.f32 %v2547, %v2560
  %v2570 = vmul.f32 %v2548, %v2560
  %v2571 = vmul.f32 %v2549, %v2560
  %v2572 = vmul.f32 %v2550, %v2560
  %v2573 = vmul.f32 %v2551, %v2560
  %v2574 = vmul.f32 %v2552, %v2560
  %v2575 = vmul.f32 %v2553, %v2560
  %v2576 = vmul.f32 %v2554, %v2560
  %v2577 = vmul.f32 %v2555, %v2560
  %v2579 = vlaneseq
  %v2580 = vshrl.u32 %v2579, 7
  %v2581 = vsub.s32 0, %v2580
  %v2582 = vrot.slane %v284, %v2581
  %v2584 = vadd.f32 %v2562, %v2582
  %v2585 = vadd.f32 %v2563, %v2582
  %v2586 = vadd.f32 %v2564, %v2582
  %v2587 = vadd.f32 %v2565, %v2582
  %v2588 = vadd.f32 %v2566, %v2582
  %v2589 = vadd.f32 %v2567, %v2582
  %v2590 = vadd.f32 %v2568, %v2582
  %v2591 = vadd.f32 %v2569, %v2582
  %v2592 = vadd.f32 %v2570, %v2582
  %v2593 = vadd.f32 %v2571, %v2582
  %v2594 = vadd.f32 %v2572, %v2582
  %v2595 = vadd.f32 %v2573, %v2582
  %v2596 = vadd.f32 %v2574, %v2582
  %v2597 = vadd.f32 %v2575, %v2582
  %v2598 = vadd.f32 %v2576, %v2582
  %v2599 = vadd.f32 %v2577, %v2582
  %v2600 = vpack.c.bf16 %v2585, %v2584
  %v2601 = vpack.c.bf16 %v2587, %v2586
  %v2602 = vpack.c.bf16 %v2589, %v2588
  %v2603 = vpack.c.bf16 %v2591, %v2590
  %v2604 = vpack.c.bf16 %v2593, %v2592
  %v2605 = vpack.c.bf16 %v2595, %v2594
  %v2606 = vpack.c.bf16 %v2597, %v2596
  %v2607 = vpack.c.bf16 %v2599, %v2598
  %2616 = vrot.lane.b32.xlu0 %v1560, 64
  %v2617 = vpop.permute.xlu0 %2616
  %2618 = vrot.lane.b32.xlu0 %v1561, 64
  %v2619 = vpop.permute.xlu0 %2618
  %2620 = vrot.lane.b32.xlu0 %v1562, 64
  %v2621 = vpop.permute.xlu0 %2620
  %2622 = vrot.lane.b32.xlu0 %v1563, 64
  %v2623 = vpop.permute.xlu0 %2622
  %2624 = vrot.lane.b32.xlu0 %v1564, 64
  %v2625 = vpop.permute.xlu0 %2624
  %2626 = vrot.lane.b32.xlu0 %v1565, 64
  %v2627 = vpop.permute.xlu0 %2626
  %2628 = vrot.lane.b32.xlu0 %v1566, 64
  %v2629 = vpop.permute.xlu0 %2628
  %2630 = vrot.lane.b32.xlu0 %v1567, 64
  %v2631 = vpop.permute.xlu0 %2630
  %v2634 = vsel %vm827, %v2600, %v2617
  %v2638 = vsel %vm827, %v2601, %v2619
  %v2642 = vsel %vm827, %v2602, %v2621
  %v2646 = vsel %vm827, %v2603, %v2623
  %v2650 = vsel %vm827, %v2604, %v2625
  %v2654 = vsel %vm827, %v2605, %v2627
  %v2658 = vsel %vm827, %v2606, %v2629
  %v2662 = vsel %vm827, %v2607, %v2631
  %v2665 = vlaneseq
  %v2666 = vshrl.u32 %v2665, 7
  %v2667 = vsub.s32 0, %v2666
  %v2668 = vrot.slane %v301, %v2667
  %v2686 = vunpack.c.l.b16 %v285
  %v2687 = vunpack.c.l.b16 %v286
  %v2688 = vunpack.c.l.b16 %v287
  %v2689 = vunpack.c.l.b16 %v288
  %v2690 = vunpack.c.l.b16 %v289
  %v2691 = vunpack.c.l.b16 %v290
  %v2692 = vunpack.c.l.b16 %v291
  %v2693 = vunpack.c.l.b16 %v292
  %v2694 = vunpack.c.l.b16 %v293
  %v2695 = vunpack.c.l.b16 %v294
  %v2696 = vunpack.c.l.b16 %v295
  %v2697 = vunpack.c.l.b16 %v296
  %v2698 = vunpack.c.l.b16 %v297
  %v2699 = vunpack.c.l.b16 %v298
  %v2700 = vunpack.c.l.b16 %v299
  %v2701 = vunpack.c.l.b16 %v300
  %v2702 = vpack.c.b16 %v2687, %v2686
  %v2703 = vpack.c.b16 %v2689, %v2688
  %v2704 = vpack.c.b16 %v2691, %v2690
  %v2705 = vpack.c.b16 %v2693, %v2692
  %v2706 = vpack.c.b16 %v2695, %v2694
  %v2707 = vpack.c.b16 %v2697, %v2696
  %v2708 = vpack.c.b16 %v2699, %v2698
  %v2709 = vpack.c.b16 %v2701, %v2700
  %2718 = vmatprep.subr.bf16.mxu0 0
  %2719 = vmatpush1.bf16.msra.mxu0 %v2709
  %2720 = vmatprep.subr.bf16.mxu0 0
  %2721 = vmatpush1.bf16.msra.mxu0 %v2708
  %2722 = vmatprep.subr.bf16.mxu0 0
  %2723 = vmatpush1.bf16.msra.mxu0 %v2707
  %2724 = vmatprep.subr.bf16.mxu0 0
  %2725 = vmatpush1.bf16.msra.mxu0 %v2706
  %2726 = vmatprep.subr.bf16.mxu0 0
  %2727 = vmatpush1.bf16.msra.mxu0 %v2705
  %2728 = vmatprep.subr.bf16.mxu0 0
  %2729 = vmatpush1.bf16.msra.mxu0 %v2704
  %2730 = vmatprep.subr.bf16.mxu0 0
  %2731 = vmatpush1.bf16.msra.mxu0 %v2703
  %2732 = vmatprep.subr.bf16.mxu0 0
  %2733 = vmatpush1.bf16.msra.mxu0 %v2702
  %2734 = vmatprep.subr.bf16.mxu0 0
  %2735 = vmatpush2.bf16.msra.mxu0 0
  %2736 = vmatprep.subr.bf16.mxu0 0
  %2737 = vmatpush2.bf16.msra.mxu0 0
  %2738 = vmatprep.subr.bf16.mxu0 0
  %2739 = vmatpush2.bf16.msra.mxu0 0
  %2740 = vmatprep.subr.bf16.mxu0 0
  %2741 = vmatpush2.bf16.msra.mxu0 0
  %2742 = vmatprep.subr.bf16.mxu0 0
  %2743 = vmatpush2.bf16.msra.mxu0 0
  %2744 = vmatprep.subr.bf16.mxu0 0
  %2745 = vmatpush2.bf16.msra.mxu0 0
  %2746 = vmatprep.subr.bf16.mxu0 0
  %2747 = vmatpush2.bf16.msra.mxu0 0
  %2748 = vmatprep.subr.bf16.mxu0 0
  %2749 = vmatpush2.bf16.msra.mxu0 0
  %2750 = vmatprep.mubr.bf16.mxu0 0
  %2751 = vmatmul.mubr.bf16.gmra.mxu0 %v2634
  %v2752 = vpop.f32.mrf.mxu0
  %v2753 = vadd.f32 %v2668, %v2752
  %v2754 = vpop.f32.mrf.mxu0
  %v2755 = vpop.f32.mrf.mxu0
  %v2756 = vadd.f32 %v2668, %v2755
  %v2757 = vpop.f32.mrf.mxu0
  %2758 = vmatprep.mubr.bf16.mxu0 0
  %2759 = vmatmul.mubr.bf16.gmra.mxu0 %v2638
  %v2760 = vpop.f32.mrf.mxu0
  %v2761 = vadd.f32 %v2668, %v2760
  %v2762 = vpop.f32.mrf.mxu0
  %v2763 = vpop.f32.mrf.mxu0
  %v2764 = vadd.f32 %v2668, %v2763
  %v2765 = vpop.f32.mrf.mxu0
  %2766 = vmatprep.mubr.bf16.mxu0 0
  %2767 = vmatmul.mubr.bf16.gmra.mxu0 %v2642
  %v2768 = vpop.f32.mrf.mxu0
  %v2769 = vadd.f32 %v2668, %v2768
  %v2770 = vpop.f32.mrf.mxu0
  %v2771 = vpop.f32.mrf.mxu0
  %v2772 = vadd.f32 %v2668, %v2771
  %v2773 = vpop.f32.mrf.mxu0
  %2774 = vmatprep.mubr.bf16.mxu0 0
  %2775 = vmatmul.mubr.bf16.gmra.mxu0 %v2646
  %v2776 = vpop.f32.mrf.mxu0
  %v2777 = vadd.f32 %v2668, %v2776
  %v2778 = vpop.f32.mrf.mxu0
  %v2779 = vpop.f32.mrf.mxu0
  %v2780 = vadd.f32 %v2668, %v2779
  %v2781 = vpop.f32.mrf.mxu0
  %2782 = vmatprep.mubr.bf16.mxu0 0
  %2783 = vmatmul.mubr.bf16.gmra.mxu0 %v2650
  %v2784 = vpop.f32.mrf.mxu0
  %v2785 = vadd.f32 %v2668, %v2784
  %v2786 = vpop.f32.mrf.mxu0
  %v2787 = vpop.f32.mrf.mxu0
  %v2788 = vadd.f32 %v2668, %v2787
  %v2789 = vpop.f32.mrf.mxu0
  %2790 = vmatprep.mubr.bf16.mxu0 0
  %2791 = vmatmul.mubr.bf16.gmra.mxu0 %v2654
  %v2792 = vpop.f32.mrf.mxu0
  %v2793 = vadd.f32 %v2668, %v2792
  %v2794 = vpop.f32.mrf.mxu0
  %v2795 = vpop.f32.mrf.mxu0
  %v2796 = vadd.f32 %v2668, %v2795
  %v2797 = vpop.f32.mrf.mxu0
  %2798 = vmatprep.mubr.bf16.mxu0 0
  %2799 = vmatmul.mubr.bf16.gmra.mxu0 %v2658
  %v2800 = vpop.f32.mrf.mxu0
  %v2801 = vadd.f32 %v2668, %v2800
  %v2802 = vpop.f32.mrf.mxu0
  %v2803 = vpop.f32.mrf.mxu0
  %v2804 = vadd.f32 %v2668, %v2803
  %v2805 = vpop.f32.mrf.mxu0
  %2806 = vmatprep.mubr.bf16.mxu0 0
  %2807 = vmatmul.mubr.bf16.gmra.mxu0 %v2662
  %v2808 = vpop.f32.mrf.mxu0
  %v2809 = vadd.f32 %v2668, %v2808
  %v2810 = vpop.f32.mrf.mxu0
  %v2811 = vpop.f32.mrf.mxu0
  %v2812 = vadd.f32 %v2668, %v2811
  %v2813 = vpop.f32.mrf.mxu0
  %2814 = vdwg.mxu0
  %v2815 = vmax.f32 %v2753, 0.0
  %v2816 = vmax.f32 %v2756, 0.0
  %v2817 = vmax.f32 %v2761, 0.0
  %v2818 = vmax.f32 %v2764, 0.0
  %v2819 = vmax.f32 %v2769, 0.0
  %v2820 = vmax.f32 %v2772, 0.0
  %v2821 = vmax.f32 %v2777, 0.0
  %v2822 = vmax.f32 %v2780, 0.0
  %v2823 = vmax.f32 %v2785, 0.0
  %v2824 = vmax.f32 %v2788, 0.0
  %v2825 = vmax.f32 %v2793, 0.0
  %v2826 = vmax.f32 %v2796, 0.0
  %v2827 = vmax.f32 %v2801, 0.0
  %v2828 = vmax.f32 %v2804, 0.0
  %v2829 = vmax.f32 %v2809, 0.0
  %v2830 = vmax.f32 %v2812, 0.0
  %v2831 = vpack.c.bf16 %v2816, %v2815
  %v2832 = vpack.c.bf16 %v2818, %v2817
  %v2833 = vpack.c.bf16 %v2820, %v2819
  %v2834 = vpack.c.bf16 %v2822, %v2821
  %v2835 = vpack.c.bf16 %v2824, %v2823
  %v2836 = vpack.c.bf16 %v2826, %v2825
  %v2837 = vpack.c.bf16 %v2828, %v2827
  %v2838 = vpack.c.bf16 %v2830, %v2829
  %v2840 = vlaneseq
  %v2841 = vshrl.u32 %v2840, 7
  %v2842 = vsub.s32 0, %v2841
  %v2843 = vrot.slane %v310, %v2842
  %v2853 = vunpack.c.l.b16 %v302
  %v2854 = vunpack.c.l.b16 %v303
  %v2855 = vunpack.c.l.b16 %v304
  %v2856 = vunpack.c.l.b16 %v305
  %v2857 = vunpack.c.l.b16 %v306
  %v2858 = vunpack.c.l.b16 %v307
  %v2859 = vunpack.c.l.b16 %v308
  %v2860 = vunpack.c.l.b16 %v309
  %v2861 = vpack.c.b16 %v2854, %v2853
  %v2862 = vpack.c.b16 %v2856, %v2855
  %v2863 = vpack.c.b16 %v2858, %v2857
  %v2864 = vpack.c.b16 %v2860, %v2859
  %v2870 = vsel %vm827, %v2831, 0
  %v2873 = vsel %vm827, %v2832, 0
  %v2876 = vsel %vm827, %v2833, 0
  %v2879 = vsel %vm827, %v2834, 0
  %v2882 = vsel %vm827, %v2835, 0
  %v2885 = vsel %vm827, %v2836, 0
  %v2888 = vsel %vm827, %v2837, 0
  %v2891 = vsel %vm827, %v2838, 0
  %2893 = vmatprep.subr.bf16.mxu0 0
  %2894 = vmatpush1.bf16.msra.mxu0 0
  %2895 = vmatprep.subr.bf16.mxu0 0
  %2896 = vmatpush1.bf16.msra.mxu0 0
  %2897 = vmatprep.subr.bf16.mxu0 0
  %2898 = vmatpush1.bf16.msra.mxu0 0
  %2899 = vmatprep.subr.bf16.mxu0 0
  %2900 = vmatpush1.bf16.msra.mxu0 0
  %2901 = vmatprep.subr.bf16.mxu0 0
  %2902 = vmatpush1.bf16.msra.mxu0 %v2864
  %2903 = vmatprep.subr.bf16.mxu0 0
  %2904 = vmatpush1.bf16.msra.mxu0 %v2863
  %2905 = vmatprep.subr.bf16.mxu0 0
  %2906 = vmatpush1.bf16.msra.mxu0 %v2862
  %2907 = vmatprep.subr.bf16.mxu0 0
  %2908 = vmatpush1.bf16.msra.mxu0 %v2861
  %2909 = vmatprep.subr.bf16.mxu0 0
  %2910 = vmatpush2.bf16.msra.mxu0 0
  %2911 = vmatprep.subr.bf16.mxu0 0
  %2912 = vmatpush2.bf16.msra.mxu0 0
  %2913 = vmatprep.subr.bf16.mxu0 0
  %2914 = vmatpush2.bf16.msra.mxu0 0
  %2915 = vmatprep.subr.bf16.mxu0 0
  %2916 = vmatpush2.bf16.msra.mxu0 0
  %2917 = vmatprep.subr.bf16.mxu0 0
  %2918 = vmatpush2.bf16.msra.mxu0 0
  %2919 = vmatprep.subr.bf16.mxu0 0
  %2920 = vmatpush2.bf16.msra.mxu0 0
  %2921 = vmatprep.subr.bf16.mxu0 0
  %2922 = vmatpush2.bf16.msra.mxu0 0
  %2923 = vmatprep.subr.bf16.mxu0 0
  %2924 = vmatpush2.bf16.msra.mxu0 0
  %2925 = vmatprep.mubr.bf16.mxu0 0
  %2926 = vmatmul.mubr.bf16.gmra.mxu0 %v2870
  %v2927 = vpop.f32.mrf.mxu0
  %v2928 = vadd.f32 %v2843, %v2927
  %v2929 = vpop.f32.mrf.mxu0
  %v2930 = vpop.f32.mrf.mxu0
  %v2931 = vadd.f32 %v2843, %v2930
  %v2932 = vpop.f32.mrf.mxu0
  %2933 = vmatprep.mubr.bf16.mxu0 0
  %2934 = vmatmul.mubr.bf16.gmra.mxu0 %v2873
  %v2935 = vpop.f32.mrf.mxu0
  %v2936 = vadd.f32 %v2843, %v2935
  %v2937 = vpop.f32.mrf.mxu0
  %v2938 = vpop.f32.mrf.mxu0
  %v2939 = vadd.f32 %v2843, %v2938
  %v2940 = vpop.f32.mrf.mxu0
  %2941 = vmatprep.mubr.bf16.mxu0 0
  %2942 = vmatmul.mubr.bf16.gmra.mxu0 %v2876
  %v2943 = vpop.f32.mrf.mxu0
  %v2944 = vadd.f32 %v2843, %v2943
  %v2945 = vpop.f32.mrf.mxu0
  %v2946 = vpop.f32.mrf.mxu0
  %v2947 = vadd.f32 %v2843, %v2946
  %v2948 = vpop.f32.mrf.mxu0
  %2949 = vmatprep.mubr.bf16.mxu0 0
  %2950 = vmatmul.mubr.bf16.gmra.mxu0 %v2879
  %v2951 = vpop.f32.mrf.mxu0
  %v2952 = vadd.f32 %v2843, %v2951
  %v2953 = vpop.f32.mrf.mxu0
  %v2954 = vpop.f32.mrf.mxu0
  %v2955 = vadd.f32 %v2843, %v2954
  %v2956 = vpop.f32.mrf.mxu0
  %2957 = vmatprep.mubr.bf16.mxu0 0
  %2958 = vmatmul.mubr.bf16.gmra.mxu0 %v2882
  %v2959 = vpop.f32.mrf.mxu0
  %v2960 = vadd.f32 %v2843, %v2959
  %v2961 = vpop.f32.mrf.mxu0
  %v2962 = vpop.f32.mrf.mxu0
  %v2963 = vadd.f32 %v2843, %v2962
  %v2964 = vpop.f32.mrf.mxu0
  %2965 = vmatprep.mubr.bf16.mxu0 0
  %2966 = vmatmul.mubr.bf16.gmra.mxu0 %v2885
  %v2967 = vpop.f32.mrf.mxu0
  %v2968 = vadd.f32 %v2843, %v2967
  %v2969 = vpop.f32.mrf.mxu0
  %v2970 = vpop.f32.mrf.mxu0
  %v2971 = vadd.f32 %v2843, %v2970
  %v2972 = vpop.f32.mrf.mxu0
  %2973 = vmatprep.mubr.bf16.mxu0 0
  %2974 = vmatmul.mubr.bf16.gmra.mxu0 %v2888
  %v2975 = vpop.f32.mrf.mxu0
  %v2976 = vadd.f32 %v2843, %v2975
  %v2977 = vpop.f32.mrf.mxu0
  %v2978 = vpop.f32.mrf.mxu0
  %v2979 = vadd.f32 %v2843, %v2978
  %v2980 = vpop.f32.mrf.mxu0
  %2981 = vmatprep.mubr.bf16.mxu0 0
  %2982 = vmatmul.mubr.bf16.gmra.mxu0 %v2891
  %v2983 = vpop.f32.mrf.mxu0
  %v2984 = vadd.f32 %v2843, %v2983
  %v2985 = vpop.f32.mrf.mxu0
  %v2986 = vpop.f32.mrf.mxu0
  %v2987 = vadd.f32 %v2843, %v2986
  %v2988 = vpop.f32.mrf.mxu0
  %2989 = vdwg.mxu0
  %v2990 = vpack.c.bf16 %v2931, %v2928
  %v2991 = vpack.c.bf16 %v2939, %v2936
  %v2992 = vpack.c.bf16 %v2947, %v2944
  %v2993 = vpack.c.bf16 %v2955, %v2952
  %v2994 = vpack.c.bf16 %v2963, %v2960
  %v2995 = vpack.c.bf16 %v2971, %v2968
  %v2996 = vpack.c.bf16 %v2979, %v2976
  %v2997 = vpack.c.bf16 %v2987, %v2984
  %v3006 = vunpack.c.l.b16 %v311
  %v3007 = vunpack.c.l.b16 %v312
  %v3008 = vunpack.c.l.b16 %v313
  %v3009 = vunpack.c.l.b16 %v314
  %v3010 = vunpack.c.l.b16 %v315
  %v3011 = vunpack.c.l.b16 %v316
  %v3012 = vunpack.c.l.b16 %v317
  %v3013 = vunpack.c.l.b16 %v318
  %v3014 = vpack.c.b16 %v3007, %v3006
  %v3015 = vpack.c.b16 %v3009, %v3008
  %v3016 = vpack.c.b16 %v3011, %v3010
  %v3017 = vpack.c.b16 %v3013, %v3012
  %3022 = vmatprep.subr.bf16.mxu0 0
  %3023 = vmatpush1.bf16.msra.mxu0 0
  %3024 = vmatprep.subr.bf16.mxu0 0
  %3025 = vmatpush1.bf16.msra.mxu0 0
  %3026 = vmatprep.subr.bf16.mxu0 0
  %3027 = vmatpush1.bf16.msra.mxu0 0
  %3028 = vmatprep.subr.bf16.mxu0 0
  %3029 = vmatpush1.bf16.msra.mxu0 0
  %3030 = vmatprep.subr.bf16.mxu0 0
  %3031 = vmatpush1.bf16.msra.mxu0 %v3017
  %3032 = vmatprep.subr.bf16.mxu0 0
  %3033 = vmatpush1.bf16.msra.mxu0 %v3016
  %3034 = vmatprep.subr.bf16.mxu0 0
  %3035 = vmatpush1.bf16.msra.mxu0 %v3015
  %3036 = vmatprep.subr.bf16.mxu0 0
  %3037 = vmatpush1.bf16.msra.mxu0 %v3014
  %3038 = vmatprep.subr.bf16.mxu0 0
  %3039 = vmatpush2.bf16.msra.mxu0 0
  %3040 = vmatprep.subr.bf16.mxu0 0
  %3041 = vmatpush2.bf16.msra.mxu0 0
  %3042 = vmatprep.subr.bf16.mxu0 0
  %3043 = vmatpush2.bf16.msra.mxu0 0
  %3044 = vmatprep.subr.bf16.mxu0 0
  %3045 = vmatpush2.bf16.msra.mxu0 0
  %3046 = vmatprep.subr.bf16.mxu0 0
  %3047 = vmatpush2.bf16.msra.mxu0 0
  %3048 = vmatprep.subr.bf16.mxu0 0
  %3049 = vmatpush2.bf16.msra.mxu0 0
  %3050 = vmatprep.subr.bf16.mxu0 0
  %3051 = vmatpush2.bf16.msra.mxu0 0
  %3052 = vmatprep.subr.bf16.mxu0 0
  %3053 = vmatpush2.bf16.msra.mxu0 0
  %3054 = vmatprep.mubr.bf16.mxu0 0
  %3055 = vmatmul.mubr.bf16.gmra.mxu0 %v1808
  %v3056 = vpop.f32.mrf.mxu0
  %v3057 = vadd.f32 0.0, %v3056
  %v3058 = vpop.f32.mrf.mxu0
  %v3059 = vpop.f32.mrf.mxu0
  %v3060 = vadd.f32 0.0, %v3059
  %v3061 = vpop.f32.mrf.mxu0
  %3062 = vmatprep.mubr.bf16.mxu0 0
  %3063 = vmatmul.mubr.bf16.gmra.mxu0 %v1811
  %v3064 = vpop.f32.mrf.mxu0
  %v3065 = vadd.f32 0.0, %v3064
  %v3066 = vpop.f32.mrf.mxu0
  %v3067 = vpop.f32.mrf.mxu0
  %v3068 = vadd.f32 0.0, %v3067
  %v3069 = vpop.f32.mrf.mxu0
  %3070 = vmatprep.mubr.bf16.mxu0 0
  %3071 = vmatmul.mubr.bf16.gmra.mxu0 %v1814
  %v3072 = vpop.f32.mrf.mxu0
  %v3073 = vadd.f32 0.0, %v3072
  %v3074 = vpop.f32.mrf.mxu0
  %v3075 = vpop.f32.mrf.mxu0
  %v3076 = vadd.f32 0.0, %v3075
  %v3077 = vpop.f32.mrf.mxu0
  %3078 = vmatprep.mubr.bf16.mxu0 0
  %3079 = vmatmul.mubr.bf16.gmra.mxu0 %v1817
  %v3080 = vpop.f32.mrf.mxu0
  %v3081 = vadd.f32 0.0, %v3080
  %v3082 = vpop.f32.mrf.mxu0
  %v3083 = vpop.f32.mrf.mxu0
  %v3084 = vadd.f32 0.0, %v3083
  %v3085 = vpop.f32.mrf.mxu0
  %3086 = vmatprep.mubr.bf16.mxu0 0
  %3087 = vmatmul.mubr.bf16.gmra.mxu0 %v1820
  %v3088 = vpop.f32.mrf.mxu0
  %v3089 = vadd.f32 0.0, %v3088
  %v3090 = vpop.f32.mrf.mxu0
  %v3091 = vpop.f32.mrf.mxu0
  %v3092 = vadd.f32 0.0, %v3091
  %v3093 = vpop.f32.mrf.mxu0
  %3094 = vmatprep.mubr.bf16.mxu0 0
  %3095 = vmatmul.mubr.bf16.gmra.mxu0 %v1823
  %v3096 = vpop.f32.mrf.mxu0
  %v3097 = vadd.f32 0.0, %v3096
  %v3098 = vpop.f32.mrf.mxu0
  %v3099 = vpop.f32.mrf.mxu0
  %v3100 = vadd.f32 0.0, %v3099
  %v3101 = vpop.f32.mrf.mxu0
  %3102 = vmatprep.mubr.bf16.mxu0 0
  %3103 = vmatmul.mubr.bf16.gmra.mxu0 %v1826
  %v3104 = vpop.f32.mrf.mxu0
  %v3105 = vadd.f32 0.0, %v3104
  %v3106 = vpop.f32.mrf.mxu0
  %v3107 = vpop.f32.mrf.mxu0
  %v3108 = vadd.f32 0.0, %v3107
  %v3109 = vpop.f32.mrf.mxu0
  %3110 = vmatprep.mubr.bf16.mxu0 0
  %3111 = vmatmul.mubr.bf16.gmra.mxu0 %v1829
  %v3112 = vpop.f32.mrf.mxu0
  %v3113 = vadd.f32 0.0, %v3112
  %v3114 = vpop.f32.mrf.mxu0
  %v3115 = vpop.f32.mrf.mxu0
  %v3116 = vadd.f32 0.0, %v3115
  %v3117 = vpop.f32.mrf.mxu0
  %3118 = vdwg.mxu0
  %v3119 = vpack.c.bf16 %v3060, %v3057
  %v3120 = vpack.c.bf16 %v3068, %v3065
  %v3121 = vpack.c.bf16 %v3076, %v3073
  %v3122 = vpack.c.bf16 %v3084, %v3081
  %v3123 = vpack.c.bf16 %v3092, %v3089
  %v3124 = vpack.c.bf16 %v3100, %v3097
  %v3125 = vpack.c.bf16 %v3108, %v3105
  %v3126 = vpack.c.bf16 %v3116, %v3113
  %v3135 = vunpack.c.l.b16 %v320
  %v3136 = vunpack.c.l.b16 %v321
  %v3137 = vunpack.c.l.b16 %v322
  %v3138 = vunpack.c.l.b16 %v323
  %v3139 = vunpack.c.l.b16 %v324
  %v3140 = vunpack.c.l.b16 %v325
  %v3141 = vunpack.c.l.b16 %v326
  %v3142 = vunpack.c.l.b16 %v327
  %v3143 = vpack.c.b16 %v3136, %v3135
  %v3144 = vpack.c.b16 %v3138, %v3137
  %v3145 = vpack.c.b16 %v3140, %v3139
  %v3146 = vpack.c.b16 %v3142, %v3141
  %v3152 = vsel %vm827, %v2990, 0
  %v3155 = vsel %vm827, %v2991, 0
  %v3158 = vsel %vm827, %v2992, 0
  %v3161 = vsel %vm827, %v2993, 0
  %v3164 = vsel %vm827, %v2994, 0
  %v3167 = vsel %vm827, %v2995, 0
  %v3170 = vsel %vm827, %v2996, 0
  %v3173 = vsel %vm827, %v2997, 0
  %3175 = vmatprep.subr.bf16.mxu0 0
  %3176 = vmatpush1.bf16.msra.mxu0 0
  %3177 = vmatprep.subr.bf16.mxu0 0
  %3178 = vmatpush1.bf16.msra.mxu0 0
  %3179 = vmatprep.subr.bf16.mxu0 0
  %3180 = vmatpush1.bf16.msra.mxu0 0
  %3181 = vmatprep.subr.bf16.mxu0 0
  %3182 = vmatpush1.bf16.msra.mxu0 0
  %3183 = vmatprep.subr.bf16.mxu0 0
  %3184 = vmatpush1.bf16.msra.mxu0 %v3146
  %3185 = vmatprep.subr.bf16.mxu0 0
  %3186 = vmatpush1.bf16.msra.mxu0 %v3145
  %3187 = vmatprep.subr.bf16.mxu0 0
  %3188 = vmatpush1.bf16.msra.mxu0 %v3144
  %3189 = vmatprep.subr.bf16.mxu0 0
  %3190 = vmatpush1.bf16.msra.mxu0 %v3143
  %3191 = vmatprep.subr.bf16.mxu0 0
  %3192 = vmatpush2.bf16.msra.mxu0 0
  %3193 = vmatprep.subr.bf16.mxu0 0
  %3194 = vmatpush2.bf16.msra.mxu0 0
  %3195 = vmatprep.subr.bf16.mxu0 0
  %3196 = vmatpush2.bf16.msra.mxu0 0
  %3197 = vmatprep.subr.bf16.mxu0 0
  %3198 = vmatpush2.bf16.msra.mxu0 0
  %3199 = vmatprep.subr.bf16.mxu0 0
  %3200 = vmatpush2.bf16.msra.mxu0 0
  %3201 = vmatprep.subr.bf16.mxu0 0
  %3202 = vmatpush2.bf16.msra.mxu0 0
  %3203 = vmatprep.subr.bf16.mxu0 0
  %3204 = vmatpush2.bf16.msra.mxu0 0
  %3205 = vmatprep.subr.bf16.mxu0 0
  %3206 = vmatpush2.bf16.msra.mxu0 0
  %3207 = vmatprep.mubr.bf16.mxu0 0
  %3208 = vmatmul.mubr.bf16.gmra.mxu0 %v3152
  %v3209 = vpop.f32.mrf.mxu0
  %v3210 = vadd.f32 0.0, %v3209
  %v3211 = vpop.f32.mrf.mxu0
  %v3212 = vpop.f32.mrf.mxu0
  %v3213 = vadd.f32 0.0, %v3212
  %v3214 = vpop.f32.mrf.mxu0
  %3215 = vmatprep.mubr.bf16.mxu0 0
  %3216 = vmatmul.mubr.bf16.gmra.mxu0 %v3155
  %v3217 = vpop.f32.mrf.mxu0
  %v3218 = vadd.f32 0.0, %v3217
  %v3219 = vpop.f32.mrf.mxu0
  %v3220 = vpop.f32.mrf.mxu0
  %v3221 = vadd.f32 0.0, %v3220
  %v3222 = vpop.f32.mrf.mxu0
  %3223 = vmatprep.mubr.bf16.mxu0 0
  %3224 = vmatmul.mubr.bf16.gmra.mxu0 %v3158
  %v3225 = vpop.f32.mrf.mxu0
  %v3226 = vadd.f32 0.0, %v3225
  %v3227 = vpop.f32.mrf.mxu0
  %v3228 = vpop.f32.mrf.mxu0
  %v3229 = vadd.f32 0.0, %v3228
  %v3230 = vpop.f32.mrf.mxu0
  %3231 = vmatprep.mubr.bf16.mxu0 0
  %3232 = vmatmul.mubr.bf16.gmra.mxu0 %v3161
  %v3233 = vpop.f32.mrf.mxu0
  %v3234 = vadd.f32 0.0, %v3233
  %v3235 = vpop.f32.mrf.mxu0
  %v3236 = vpop.f32.mrf.mxu0
  %v3237 = vadd.f32 0.0, %v3236
  %v3238 = vpop.f32.mrf.mxu0
  %3239 = vmatprep.mubr.bf16.mxu0 0
  %3240 = vmatmul.mubr.bf16.gmra.mxu0 %v3164
  %v3241 = vpop.f32.mrf.mxu0
  %v3242 = vadd.f32 0.0, %v3241
  %v3243 = vpop.f32.mrf.mxu0
  %v3244 = vpop.f32.mrf.mxu0
  %v3245 = vadd.f32 0.0, %v3244
  %v3246 = vpop.f32.mrf.mxu0
  %3247 = vmatprep.mubr.bf16.mxu0 0
  %3248 = vmatmul.mubr.bf16.gmra.mxu0 %v3167
  %v3249 = vpop.f32.mrf.mxu0
  %v3250 = vadd.f32 0.0, %v3249
  %v3251 = vpop.f32.mrf.mxu0
  %v3252 = vpop.f32.mrf.mxu0
  %v3253 = vadd.f32 0.0, %v3252
  %v3254 = vpop.f32.mrf.mxu0
  %3255 = vmatprep.mubr.bf16.mxu0 0
  %3256 = vmatmul.mubr.bf16.gmra.mxu0 %v3170
  %v3257 = vpop.f32.mrf.mxu0
  %v3258 = vadd.f32 0.0, %v3257
  %v3259 = vpop.f32.mrf.mxu0
  %v3260 = vpop.f32.mrf.mxu0
  %v3261 = vadd.f32 0.0, %v3260
  %v3262 = vpop.f32.mrf.mxu0
  %3263 = vmatprep.mubr.bf16.mxu0 0
  %3264 = vmatmul.mubr.bf16.gmra.mxu0 %v3173
  %v3265 = vpop.f32.mrf.mxu0
  %v3266 = vadd.f32 0.0, %v3265
  %v3267 = vpop.f32.mrf.mxu0
  %v3268 = vpop.f32.mrf.mxu0
  %v3269 = vadd.f32 0.0, %v3268
  %v3270 = vpop.f32.mrf.mxu0
  %3271 = vdwg.mxu0
  %v3272 = vpack.c.bf16 %v3213, %v3210
  %v3273 = vpack.c.bf16 %v3221, %v3218
  %v3274 = vpack.c.bf16 %v3229, %v3226
  %v3275 = vpack.c.bf16 %v3237, %v3234
  %v3276 = vpack.c.bf16 %v3245, %v3242
  %v3277 = vpack.c.bf16 %v3253, %v3250
  %v3278 = vpack.c.bf16 %v3261, %v3258
  %v3279 = vpack.c.bf16 %v3269, %v3266
  %3280 = vmatprep.subr.bf16.mxu0 0
  %3281 = vmatpush1.bf16.msra.mxu0 %v3279
  %3282 = vmatprep.subr.bf16.mxu0 0
  %3283 = vmatpush1.bf16.msra.mxu0 %v3278
  %3284 = vmatprep.subr.bf16.mxu0 0
  %3285 = vmatpush1.bf16.msra.mxu0 %v3277
  %3286 = vmatprep.subr.bf16.mxu0 0
  %3287 = vmatpush1.bf16.msra.mxu0 %v3276
  %3288 = vmatprep.subr.bf16.mxu0 0
  %3289 = vmatpush1.bf16.msra.mxu0 %v3275
  %3290 = vmatprep.subr.bf16.mxu0 0
  %3291 = vmatpush1.bf16.msra.mxu0 %v3274
  %3292 = vmatprep.subr.bf16.mxu0 0
  %3293 = vmatpush1.bf16.msra.mxu0 %v3273
  %3294 = vmatprep.subr.bf16.mxu0 0
  %3295 = vmatpush1.bf16.msra.mxu0 %v3272
  %3296 = vmatprep.subr.bf16.mxu0 0
  %3297 = vmatpush2.bf16.msra.mxu0 0
  %3298 = vmatprep.subr.bf16.mxu0 0
  %3299 = vmatpush2.bf16.msra.mxu0 0
  %3300 = vmatprep.subr.bf16.mxu0 0
  %3301 = vmatpush2.bf16.msra.mxu0 0
  %3302 = vmatprep.subr.bf16.mxu0 0
  %3303 = vmatpush2.bf16.msra.mxu0 0
  %3304 = vmatprep.subr.bf16.mxu0 0
  %3305 = vmatpush2.bf16.msra.mxu0 0
  %3306 = vmatprep.subr.bf16.mxu0 0
  %3307 = vmatpush2.bf16.msra.mxu0 0
  %3308 = vmatprep.subr.bf16.mxu0 0
  %3309 = vmatpush2.bf16.msra.mxu0 0
  %3310 = vmatprep.subr.bf16.mxu0 0
  %3311 = vmatpush2.bf16.msra.mxu0 0
  %3312 = vmatprep.mubr.bf16.mxu0 0
  %3313 = vmatmul.mubr.bf16.gmra.mxu0 %v1602
  %v3314 = vpop.f32.mrf.mxu0
  %v3315 = vadd.f32 0.0, %v3314
  %v3316 = vpop.f32.mrf.mxu0
  %v3317 = vpop.f32.mrf.mxu0
  %v3318 = vadd.f32 0.0, %v3317
  %v3319 = vpop.f32.mrf.mxu0
  %3320 = vmatprep.mubr.bf16.mxu0 0
  %3321 = vmatmul.mubr.bf16.gmra.mxu0 %v1603
  %v3322 = vpop.f32.mrf.mxu0
  %v3323 = vadd.f32 0.0, %v3322
  %v3324 = vpop.f32.mrf.mxu0
  %v3325 = vpop.f32.mrf.mxu0
  %v3326 = vadd.f32 0.0, %v3325
  %v3327 = vpop.f32.mrf.mxu0
  %3328 = vdwg.mxu0
  %3329 = vmatprep.subr.bf16.mxu0 0
  %3330 = vmatpush1.bf16.msra.mxu0 %v3126
  %3331 = vmatprep.subr.bf16.mxu0 0
  %3332 = vmatpush1.bf16.msra.mxu0 %v3125
  %3333 = vmatprep.subr.bf16.mxu0 0
  %3334 = vmatpush1.bf16.msra.mxu0 %v3124
  %3335 = vmatprep.subr.bf16.mxu0 0
  %3336 = vmatpush1.bf16.msra.mxu0 %v3123
  %3337 = vmatprep.subr.bf16.mxu0 0
  %3338 = vmatpush1.bf16.msra.mxu0 %v3122
  %3339 = vmatprep.subr.bf16.mxu0 0
  %3340 = vmatpush1.bf16.msra.mxu0 %v3121
  %3341 = vmatprep.subr.bf16.mxu0 0
  %3342 = vmatpush1.bf16.msra.mxu0 %v3120
  %3343 = vmatprep.subr.bf16.mxu0 0
  %3344 = vmatpush1.bf16.msra.mxu0 %v3119
  %3345 = vmatprep.subr.bf16.mxu0 0
  %3346 = vmatpush2.bf16.msra.mxu0 0
  %3347 = vmatprep.subr.bf16.mxu0 0
  %3348 = vmatpush2.bf16.msra.mxu0 0
  %3349 = vmatprep.subr.bf16.mxu0 0
  %3350 = vmatpush2.bf16.msra.mxu0 0
  %3351 = vmatprep.subr.bf16.mxu0 0
  %3352 = vmatpush2.bf16.msra.mxu0 0
  %3353 = vmatprep.subr.bf16.mxu0 0
  %3354 = vmatpush2.bf16.msra.mxu0 0
  %3355 = vmatprep.subr.bf16.mxu0 0
  %3356 = vmatpush2.bf16.msra.mxu0 0
  %3357 = vmatprep.subr.bf16.mxu0 0
  %3358 = vmatpush2.bf16.msra.mxu0 0
  %3359 = vmatprep.subr.bf16.mxu0 0
  %3360 = vmatpush2.bf16.msra.mxu0 0
  %3361 = vmatprep.mubr.bf16.mxu0 0
  %3362 = vmatmul.mubr.bf16.gmra.mxu0 %v1628
  %v3363 = vpop.f32.mrf.mxu0
  %v3364 = vadd.f32 %v3315, %v3363
  %v3365 = vpop.f32.mrf.mxu0
  %v3366 = vpop.f32.mrf.mxu0
  %v3367 = vadd.f32 %v3318, %v3366
  %v3368 = vpop.f32.mrf.mxu0
  %3369 = vmatprep.mubr.bf16.mxu0 0
  %3370 = vmatmul.mubr.bf16.gmra.mxu0 %v1629
  %v3371 = vpop.f32.mrf.mxu0
  %v3372 = vadd.f32 %v3323, %v3371
  %v3373 = vpop.f32.mrf.mxu0
  %v3374 = vpop.f32.mrf.mxu0
  %v3375 = vadd.f32 %v3326, %v3374
  %v3376 = vpop.f32.mrf.mxu0
  %3377 = vdwg.mxu0
  %v3379 = vlaneseq
  %v3380 = vshrl.u32 %v3379, 7
  %v3381 = vsub.s32 0, %v3380
  %v3382 = vrot.slane %v319, %v3381
  %v3384 = vadd.f32 %v3364, %v3382
  %v3385 = vadd.f32 %v3367, %v3382
  %v3386 = vadd.f32 %v3372, %v3382
  %v3387 = vadd.f32 %v3375, %v3382
  %v3388 = vsel %vm827, %v3384, 0.0
  %3389 = vadd.xlane.f32.xlu0 %v3388
  %v3390 = vpop.xlane.xlu0 %3389
  %v3391 = vsel %vm827, %v3385, 0.0
  %3392 = vadd.xlane.f32.xlu0 %v3391
  %v3393 = vpop.xlane.xlu0 %3392
  %v3394 = vsel %vm827, %v3386, 0.0
  %3395 = vadd.xlane.f32.xlu0 %v3394
  %v3396 = vpop.xlane.xlu0 %3395
  %v3397 = vsel %vm827, %v3387, 0.0
  %3398 = vadd.xlane.f32.xlu0 %v3397
  %v3399 = vpop.xlane.xlu0 %3398
  %v3400 = vmul.f32 %v3390, %v2056
  %v3401 = vmul.f32 %v3393, %v2056
  %v3402 = vmul.f32 %v3396, %v2056
  %v3403 = vmul.f32 %v3399, %v2056
  %v3404 = vsub.f32 %v3384, %v3400
  %v3405 = vsub.f32 %v3385, %v3401
  %v3406 = vsub.f32 %v3386, %v3402
  %v3407 = vsub.f32 %v3387, %v3403
  %v3408 = vmul.f32 %v3404, %v3404
  %v3409 = vmul.f32 %v3405, %v3405
  %v3410 = vmul.f32 %v3406, %v3406
  %v3411 = vmul.f32 %v3407, %v3407
  %v3412 = vsel %vm827, %v3408, 0.0
  %3413 = vadd.xlane.f32.xlu0 %v3412
  %v3414 = vpop.xlane.xlu0 %3413
  %v3415 = vsel %vm827, %v3409, 0.0
  %3416 = vadd.xlane.f32.xlu0 %v3415
  %v3417 = vpop.xlane.xlu0 %3416
  %v3418 = vsel %vm827, %v3410, 0.0
  %3419 = vadd.xlane.f32.xlu0 %v3418
  %v3420 = vpop.xlane.xlu0 %3419
  %v3421 = vsel %vm827, %v3411, 0.0
  %3422 = vadd.xlane.f32.xlu0 %v3421
  %v3423 = vpop.xlane.xlu0 %3422
  %v3424 = vmul.f32 %v3414, %v2056
  %v3425 = vmul.f32 %v3417, %v2056
  %v3426 = vmul.f32 %v3420, %v2056
  %v3427 = vmul.f32 %v3423, %v2056
  %v3428 = vadd.f32 %v3424, 1e-05
  %v3429 = vadd.f32 %v3425, 1e-05
  %v3430 = vadd.f32 %v3426, 1e-05
  %v3431 = vadd.f32 %v3427, 1e-05
  %v3432 = vrsqrt.pop %v3428
  %v3433 = vrsqrt.pop %v3429
  %v3434 = vrsqrt.pop %v3430
  %v3435 = vrsqrt.pop %v3431
  %v3436 = vmul.f32 %v3404, %v3432
  %v3437 = vmul.f32 %v3405, %v3433
  %v3438 = vmul.f32 %v3406, %v3434
  %v3439 = vmul.f32 %v3407, %v3435
  %v3441 = vlaneseq
  %v3442 = vshrl.u32 %v3441, 7
  %v3443 = vsub.s32 0, %v3442
  %v3444 = vrot.slane %v328, %v3443
  %v3446 = vmul.f32 %v3436, %v3444
  %v3447 = vmul.f32 %v3437, %v3444
  %v3448 = vmul.f32 %v3438, %v3444
  %v3449 = vmul.f32 %v3439, %v3444
  %v3451 = vlaneseq
  %v3452 = vshrl.u32 %v3451, 7
  %v3453 = vsub.s32 0, %v3452
  %v3454 = vrot.slane %v329, %v3453
  %v3456 = vadd.f32 %v3446, %v3454
  %v3457 = vadd.f32 %v3447, %v3454
  %v3458 = vadd.f32 %v3448, %v3454
  %v3459 = vadd.f32 %v3449, %v3454
  %v3460 = vmax.f32 %v3456, 0.0
  %v3461 = vmax.f32 %v3457, 0.0
  %v3462 = vmax.f32 %v3458, 0.0
  %v3463 = vmax.f32 %v3459, 0.0
  %v3464 = vpack.c.bf16 %v3461, %v3460
  %v3465 = vpack.c.bf16 %v3463, %v3462
  %v3467 = vlaneseq
  %v3468 = vshrl.u32 %v3467, 7
  %v3469 = vsub.s32 0, %v3468
  %v3470 = vrot.slane %v338, %v3469
  %v3480 = vunpack.c.l.b16 %v330
  %v3481 = vunpack.c.l.b16 %v331
  %v3482 = vunpack.c.l.b16 %v332
  %v3483 = vunpack.c.l.b16 %v333
  %v3484 = vunpack.c.l.b16 %v334
  %v3485 = vunpack.c.l.b16 %v335
  %v3486 = vunpack.c.l.b16 %v336
  %v3487 = vunpack.c.l.b16 %v337
  %v3488 = vpack.c.b16 %v3481, %v3480
  %v3489 = vpack.c.b16 %v3483, %v3482
  %v3490 = vpack.c.b16 %v3485, %v3484
  %v3491 = vpack.c.b16 %v3487, %v3486
  %v3497 = vsel %vm827, %v3464, 0
  %v3500 = vsel %vm827, %v3465, 0
  %3502 = vmatprep.subr.bf16.mxu0 0
  %3503 = vmatpush1.bf16.msra.mxu0 0
  %3504 = vmatprep.subr.bf16.mxu0 0
  %3505 = vmatpush1.bf16.msra.mxu0 0
  %3506 = vmatprep.subr.bf16.mxu0 0
  %3507 = vmatpush1.bf16.msra.mxu0 0
  %3508 = vmatprep.subr.bf16.mxu0 0
  %3509 = vmatpush1.bf16.msra.mxu0 0
  %3510 = vmatprep.subr.bf16.mxu0 0
  %3511 = vmatpush1.bf16.msra.mxu0 %v3491
  %3512 = vmatprep.subr.bf16.mxu0 0
  %3513 = vmatpush1.bf16.msra.mxu0 %v3490
  %3514 = vmatprep.subr.bf16.mxu0 0
  %3515 = vmatpush1.bf16.msra.mxu0 %v3489
  %3516 = vmatprep.subr.bf16.mxu0 0
  %3517 = vmatpush1.bf16.msra.mxu0 %v3488
  %3518 = vmatprep.subr.bf16.mxu0 0
  %3519 = vmatpush2.bf16.msra.mxu0 0
  %3520 = vmatprep.subr.bf16.mxu0 0
  %3521 = vmatpush2.bf16.msra.mxu0 0
  %3522 = vmatprep.subr.bf16.mxu0 0
  %3523 = vmatpush2.bf16.msra.mxu0 0
  %3524 = vmatprep.subr.bf16.mxu0 0
  %3525 = vmatpush2.bf16.msra.mxu0 0
  %3526 = vmatprep.subr.bf16.mxu0 0
  %3527 = vmatpush2.bf16.msra.mxu0 0
  %3528 = vmatprep.subr.bf16.mxu0 0
  %3529 = vmatpush2.bf16.msra.mxu0 0
  %3530 = vmatprep.subr.bf16.mxu0 0
  %3531 = vmatpush2.bf16.msra.mxu0 0
  %3532 = vmatprep.subr.bf16.mxu0 0
  %3533 = vmatpush2.bf16.msra.mxu0 0
  %3534 = vmatprep.mubr.bf16.mxu0 0
  %3535 = vmatmul.mubr.bf16.gmra.mxu0 %v3497
  %v3536 = vpop.f32.mrf.mxu0
  %v3537 = vadd.f32 %v3470, %v3536
  %v3538 = vpop.f32.mrf.mxu0
  %v3539 = vpop.f32.mrf.mxu0
  %v3540 = vadd.f32 %v3470, %v3539
  %v3541 = vpop.f32.mrf.mxu0
  %3542 = vmatprep.mubr.bf16.mxu0 0
  %3543 = vmatmul.mubr.bf16.gmra.mxu0 %v3500
  %v3544 = vpop.f32.mrf.mxu0
  %v3545 = vadd.f32 %v3470, %v3544
  %v3546 = vpop.f32.mrf.mxu0
  %v3547 = vpop.f32.mrf.mxu0
  %v3548 = vadd.f32 %v3470, %v3547
  %v3549 = vpop.f32.mrf.mxu0
  %3550 = vdwg.mxu0
  %v3551 = vpack.c.bf16 %v3540, %v3537
  %v3552 = vpack.c.bf16 %v3548, %v3545
  %3553 = vxpose.xlu0.c.b16.start [1/8] %v1628, 128
  %3554 = vxpose.xlu0.c.b16.cont [2/8] %v1629, 128
  %3555 = vxpose.xlu0.c.b16.cont [3/8] 0, 128
  %3556 = vxpose.xlu0.c.b16.cont [4/8] 0, 128
  %3557 = vxpose.xlu0.c.b16.cont [5/8] 0, 128
  %3558 = vxpose.xlu0.c.b16.cont [6/8] 0, 128
  %3559 = vxpose.xlu0.c.b16.cont [7/8] 0, 128
  %3560 = vxpose.xlu0.c.b16.end [8/8] 0, 128
  %v3561 = vpop.trf.xlu0
  %v3562 = vpop.trf.xlu0
  %v3563 = vpop.trf.xlu0
  %v3564 = vpop.trf.xlu0
  %v3565 = vpop.trf.xlu0
  %v3566 = vpop.trf.xlu0
  %v3567 = vpop.trf.xlu0
  %v3568 = vpop.trf.xlu0
  %v3570 = vsel %vm2226, %v3561, 0
  %v3573 = vsel %vm2226, %v3562, 0
  %v3576 = vsel %vm2226, %v3563, 0
  %v3579 = vsel %vm2226, %v3564, 0
  %v3582 = vsel %vm2226, %v3565, 0
  %v3585 = vsel %vm2226, %v3566, 0
  %v3588 = vsel %vm2226, %v3567, 0
  %v3591 = vsel %vm2226, %v3568, 0
  %3593 = vmatprep.subr.bf16.mxu0 0
  %3594 = vmatpush1.bf16.msra.mxu0 0
  %3595 = vmatprep.subr.bf16.mxu0 0
  %3596 = vmatpush1.bf16.msra.mxu0 0
  %3597 = vmatprep.subr.bf16.mxu0 0
  %3598 = vmatpush1.bf16.msra.mxu0 0
  %3599 = vmatprep.subr.bf16.mxu0 0
  %3600 = vmatpush1.bf16.msra.mxu0 0
  %3601 = vmatprep.subr.bf16.mxu0 0
  %3602 = vmatpush1.bf16.msra.mxu0 0
  %3603 = vmatprep.subr.bf16.mxu0 0
  %3604 = vmatpush1.bf16.msra.mxu0 0
  %3605 = vmatprep.subr.bf16.mxu0 0
  %3606 = vmatpush1.bf16.msra.mxu0 %v3552
  %3607 = vmatprep.subr.bf16.mxu0 0
  %3608 = vmatpush1.bf16.msra.mxu0 %v3551
  %3609 = vmatprep.subr.bf16.mxu0 0
  %3610 = vmatpush2.bf16.msra.mxu0 0
  %3611 = vmatprep.subr.bf16.mxu0 0
  %3612 = vmatpush2.bf16.msra.mxu0 0
  %3613 = vmatprep.subr.bf16.mxu0 0
  %3614 = vmatpush2.bf16.msra.mxu0 0
  %3615 = vmatprep.subr.bf16.mxu0 0
  %3616 = vmatpush2.bf16.msra.mxu0 0
  %3617 = vmatprep.subr.bf16.mxu0 0
  %3618 = vmatpush2.bf16.msra.mxu0 0
  %3619 = vmatprep.subr.bf16.mxu0 0
  %3620 = vmatpush2.bf16.msra.mxu0 0
  %3621 = vmatprep.subr.bf16.mxu0 0
  %3622 = vmatpush2.bf16.msra.mxu0 0
  %3623 = vmatprep.subr.bf16.mxu0 0
  %3624 = vmatpush2.bf16.msra.mxu0 0
  %3625 = vmatprep.mubr.bf16.mxu0 0
  %3626 = vmatmul.mubr.bf16.gmra.mxu0 %v3570
  %v3627 = vpop.f32.mrf.mxu0
  %v3628 = vadd.f32 0.0, %v3627
  %v3629 = vpop.f32.mrf.mxu0
  %v3630 = vpop.f32.mrf.mxu0
  %v3631 = vadd.f32 0.0, %v3630
  %v3632 = vpop.f32.mrf.mxu0
  %3633 = vmatprep.mubr.bf16.mxu0 0
  %3634 = vmatmul.mubr.bf16.gmra.mxu0 %v3573
  %v3635 = vpop.f32.mrf.mxu0
  %v3636 = vadd.f32 0.0, %v3635
  %v3637 = vpop.f32.mrf.mxu0
  %v3638 = vpop.f32.mrf.mxu0
  %v3639 = vadd.f32 0.0, %v3638
  %v3640 = vpop.f32.mrf.mxu0
  %3641 = vmatprep.mubr.bf16.mxu0 0
  %3642 = vmatmul.mubr.bf16.gmra.mxu0 %v3576
  %v3643 = vpop.f32.mrf.mxu0
  %v3644 = vadd.f32 0.0, %v3643
  %v3645 = vpop.f32.mrf.mxu0
  %v3646 = vpop.f32.mrf.mxu0
  %v3647 = vadd.f32 0.0, %v3646
  %v3648 = vpop.f32.mrf.mxu0
  %3649 = vmatprep.mubr.bf16.mxu0 0
  %3650 = vmatmul.mubr.bf16.gmra.mxu0 %v3579
  %v3651 = vpop.f32.mrf.mxu0
  %v3652 = vadd.f32 0.0, %v3651
  %v3653 = vpop.f32.mrf.mxu0
  %v3654 = vpop.f32.mrf.mxu0
  %v3655 = vadd.f32 0.0, %v3654
  %v3656 = vpop.f32.mrf.mxu0
  %3657 = vmatprep.mubr.bf16.mxu0 0
  %3658 = vmatmul.mubr.bf16.gmra.mxu0 %v3582
  %v3659 = vpop.f32.mrf.mxu0
  %v3660 = vadd.f32 0.0, %v3659
  %v3661 = vpop.f32.mrf.mxu0
  %v3662 = vpop.f32.mrf.mxu0
  %v3663 = vadd.f32 0.0, %v3662
  %v3664 = vpop.f32.mrf.mxu0
  %3665 = vmatprep.mubr.bf16.mxu0 0
  %3666 = vmatmul.mubr.bf16.gmra.mxu0 %v3585
  %v3667 = vpop.f32.mrf.mxu0
  %v3668 = vadd.f32 0.0, %v3667
  %v3669 = vpop.f32.mrf.mxu0
  %v3670 = vpop.f32.mrf.mxu0
  %v3671 = vadd.f32 0.0, %v3670
  %v3672 = vpop.f32.mrf.mxu0
  %3673 = vmatprep.mubr.bf16.mxu0 0
  %3674 = vmatmul.mubr.bf16.gmra.mxu0 %v3588
  %v3675 = vpop.f32.mrf.mxu0
  %v3676 = vadd.f32 0.0, %v3675
  %v3677 = vpop.f32.mrf.mxu0
  %v3678 = vpop.f32.mrf.mxu0
  %v3679 = vadd.f32 0.0, %v3678
  %v3680 = vpop.f32.mrf.mxu0
  %3681 = vmatprep.mubr.bf16.mxu0 0
  %3682 = vmatmul.mubr.bf16.gmra.mxu0 %v3591
  %v3683 = vpop.f32.mrf.mxu0
  %v3684 = vadd.f32 0.0, %v3683
  %v3685 = vpop.f32.mrf.mxu0
  %v3686 = vpop.f32.mrf.mxu0
  %v3687 = vadd.f32 0.0, %v3686
  %v3688 = vpop.f32.mrf.mxu0
  %3689 = vdwg.mxu0
  %v3690 = vsel %vm827, %v3628, 0.0
  %3691 = vadd.xlane.f32.xlu0 %v3690
  %v3692 = vpop.xlane.xlu0 %3691
  %v3693 = vsel %vm827, %v3631, 0.0
  %3694 = vadd.xlane.f32.xlu0 %v3693
  %v3695 = vpop.xlane.xlu0 %3694
  %v3696 = vsel %vm827, %v3636, 0.0
  %3697 = vadd.xlane.f32.xlu0 %v3696
  %v3698 = vpop.xlane.xlu0 %3697
  %v3699 = vsel %vm827, %v3639, 0.0
  %3700 = vadd.xlane.f32.xlu0 %v3699
  %v3701 = vpop.xlane.xlu0 %3700
  %v3702 = vsel %vm827, %v3644, 0.0
  %3703 = vadd.xlane.f32.xlu0 %v3702
  %v3704 = vpop.xlane.xlu0 %3703
  %v3705 = vsel %vm827, %v3647, 0.0
  %3706 = vadd.xlane.f32.xlu0 %v3705
  %v3707 = vpop.xlane.xlu0 %3706
  %v3708 = vsel %vm827, %v3652, 0.0
  %3709 = vadd.xlane.f32.xlu0 %v3708
  %v3710 = vpop.xlane.xlu0 %3709
  %v3711 = vsel %vm827, %v3655, 0.0
  %3712 = vadd.xlane.f32.xlu0 %v3711
  %v3713 = vpop.xlane.xlu0 %3712
  %v3714 = vsel %vm827, %v3660, 0.0
  %3715 = vadd.xlane.f32.xlu0 %v3714
  %v3716 = vpop.xlane.xlu0 %3715
  %v3717 = vsel %vm827, %v3663, 0.0
  %3718 = vadd.xlane.f32.xlu0 %v3717
  %v3719 = vpop.xlane.xlu0 %3718
  %v3720 = vsel %vm827, %v3668, 0.0
  %3721 = vadd.xlane.f32.xlu0 %v3720
  %v3722 = vpop.xlane.xlu0 %3721
  %v3723 = vsel %vm827, %v3671, 0.0
  %3724 = vadd.xlane.f32.xlu0 %v3723
  %v3725 = vpop.xlane.xlu0 %3724
  %v3726 = vsel %vm827, %v3676, 0.0
  %3727 = vadd.xlane.f32.xlu0 %v3726
  %v3728 = vpop.xlane.xlu0 %3727
  %v3729 = vsel %vm827, %v3679, 0.0
  %3730 = vadd.xlane.f32.xlu0 %v3729
  %v3731 = vpop.xlane.xlu0 %3730
  %v3732 = vsel %vm827, %v3684, 0.0
  %3733 = vadd.xlane.f32.xlu0 %v3732
  %v3734 = vpop.xlane.xlu0 %3733
  %v3735 = vsel %vm827, %v3687, 0.0
  %3736 = vadd.xlane.f32.xlu0 %v3735
  %v3737 = vpop.xlane.xlu0 %3736
  %v3738 = vmul.f32 %v3692, %v2056
  %v3739 = vmul.f32 %v3695, %v2056
  %v3740 = vmul.f32 %v3698, %v2056
  %v3741 = vmul.f32 %v3701, %v2056
  %v3742 = vmul.f32 %v3704, %v2056
  %v3743 = vmul.f32 %v3707, %v2056
  %v3744 = vmul.f32 %v3710, %v2056
  %v3745 = vmul.f32 %v3713, %v2056
  %v3746 = vmul.f32 %v3716, %v2056
  %v3747 = vmul.f32 %v3719, %v2056
  %v3748 = vmul.f32 %v3722, %v2056
  %v3749 = vmul.f32 %v3725, %v2056
  %v3750 = vmul.f32 %v3728, %v2056
  %v3751 = vmul.f32 %v3731, %v2056
  %v3752 = vmul.f32 %v3734, %v2056
  %v3753 = vmul.f32 %v3737, %v2056
  %v3754 = vsub.f32 %v3628, %v3738
  %v3755 = vsub.f32 %v3631, %v3739
  %v3756 = vsub.f32 %v3636, %v3740
  %v3757 = vsub.f32 %v3639, %v3741
  %v3758 = vsub.f32 %v3644, %v3742
  %v3759 = vsub.f32 %v3647, %v3743
  %v3760 = vsub.f32 %v3652, %v3744
  %v3761 = vsub.f32 %v3655, %v3745
  %v3762 = vsub.f32 %v3660, %v3746
  %v3763 = vsub.f32 %v3663, %v3747
  %v3764 = vsub.f32 %v3668, %v3748
  %v3765 = vsub.f32 %v3671, %v3749
  %v3766 = vsub.f32 %v3676, %v3750
  %v3767 = vsub.f32 %v3679, %v3751
  %v3768 = vsub.f32 %v3684, %v3752
  %v3769 = vsub.f32 %v3687, %v3753
  %v3770 = vmul.f32 %v3754, %v3754
  %v3771 = vmul.f32 %v3755, %v3755
  %v3772 = vmul.f32 %v3756, %v3756
  %v3773 = vmul.f32 %v3757, %v3757
  %v3774 = vmul.f32 %v3758, %v3758
  %v3775 = vmul.f32 %v3759, %v3759
  %v3776 = vmul.f32 %v3760, %v3760
  %v3777 = vmul.f32 %v3761, %v3761
  %v3778 = vmul.f32 %v3762, %v3762
  %v3779 = vmul.f32 %v3763, %v3763
  %v3780 = vmul.f32 %v3764, %v3764
  %v3781 = vmul.f32 %v3765, %v3765
  %v3782 = vmul.f32 %v3766, %v3766
  %v3783 = vmul.f32 %v3767, %v3767
  %v3784 = vmul.f32 %v3768, %v3768
  %v3785 = vmul.f32 %v3769, %v3769
  %v3786 = vsel %vm827, %v3770, 0.0
  %3787 = vadd.xlane.f32.xlu0 %v3786
  %v3788 = vpop.xlane.xlu0 %3787
  %v3789 = vsel %vm827, %v3771, 0.0
  %3790 = vadd.xlane.f32.xlu0 %v3789
  %v3791 = vpop.xlane.xlu0 %3790
  %v3792 = vsel %vm827, %v3772, 0.0
  %3793 = vadd.xlane.f32.xlu0 %v3792
  %v3794 = vpop.xlane.xlu0 %3793
  %v3795 = vsel %vm827, %v3773, 0.0
  %3796 = vadd.xlane.f32.xlu0 %v3795
  %v3797 = vpop.xlane.xlu0 %3796
  %v3798 = vsel %vm827, %v3774, 0.0
  %3799 = vadd.xlane.f32.xlu0 %v3798
  %v3800 = vpop.xlane.xlu0 %3799
  %v3801 = vsel %vm827, %v3775, 0.0
  %3802 = vadd.xlane.f32.xlu0 %v3801
  %v3803 = vpop.xlane.xlu0 %3802
  %v3804 = vsel %vm827, %v3776, 0.0
  %3805 = vadd.xlane.f32.xlu0 %v3804
  %v3806 = vpop.xlane.xlu0 %3805
  %v3807 = vsel %vm827, %v3777, 0.0
  %3808 = vadd.xlane.f32.xlu0 %v3807
  %v3809 = vpop.xlane.xlu0 %3808
  %v3810 = vsel %vm827, %v3778, 0.0
  %3811 = vadd.xlane.f32.xlu0 %v3810
  %v3812 = vpop.xlane.xlu0 %3811
  %v3813 = vsel %vm827, %v3779, 0.0
  %3814 = vadd.xlane.f32.xlu0 %v3813
  %v3815 = vpop.xlane.xlu0 %3814
  %v3816 = vsel %vm827, %v3780, 0.0
  %3817 = vadd.xlane.f32.xlu0 %v3816
  %v3818 = vpop.xlane.xlu0 %3817
  %v3819 = vsel %vm827, %v3781, 0.0
  %3820 = vadd.xlane.f32.xlu0 %v3819
  %v3821 = vpop.xlane.xlu0 %3820
  %v3822 = vsel %vm827, %v3782, 0.0
  %3823 = vadd.xlane.f32.xlu0 %v3822
  %v3824 = vpop.xlane.xlu0 %3823
  %v3825 = vsel %vm827, %v3783, 0.0
  %3826 = vadd.xlane.f32.xlu0 %v3825
  %v3827 = vpop.xlane.xlu0 %3826
  %v3828 = vsel %vm827, %v3784, 0.0
  %3829 = vadd.xlane.f32.xlu0 %v3828
  %v3830 = vpop.xlane.xlu0 %3829
  %v3831 = vsel %vm827, %v3785, 0.0
  %3832 = vadd.xlane.f32.xlu0 %v3831
  %v3833 = vpop.xlane.xlu0 %3832
  %v3834 = vmul.f32 %v3788, %v2056
  %v3835 = vmul.f32 %v3791, %v2056
  %v3836 = vmul.f32 %v3794, %v2056
  %v3837 = vmul.f32 %v3797, %v2056
  %v3838 = vmul.f32 %v3800, %v2056
  %v3839 = vmul.f32 %v3803, %v2056
  %v3840 = vmul.f32 %v3806, %v2056
  %v3841 = vmul.f32 %v3809, %v2056
  %v3842 = vmul.f32 %v3812, %v2056
  %v3843 = vmul.f32 %v3815, %v2056
  %v3844 = vmul.f32 %v3818, %v2056
  %v3845 = vmul.f32 %v3821, %v2056
  %v3846 = vmul.f32 %v3824, %v2056
  %v3847 = vmul.f32 %v3827, %v2056
  %v3848 = vmul.f32 %v3830, %v2056
  %v3849 = vmul.f32 %v3833, %v2056
  %v3850 = vadd.f32 %v3834, 1e-05
  %v3851 = vadd.f32 %v3835, 1e-05
  %v3852 = vadd.f32 %v3836, 1e-05
  %v3853 = vadd.f32 %v3837, 1e-05
  %v3854 = vadd.f32 %v3838, 1e-05
  %v3855 = vadd.f32 %v3839, 1e-05
  %v3856 = vadd.f32 %v3840, 1e-05
  %v3857 = vadd.f32 %v3841, 1e-05
  %v3858 = vadd.f32 %v3842, 1e-05
  %v3859 = vadd.f32 %v3843, 1e-05
  %v3860 = vadd.f32 %v3844, 1e-05
  %v3861 = vadd.f32 %v3845, 1e-05
  %v3862 = vadd.f32 %v3846, 1e-05
  %v3863 = vadd.f32 %v3847, 1e-05
  %v3864 = vadd.f32 %v3848, 1e-05
  %v3865 = vadd.f32 %v3849, 1e-05
  %v3866 = vrsqrt.pop %v3850
  %v3867 = vrsqrt.pop %v3851
  %v3868 = vrsqrt.pop %v3852
  %v3869 = vrsqrt.pop %v3853
  %v3870 = vrsqrt.pop %v3854
  %v3871 = vrsqrt.pop %v3855
  %v3872 = vrsqrt.pop %v3856
  %v3873 = vrsqrt.pop %v3857
  %v3874 = vrsqrt.pop %v3858
  %v3875 = vrsqrt.pop %v3859
  %v3876 = vrsqrt.pop %v3860
  %v3877 = vrsqrt.pop %v3861
  %v3878 = vrsqrt.pop %v3862
  %v3879 = vrsqrt.pop %v3863
  %v3880 = vrsqrt.pop %v3864
  %v3881 = vrsqrt.pop %v3865
  %v3882 = vmul.f32 %v3754, %v3866
  %v3883 = vmul.f32 %v3755, %v3867
  %v3884 = vmul.f32 %v3756, %v3868
  %v3885 = vmul.f32 %v3757, %v3869
  %v3886 = vmul.f32 %v3758, %v3870
  %v3887 = vmul.f32 %v3759, %v3871
  %v3888 = vmul.f32 %v3760, %v3872
  %v3889 = vmul.f32 %v3761, %v3873
  %v3890 = vmul.f32 %v3762, %v3874
  %v3891 = vmul.f32 %v3763, %v3875
  %v3892 = vmul.f32 %v3764, %v3876
  %v3893 = vmul.f32 %v3765, %v3877
  %v3894 = vmul.f32 %v3766, %v3878
  %v3895 = vmul.f32 %v3767, %v3879
  %v3896 = vmul.f32 %v3768, %v3880
  %v3897 = vmul.f32 %v3769, %v3881
  %v3899 = vlaneseq
  %v3900 = vshrl.u32 %v3899, 7
  %v3901 = vsub.s32 0, %v3900
  %v3902 = vrot.slane %v339, %v3901
  %v3904 = vmul.f32 %v3882, %v3902
  %v3905 = vmul.f32 %v3883, %v3902
  %v3906 = vmul.f32 %v3884, %v3902
  %v3907 = vmul.f32 %v3885, %v3902
  %v3908 = vmul.f32 %v3886, %v3902
  %v3909 = vmul.f32 %v3887, %v3902
  %v3910 = vmul.f32 %v3888, %v3902
  %v3911 = vmul.f32 %v3889, %v3902
  %v3912 = vmul.f32 %v3890, %v3902
  %v3913 = vmul.f32 %v3891, %v3902
  %v3914 = vmul.f32 %v3892, %v3902
  %v3915 = vmul.f32 %v3893, %v3902
  %v3916 = vmul.f32 %v3894, %v3902
  %v3917 = vmul.f32 %v3895, %v3902
  %v3918 = vmul.f32 %v3896, %v3902
  %v3919 = vmul.f32 %v3897, %v3902
  %v3921 = vlaneseq
  %v3922 = vshrl.u32 %v3921, 7
  %v3923 = vsub.s32 0, %v3922
  %v3924 = vrot.slane %v340, %v3923
  %v3926 = vadd.f32 %v3904, %v3924
  %v3927 = vadd.f32 %v3905, %v3924
  %v3928 = vadd.f32 %v3906, %v3924
  %v3929 = vadd.f32 %v3907, %v3924
  %v3930 = vadd.f32 %v3908, %v3924
  %v3931 = vadd.f32 %v3909, %v3924
  %v3932 = vadd.f32 %v3910, %v3924
  %v3933 = vadd.f32 %v3911, %v3924
  %v3934 = vadd.f32 %v3912, %v3924
  %v3935 = vadd.f32 %v3913, %v3924
  %v3936 = vadd.f32 %v3914, %v3924
  %v3937 = vadd.f32 %v3915, %v3924
  %v3938 = vadd.f32 %v3916, %v3924
  %v3939 = vadd.f32 %v3917, %v3924
  %v3940 = vadd.f32 %v3918, %v3924
  %v3941 = vadd.f32 %v3919, %v3924
  %v3942 = vpack.c.bf16 %v3927, %v3926
  %v3943 = vpack.c.bf16 %v3929, %v3928
  %v3944 = vpack.c.bf16 %v3931, %v3930
  %v3945 = vpack.c.bf16 %v3933, %v3932
  %v3946 = vpack.c.bf16 %v3935, %v3934
  %v3947 = vpack.c.bf16 %v3937, %v3936
  %v3948 = vpack.c.bf16 %v3939, %v3938
  %v3949 = vpack.c.bf16 %v3941, %v3940
  %3958 = vrot.lane.b32.xlu0 %v1568, 64
  %v3959 = vpop.permute.xlu0 %3958
  %3960 = vrot.lane.b32.xlu0 %v1569, 64
  %v3961 = vpop.permute.xlu0 %3960
  %3962 = vrot.lane.b32.xlu0 %v1570, 64
  %v3963 = vpop.permute.xlu0 %3962
  %3964 = vrot.lane.b32.xlu0 %v1571, 64
  %v3965 = vpop.permute.xlu0 %3964
  %3966 = vrot.lane.b32.xlu0 %v1572, 64
  %v3967 = vpop.permute.xlu0 %3966
  %3968 = vrot.lane.b32.xlu0 %v1573, 64
  %v3969 = vpop.permute.xlu0 %3968
  %3970 = vrot.lane.b32.xlu0 %v1574, 64
  %v3971 = vpop.permute.xlu0 %3970
  %3972 = vrot.lane.b32.xlu0 %v1575, 64
  %v3973 = vpop.permute.xlu0 %3972
  %v3976 = vsel %vm827, %v3942, %v3959
  %v3980 = vsel %vm827, %v3943, %v3961
  %v3984 = vsel %vm827, %v3944, %v3963
  %v3988 = vsel %vm827, %v3945, %v3965
  %v3992 = vsel %vm827, %v3946, %v3967
  %v3996 = vsel %vm827, %v3947, %v3969
  %v4000 = vsel %vm827, %v3948, %v3971
  %v4004 = vsel %vm827, %v3949, %v3973
  %v4007 = vlaneseq
  %v4008 = vshrl.u32 %v4007, 7
  %v4009 = vsub.s32 0, %v4008
  %v4010 = vrot.slane %v357, %v4009
  %v4028 = vunpack.c.l.b16 %v341
  %v4029 = vunpack.c.l.b16 %v342
  %v4030 = vunpack.c.l.b16 %v343
  %v4031 = vunpack.c.l.b16 %v344
  %v4032 = vunpack.c.l.b16 %v345
  %v4033 = vunpack.c.l.b16 %v346
  %v4034 = vunpack.c.l.b16 %v347
  %v4035 = vunpack.c.l.b16 %v348
  %v4036 = vunpack.c.l.b16 %v349
  %v4037 = vunpack.c.l.b16 %v350
  %v4038 = vunpack.c.l.b16 %v351
  %v4039 = vunpack.c.l.b16 %v352
  %v4040 = vunpack.c.l.b16 %v353
  %v4041 = vunpack.c.l.b16 %v354
  %v4042 = vunpack.c.l.b16 %v355
  %v4043 = vunpack.c.l.b16 %v356
  %v4044 = vpack.c.b16 %v4029, %v4028
  %v4045 = vpack.c.b16 %v4031, %v4030
  %v4046 = vpack.c.b16 %v4033, %v4032
  %v4047 = vpack.c.b16 %v4035, %v4034
  %v4048 = vpack.c.b16 %v4037, %v4036
  %v4049 = vpack.c.b16 %v4039, %v4038
  %v4050 = vpack.c.b16 %v4041, %v4040
  %v4051 = vpack.c.b16 %v4043, %v4042
  %4060 = vmatprep.subr.bf16.mxu0 0
  %4061 = vmatpush1.bf16.msra.mxu0 %v4051
  %4062 = vmatprep.subr.bf16.mxu0 0
  %4063 = vmatpush1.bf16.msra.mxu0 %v4050
  %4064 = vmatprep.subr.bf16.mxu0 0
  %4065 = vmatpush1.bf16.msra.mxu0 %v4049
  %4066 = vmatprep.subr.bf16.mxu0 0
  %4067 = vmatpush1.bf16.msra.mxu0 %v4048
  %4068 = vmatprep.subr.bf16.mxu0 0
  %4069 = vmatpush1.bf16.msra.mxu0 %v4047
  %4070 = vmatprep.subr.bf16.mxu0 0
  %4071 = vmatpush1.bf16.msra.mxu0 %v4046
  %4072 = vmatprep.subr.bf16.mxu0 0
  %4073 = vmatpush1.bf16.msra.mxu0 %v4045
  %4074 = vmatprep.subr.bf16.mxu0 0
  %4075 = vmatpush1.bf16.msra.mxu0 %v4044
  %4076 = vmatprep.subr.bf16.mxu0 0
  %4077 = vmatpush2.bf16.msra.mxu0 0
  %4078 = vmatprep.subr.bf16.mxu0 0
  %4079 = vmatpush2.bf16.msra.mxu0 0
  %4080 = vmatprep.subr.bf16.mxu0 0
  %4081 = vmatpush2.bf16.msra.mxu0 0
  %4082 = vmatprep.subr.bf16.mxu0 0
  %4083 = vmatpush2.bf16.msra.mxu0 0
  %4084 = vmatprep.subr.bf16.mxu0 0
  %4085 = vmatpush2.bf16.msra.mxu0 0
  %4086 = vmatprep.subr.bf16.mxu0 0
  %4087 = vmatpush2.bf16.msra.mxu0 0
  %4088 = vmatprep.subr.bf16.mxu0 0
  %4089 = vmatpush2.bf16.msra.mxu0 0
  %4090 = vmatprep.subr.bf16.mxu0 0
  %4091 = vmatpush2.bf16.msra.mxu0 0
  %4092 = vmatprep.mubr.bf16.mxu0 0
  %4093 = vmatmul.mubr.bf16.gmra.mxu0 %v3976
  %v4094 = vpop.f32.mrf.mxu0
  %v4095 = vadd.f32 %v4010, %v4094
  %v4096 = vpop.f32.mrf.mxu0
  %v4097 = vpop.f32.mrf.mxu0
  %v4098 = vadd.f32 %v4010, %v4097
  %v4099 = vpop.f32.mrf.mxu0
  %4100 = vmatprep.mubr.bf16.mxu0 0
  %4101 = vmatmul.mubr.bf16.gmra.mxu0 %v3980
  %v4102 = vpop.f32.mrf.mxu0
  %v4103 = vadd.f32 %v4010, %v4102
  %v4104 = vpop.f32.mrf.mxu0
  %v4105 = vpop.f32.mrf.mxu0
  %v4106 = vadd.f32 %v4010, %v4105
  %v4107 = vpop.f32.mrf.mxu0
  %4108 = vmatprep.mubr.bf16.mxu0 0
  %4109 = vmatmul.mubr.bf16.gmra.mxu0 %v3984
  %v4110 = vpop.f32.mrf.mxu0
  %v4111 = vadd.f32 %v4010, %v4110
  %v4112 = vpop.f32.mrf.mxu0
  %v4113 = vpop.f32.mrf.mxu0
  %v4114 = vadd.f32 %v4010, %v4113
  %v4115 = vpop.f32.mrf.mxu0
  %4116 = vmatprep.mubr.bf16.mxu0 0
  %4117 = vmatmul.mubr.bf16.gmra.mxu0 %v3988
  %v4118 = vpop.f32.mrf.mxu0
  %v4119 = vadd.f32 %v4010, %v4118
  %v4120 = vpop.f32.mrf.mxu0
  %v4121 = vpop.f32.mrf.mxu0
  %v4122 = vadd.f32 %v4010, %v4121
  %v4123 = vpop.f32.mrf.mxu0
  %4124 = vmatprep.mubr.bf16.mxu0 0
  %4125 = vmatmul.mubr.bf16.gmra.mxu0 %v3992
  %v4126 = vpop.f32.mrf.mxu0
  %v4127 = vadd.f32 %v4010, %v4126
  %v4128 = vpop.f32.mrf.mxu0
  %v4129 = vpop.f32.mrf.mxu0
  %v4130 = vadd.f32 %v4010, %v4129
  %v4131 = vpop.f32.mrf.mxu0
  %4132 = vmatprep.mubr.bf16.mxu0 0
  %4133 = vmatmul.mubr.bf16.gmra.mxu0 %v3996
  %v4134 = vpop.f32.mrf.mxu0
  %v4135 = vadd.f32 %v4010, %v4134
  %v4136 = vpop.f32.mrf.mxu0
  %v4137 = vpop.f32.mrf.mxu0
  %v4138 = vadd.f32 %v4010, %v4137
  %v4139 = vpop.f32.mrf.mxu0
  %4140 = vmatprep.mubr.bf16.mxu0 0
  %4141 = vmatmul.mubr.bf16.gmra.mxu0 %v4000
  %v4142 = vpop.f32.mrf.mxu0
  %v4143 = vadd.f32 %v4010, %v4142
  %v4144 = vpop.f32.mrf.mxu0
  %v4145 = vpop.f32.mrf.mxu0
  %v4146 = vadd.f32 %v4010, %v4145
  %v4147 = vpop.f32.mrf.mxu0
  %4148 = vmatprep.mubr.bf16.mxu0 0
  %4149 = vmatmul.mubr.bf16.gmra.mxu0 %v4004
  %v4150 = vpop.f32.mrf.mxu0
  %v4151 = vadd.f32 %v4010, %v4150
  %v4152 = vpop.f32.mrf.mxu0
  %v4153 = vpop.f32.mrf.mxu0
  %v4154 = vadd.f32 %v4010, %v4153
  %v4155 = vpop.f32.mrf.mxu0
  %4156 = vdwg.mxu0
  %v4157 = vmax.f32 %v4095, 0.0
  %v4158 = vmax.f32 %v4098, 0.0
  %v4159 = vmax.f32 %v4103, 0.0
  %v4160 = vmax.f32 %v4106, 0.0
  %v4161 = vmax.f32 %v4111, 0.0
  %v4162 = vmax.f32 %v4114, 0.0
  %v4163 = vmax.f32 %v4119, 0.0
  %v4164 = vmax.f32 %v4122, 0.0
  %v4165 = vmax.f32 %v4127, 0.0
  %v4166 = vmax.f32 %v4130, 0.0
  %v4167 = vmax.f32 %v4135, 0.0
  %v4168 = vmax.f32 %v4138, 0.0
  %v4169 = vmax.f32 %v4143, 0.0
  %v4170 = vmax.f32 %v4146, 0.0
  %v4171 = vmax.f32 %v4151, 0.0
  %v4172 = vmax.f32 %v4154, 0.0
  %v4173 = vpack.c.bf16 %v4158, %v4157
  %v4174 = vpack.c.bf16 %v4160, %v4159
  %v4175 = vpack.c.bf16 %v4162, %v4161
  %v4176 = vpack.c.bf16 %v4164, %v4163
  %v4177 = vpack.c.bf16 %v4166, %v4165
  %v4178 = vpack.c.bf16 %v4168, %v4167
  %v4179 = vpack.c.bf16 %v4170, %v4169
  %v4180 = vpack.c.bf16 %v4172, %v4171
  %v4182 = vlaneseq
  %v4183 = vshrl.u32 %v4182, 7
  %v4184 = vsub.s32 0, %v4183
  %v4185 = vrot.slane %v366, %v4184
  %v4195 = vunpack.c.l.b16 %v358
  %v4196 = vunpack.c.l.b16 %v359
  %v4197 = vunpack.c.l.b16 %v360
  %v4198 = vunpack.c.l.b16 %v361
  %v4199 = vunpack.c.l.b16 %v362
  %v4200 = vunpack.c.l.b16 %v363
  %v4201 = vunpack.c.l.b16 %v364
  %v4202 = vunpack.c.l.b16 %v365
  %v4203 = vpack.c.b16 %v4196, %v4195
  %v4204 = vpack.c.b16 %v4198, %v4197
  %v4205 = vpack.c.b16 %v4200, %v4199
  %v4206 = vpack.c.b16 %v4202, %v4201
  %v4212 = vsel %vm827, %v4173, 0
  %v4215 = vsel %vm827, %v4174, 0
  %v4218 = vsel %vm827, %v4175, 0
  %v4221 = vsel %vm827, %v4176, 0
  %v4224 = vsel %vm827, %v4177, 0
  %v4227 = vsel %vm827, %v4178, 0
  %v4230 = vsel %vm827, %v4179, 0
  %v4233 = vsel %vm827, %v4180, 0
  %4235 = vmatprep.subr.bf16.mxu0 0
  %4236 = vmatpush1.bf16.msra.mxu0 0
  %4237 = vmatprep.subr.bf16.mxu0 0
  %4238 = vmatpush1.bf16.msra.mxu0 0
  %4239 = vmatprep.subr.bf16.mxu0 0
  %4240 = vmatpush1.bf16.msra.mxu0 0
  %4241 = vmatprep.subr.bf16.mxu0 0
  %4242 = vmatpush1.bf16.msra.mxu0 0
  %4243 = vmatprep.subr.bf16.mxu0 0
  %4244 = vmatpush1.bf16.msra.mxu0 %v4206
  %4245 = vmatprep.subr.bf16.mxu0 0
  %4246 = vmatpush1.bf16.msra.mxu0 %v4205
  %4247 = vmatprep.subr.bf16.mxu0 0
  %4248 = vmatpush1.bf16.msra.mxu0 %v4204
  %4249 = vmatprep.subr.bf16.mxu0 0
  %4250 = vmatpush1.bf16.msra.mxu0 %v4203
  %4251 = vmatprep.subr.bf16.mxu0 0
  %4252 = vmatpush2.bf16.msra.mxu0 0
  %4253 = vmatprep.subr.bf16.mxu0 0
  %4254 = vmatpush2.bf16.msra.mxu0 0
  %4255 = vmatprep.subr.bf16.mxu0 0
  %4256 = vmatpush2.bf16.msra.mxu0 0
  %4257 = vmatprep.subr.bf16.mxu0 0
  %4258 = vmatpush2.bf16.msra.mxu0 0
  %4259 = vmatprep.subr.bf16.mxu0 0
  %4260 = vmatpush2.bf16.msra.mxu0 0
  %4261 = vmatprep.subr.bf16.mxu0 0
  %4262 = vmatpush2.bf16.msra.mxu0 0
  %4263 = vmatprep.subr.bf16.mxu0 0
  %4264 = vmatpush2.bf16.msra.mxu0 0
  %4265 = vmatprep.subr.bf16.mxu0 0
  %4266 = vmatpush2.bf16.msra.mxu0 0
  %4267 = vmatprep.mubr.bf16.mxu0 0
  %4268 = vmatmul.mubr.bf16.gmra.mxu0 %v4212
  %v4269 = vpop.f32.mrf.mxu0
  %v4270 = vadd.f32 %v4185, %v4269
  %v4271 = vpop.f32.mrf.mxu0
  %v4272 = vpop.f32.mrf.mxu0
  %v4273 = vadd.f32 %v4185, %v4272
  %v4274 = vpop.f32.mrf.mxu0
  %4275 = vmatprep.mubr.bf16.mxu0 0
  %4276 = vmatmul.mubr.bf16.gmra.mxu0 %v4215
  %v4277 = vpop.f32.mrf.mxu0
  %v4278 = vadd.f32 %v4185, %v4277
  %v4279 = vpop.f32.mrf.mxu0
  %v4280 = vpop.f32.mrf.mxu0
  %v4281 = vadd.f32 %v4185, %v4280
  %v4282 = vpop.f32.mrf.mxu0
  %4283 = vmatprep.mubr.bf16.mxu0 0
  %4284 = vmatmul.mubr.bf16.gmra.mxu0 %v4218
  %v4285 = vpop.f32.mrf.mxu0
  %v4286 = vadd.f32 %v4185, %v4285
  %v4287 = vpop.f32.mrf.mxu0
  %v4288 = vpop.f32.mrf.mxu0
  %v4289 = vadd.f32 %v4185, %v4288
  %v4290 = vpop.f32.mrf.mxu0
  %4291 = vmatprep.mubr.bf16.mxu0 0
  %4292 = vmatmul.mubr.bf16.gmra.mxu0 %v4221
  %v4293 = vpop.f32.mrf.mxu0
  %v4294 = vadd.f32 %v4185, %v4293
  %v4295 = vpop.f32.mrf.mxu0
  %v4296 = vpop.f32.mrf.mxu0
  %v4297 = vadd.f32 %v4185, %v4296
  %v4298 = vpop.f32.mrf.mxu0
  %4299 = vmatprep.mubr.bf16.mxu0 0
  %4300 = vmatmul.mubr.bf16.gmra.mxu0 %v4224
  %v4301 = vpop.f32.mrf.mxu0
  %v4302 = vadd.f32 %v4185, %v4301
  %v4303 = vpop.f32.mrf.mxu0
  %v4304 = vpop.f32.mrf.mxu0
  %v4305 = vadd.f32 %v4185, %v4304
  %v4306 = vpop.f32.mrf.mxu0
  %4307 = vmatprep.mubr.bf16.mxu0 0
  %4308 = vmatmul.mubr.bf16.gmra.mxu0 %v4227
  %v4309 = vpop.f32.mrf.mxu0
  %v4310 = vadd.f32 %v4185, %v4309
  %v4311 = vpop.f32.mrf.mxu0
  %v4312 = vpop.f32.mrf.mxu0
  %v4313 = vadd.f32 %v4185, %v4312
  %v4314 = vpop.f32.mrf.mxu0
  %4315 = vmatprep.mubr.bf16.mxu0 0
  %4316 = vmatmul.mubr.bf16.gmra.mxu0 %v4230
  %v4317 = vpop.f32.mrf.mxu0
  %v4318 = vadd.f32 %v4185, %v4317
  %v4319 = vpop.f32.mrf.mxu0
  %v4320 = vpop.f32.mrf.mxu0
  %v4321 = vadd.f32 %v4185, %v4320
  %v4322 = vpop.f32.mrf.mxu0
  %4323 = vmatprep.mubr.bf16.mxu0 0
  %4324 = vmatmul.mubr.bf16.gmra.mxu0 %v4233
  %v4325 = vpop.f32.mrf.mxu0
  %v4326 = vadd.f32 %v4185, %v4325
  %v4327 = vpop.f32.mrf.mxu0
  %v4328 = vpop.f32.mrf.mxu0
  %v4329 = vadd.f32 %v4185, %v4328
  %v4330 = vpop.f32.mrf.mxu0
  %4331 = vdwg.mxu0
  %v4332 = vpack.c.bf16 %v4273, %v4270
  %v4333 = vpack.c.bf16 %v4281, %v4278
  %v4334 = vpack.c.bf16 %v4289, %v4286
  %v4335 = vpack.c.bf16 %v4297, %v4294
  %v4336 = vpack.c.bf16 %v4305, %v4302
  %v4337 = vpack.c.bf16 %v4313, %v4310
  %v4338 = vpack.c.bf16 %v4321, %v4318
  %v4339 = vpack.c.bf16 %v4329, %v4326
  %v4341 = vlaneseq
  %v4342 = vshrl.u32 %v4341, 7
  %v4343 = vsub.s32 0, %v4342
  %v4344 = vrot.slane %v375, %v4343
  %v4354 = vunpack.c.l.b16 %v367
  %v4355 = vunpack.c.l.b16 %v368
  %v4356 = vunpack.c.l.b16 %v369
  %v4357 = vunpack.c.l.b16 %v370
  %v4358 = vunpack.c.l.b16 %v371
  %v4359 = vunpack.c.l.b16 %v372
  %v4360 = vunpack.c.l.b16 %v373
  %v4361 = vunpack.c.l.b16 %v374
  %v4362 = vpack.c.b16 %v4355, %v4354
  %v4363 = vpack.c.b16 %v4357, %v4356
  %v4364 = vpack.c.b16 %v4359, %v4358
  %v4365 = vpack.c.b16 %v4361, %v4360
  %v4371 = vsel %vm827, %v4332, 0
  %v4374 = vsel %vm827, %v4333, 0
  %v4377 = vsel %vm827, %v4334, 0
  %v4380 = vsel %vm827, %v4335, 0
  %v4383 = vsel %vm827, %v4336, 0
  %v4386 = vsel %vm827, %v4337, 0
  %v4389 = vsel %vm827, %v4338, 0
  %v4392 = vsel %vm827, %v4339, 0
  %4394 = vmatprep.subr.bf16.mxu0 0
  %4395 = vmatpush1.bf16.msra.mxu0 0
  %4396 = vmatprep.subr.bf16.mxu0 0
  %4397 = vmatpush1.bf16.msra.mxu0 0
  %4398 = vmatprep.subr.bf16.mxu0 0
  %4399 = vmatpush1.bf16.msra.mxu0 0
  %4400 = vmatprep.subr.bf16.mxu0 0
  %4401 = vmatpush1.bf16.msra.mxu0 0
  %4402 = vmatprep.subr.bf16.mxu0 0
  %4403 = vmatpush1.bf16.msra.mxu0 %v4365
  %4404 = vmatprep.subr.bf16.mxu0 0
  %4405 = vmatpush1.bf16.msra.mxu0 %v4364
  %4406 = vmatprep.subr.bf16.mxu0 0
  %4407 = vmatpush1.bf16.msra.mxu0 %v4363
  %4408 = vmatprep.subr.bf16.mxu0 0
  %4409 = vmatpush1.bf16.msra.mxu0 %v4362
  %4410 = vmatprep.subr.bf16.mxu0 0
  %4411 = vmatpush2.bf16.msra.mxu0 0
  %4412 = vmatprep.subr.bf16.mxu0 0
  %4413 = vmatpush2.bf16.msra.mxu0 0
  %4414 = vmatprep.subr.bf16.mxu0 0
  %4415 = vmatpush2.bf16.msra.mxu0 0
  %4416 = vmatprep.subr.bf16.mxu0 0
  %4417 = vmatpush2.bf16.msra.mxu0 0
  %4418 = vmatprep.subr.bf16.mxu0 0
  %4419 = vmatpush2.bf16.msra.mxu0 0
  %4420 = vmatprep.subr.bf16.mxu0 0
  %4421 = vmatpush2.bf16.msra.mxu0 0
  %4422 = vmatprep.subr.bf16.mxu0 0
  %4423 = vmatpush2.bf16.msra.mxu0 0
  %4424 = vmatprep.subr.bf16.mxu0 0
  %4425 = vmatpush2.bf16.msra.mxu0 0
  %4426 = vmatprep.mubr.bf16.mxu0 0
  %4427 = vmatmul.mubr.bf16.gmra.mxu0 %v4371
  %v4428 = vpop.f32.mrf.mxu0
  %v4429 = vadd.f32 %v4344, %v4428
  %v4430 = vpop.f32.mrf.mxu0
  %v4431 = vpop.f32.mrf.mxu0
  %v4432 = vadd.f32 %v4344, %v4431
  %v4433 = vpop.f32.mrf.mxu0
  %4434 = vmatprep.mubr.bf16.mxu0 0
  %4435 = vmatmul.mubr.bf16.gmra.mxu0 %v4374
  %v4436 = vpop.f32.mrf.mxu0
  %v4437 = vadd.f32 %v4344, %v4436
  %v4438 = vpop.f32.mrf.mxu0
  %v4439 = vpop.f32.mrf.mxu0
  %v4440 = vadd.f32 %v4344, %v4439
  %v4441 = vpop.f32.mrf.mxu0
  %4442 = vmatprep.mubr.bf16.mxu0 0
  %4443 = vmatmul.mubr.bf16.gmra.mxu0 %v4377
  %v4444 = vpop.f32.mrf.mxu0
  %v4445 = vadd.f32 %v4344, %v4444
  %v4446 = vpop.f32.mrf.mxu0
  %v4447 = vpop.f32.mrf.mxu0
  %v4448 = vadd.f32 %v4344, %v4447
  %v4449 = vpop.f32.mrf.mxu0
  %4450 = vmatprep.mubr.bf16.mxu0 0
  %4451 = vmatmul.mubr.bf16.gmra.mxu0 %v4380
  %v4452 = vpop.f32.mrf.mxu0
  %v4453 = vadd.f32 %v4344, %v4452
  %v4454 = vpop.f32.mrf.mxu0
  %v4455 = vpop.f32.mrf.mxu0
  %v4456 = vadd.f32 %v4344, %v4455
  %v4457 = vpop.f32.mrf.mxu0
  %4458 = vmatprep.mubr.bf16.mxu0 0
  %4459 = vmatmul.mubr.bf16.gmra.mxu0 %v4383
  %v4460 = vpop.f32.mrf.mxu0
  %v4461 = vadd.f32 %v4344, %v4460
  %v4462 = vpop.f32.mrf.mxu0
  %v4463 = vpop.f32.mrf.mxu0
  %v4464 = vadd.f32 %v4344, %v4463
  %v4465 = vpop.f32.mrf.mxu0
  %4466 = vmatprep.mubr.bf16.mxu0 0
  %4467 = vmatmul.mubr.bf16.gmra.mxu0 %v4386
  %v4468 = vpop.f32.mrf.mxu0
  %v4469 = vadd.f32 %v4344, %v4468
  %v4470 = vpop.f32.mrf.mxu0
  %v4471 = vpop.f32.mrf.mxu0
  %v4472 = vadd.f32 %v4344, %v4471
  %v4473 = vpop.f32.mrf.mxu0
  %4474 = vmatprep.mubr.bf16.mxu0 0
  %4475 = vmatmul.mubr.bf16.gmra.mxu0 %v4389
  %v4476 = vpop.f32.mrf.mxu0
  %v4477 = vadd.f32 %v4344, %v4476
  %v4478 = vpop.f32.mrf.mxu0
  %v4479 = vpop.f32.mrf.mxu0
  %v4480 = vadd.f32 %v4344, %v4479
  %v4481 = vpop.f32.mrf.mxu0
  %4482 = vmatprep.mubr.bf16.mxu0 0
  %4483 = vmatmul.mubr.bf16.gmra.mxu0 %v4392
  %v4484 = vpop.f32.mrf.mxu0
  %v4485 = vadd.f32 %v4344, %v4484
  %v4486 = vpop.f32.mrf.mxu0
  %v4487 = vpop.f32.mrf.mxu0
  %v4488 = vadd.f32 %v4344, %v4487
  %v4489 = vpop.f32.mrf.mxu0
  %4490 = vdwg.mxu0
  %v4491 = vmax.f32 %v4429, 0.0
  %v4492 = vmax.f32 %v4432, 0.0
  %v4493 = vmax.f32 %v4437, 0.0
  %v4494 = vmax.f32 %v4440, 0.0
  %v4495 = vmax.f32 %v4445, 0.0
  %v4496 = vmax.f32 %v4448, 0.0
  %v4497 = vmax.f32 %v4453, 0.0
  %v4498 = vmax.f32 %v4456, 0.0
  %v4499 = vmax.f32 %v4461, 0.0
  %v4500 = vmax.f32 %v4464, 0.0
  %v4501 = vmax.f32 %v4469, 0.0
  %v4502 = vmax.f32 %v4472, 0.0
  %v4503 = vmax.f32 %v4477, 0.0
  %v4504 = vmax.f32 %v4480, 0.0
  %v4505 = vmax.f32 %v4485, 0.0
  %v4506 = vmax.f32 %v4488, 0.0
  %v4507 = vpack.c.bf16 %v4492, %v4491
  %v4508 = vpack.c.bf16 %v4494, %v4493
  %v4509 = vpack.c.bf16 %v4496, %v4495
  %v4510 = vpack.c.bf16 %v4498, %v4497
  %v4511 = vpack.c.bf16 %v4500, %v4499
  %v4512 = vpack.c.bf16 %v4502, %v4501
  %v4513 = vpack.c.bf16 %v4504, %v4503
  %v4514 = vpack.c.bf16 %v4506, %v4505
  %v4516 = vsel %vm827, %v376, 0
  %v4519 = vsel %vm827, %v4507, 0
  %v4522 = vsel %vm827, %v4508, 0
  %v4525 = vsel %vm827, %v4509, 0
  %v4528 = vsel %vm827, %v4510, 0
  %v4531 = vsel %vm827, %v4511, 0
  %v4534 = vsel %vm827, %v4512, 0
  %v4537 = vsel %vm827, %v4513, 0
  %v4540 = vsel %vm827, %v4514, 0
  %4542 = vmatprep.subr.bf16.mxu0 0
  %4543 = vmatpush1.bf16.xpose.msra.mxu0 %v4540
  %4544 = vmatprep.subr.bf16.mxu0 0
  %4545 = vmatpush1.bf16.xpose.msra.mxu0 %v4537
  %4546 = vmatprep.subr.bf16.mxu0 0
  %4547 = vmatpush1.bf16.xpose.msra.mxu0 %v4534
  %4548 = vmatprep.subr.bf16.mxu0 0
  %4549 = vmatpush1.bf16.xpose.msra.mxu0 %v4531
  %4550 = vmatprep.subr.bf16.mxu0 0
  %4551 = vmatpush1.bf16.xpose.msra.mxu0 %v4528
  %4552 = vmatprep.subr.bf16.mxu0 0
  %4553 = vmatpush1.bf16.xpose.msra.mxu0 %v4525
  %4554 = vmatprep.subr.bf16.mxu0 0
  %4555 = vmatpush1.bf16.xpose.msra.mxu0 %v4522
  %4556 = vmatprep.subr.bf16.mxu0 0
  %4557 = vmatpush1.bf16.xpose.msra.mxu0 %v4519
  %4558 = vmatprep.subr.bf16.mxu0 0
  %4559 = vmatpush2.bf16.xpose.msra.mxu0 0
  %4560 = vmatprep.subr.bf16.mxu0 0
  %4561 = vmatpush2.bf16.xpose.msra.mxu0 0
  %4562 = vmatprep.subr.bf16.mxu0 0
  %4563 = vmatpush2.bf16.xpose.msra.mxu0 0
  %4564 = vmatprep.subr.bf16.mxu0 0
  %4565 = vmatpush2.bf16.xpose.msra.mxu0 0
  %4566 = vmatprep.subr.bf16.mxu0 0
  %4567 = vmatpush2.bf16.xpose.msra.mxu0 0
  %4568 = vmatprep.subr.bf16.mxu0 0
  %4569 = vmatpush2.bf16.xpose.msra.mxu0 0
  %4570 = vmatprep.subr.bf16.mxu0 0
  %4571 = vmatpush2.bf16.xpose.msra.mxu0 0
  %4572 = vmatprep.subr.bf16.mxu0 0
  %4573 = vmatpush2.bf16.xpose.msra.mxu0 0
  %4574 = vmatprep.mubr.bf16.mxu0 0
  %4575 = vmatmul.mubr.bf16.gmra.mxu0 %v4516
  %v4576 = vpop.f32.mrf.mxu0
  %v4577 = vadd.f32 0.0, %v4576
  %v4578 = vpop.f32.mrf.mxu0
  %v4579 = vpop.f32.mrf.mxu0
  %v4580 = vpop.f32.mrf.mxu0
  %4581 = vdwg.mxu0
  %4582 = vst [vmem:[%s91] sm:$0x1] %v4577
  // Predicated region
  $region182: #{gnn_policy_forward.1} parent=0 // pred_check
    _
  $region183: #{gnn_policy_forward.1} parent=0 // pred_check_branch
    %4584 = sbr.rel (0) target = $region185
  $region184: #{gnn_policy_forward.1} parent=0 // pred_region
    _
  $region185: #{gnn_policy_forward.1} parent=0 // pred_fallthru
    _
  // Predicated region
  $region186: #{gnn_policy_forward.1} parent=0 // pred_check
    _
  $region187: #{gnn_policy_forward.1} parent=0 // pred_check_branch
    %4586 = sbr.rel (0) target = $region189
  $region188: #{gnn_policy_forward.1} parent=0 // pred_region
    _
  $region189: #{gnn_policy_forward.1} parent=0 // pred_fallthru
    _

</llo_original>
